<compile_context>
chip_gen: v7x
topology: tpu7x:2x2x1
jax: 0.10.0
libtpu: 0.0.40
codegen_flags: <defaults>
</compile_context>

<pallas_src>
import math

import jax
import jax.numpy as jnp
from jax.experimental import pallas as pl
from jax.experimental.pallas import tpu as pltpu

# ---- scaled-down ViT-B/16 config (same structure, small dims) ----
IMG = 32          # image side (ViT-B/16 uses 224)
PATCH = 16        # patch size (kept at 16, like vit_b_16)
CH = 3
HIDDEN = 32       # embed dim (768 in ViT-B)
HEADS = 4         # (12 in ViT-B)
MLP = 64          # (3072 in ViT-B)
LAYERS = 2        # (12 in ViT-B)
LN_EPS = 1e-6     # torchvision ViT uses LayerNorm(eps=1e-6)
GRID = IMG // PATCH
NUM_PATCHES = GRID * GRID
SEQ = NUM_PATCHES + 1
CPP = CH * PATCH * PATCH


# ----------------------------- in-kernel helpers -----------------------------
def _erf(x):
    # Abramowitz & Stegun 7.1.26 polynomial erf, |err| < 1.5e-7 (~ f32 eps).
    # TODO(synk): torch nn.GELU() uses exact erf; Mosaic has no guaranteed
    # lax.erf lowering, so we evaluate this f32-accurate polynomial in-kernel.
    p = 0.3275911
    a1, a2, a3, a4, a5 = (0.254829592, -0.284496736, 1.421413741,
                          -1.453152027, 1.061405429)
    sgn = jnp.where(x < 0.0, -1.0, 1.0)
    ax = jnp.abs(x)
    t = 1.0 / (1.0 + p * ax)
    poly = ((((a5 * t + a4) * t + a3) * t + a2) * t + a1) * t
    return sgn * (1.0 - poly * jnp.exp(-ax * ax))


def _gelu(x):
    return 0.5 * x * (1.0 + _erf(x * 0.7071067811865476))


def _ln(x, g, b):
    # biased variance, matching torch.nn.LayerNorm
    mu = jnp.mean(x, axis=-1, keepdims=True)
    xc = x - mu
    var = jnp.mean(xc * xc, axis=-1, keepdims=True)
    return xc * jax.lax.rsqrt(var + LN_EPS) * g + b


# ------------------------------ fused ViT kernel ------------------------------
def _vit_fused_kernel(patches_ref, wp_ref, bp_ref, clspos_ref, postok_ref,
                      ln1_g_ref, ln1_b_ref, qkv_w_ref, qkv_b_ref,
                      out_w_ref, out_b_ref, ln2_g_ref, ln2_b_ref,
                      mlp_w1_ref, mlp_b1_ref, mlp_w2_ref, mlp_b2_ref,
                      lnf_g_ref, lnf_b_ref, o_ref, h_scr):
    f32 = jnp.float32
    dh = HIDDEN // HEADS
    scale = 1.0 / math.sqrt(dh)

    # --- patch projection + [cls] token + positional embedding (one image) ---
    tok = jnp.dot(patches_ref[0], wp_ref[...],
                  preferred_element_type=f32) + bp_ref[...]          # (NP, H)
    h_scr[0:1, :] = clspos_ref[...]                                  # cls + pos[0]
    h_scr[1:SEQ, :] = tok + postok_ref[...]                          # patches + pos[1:]
    h = h_scr[...]                                                   # (S, H)

    # --- transformer encoder layers (statically unrolled, weights in VMEM) ---
    for l in range(LAYERS):
        # self-attention block: h = h + out_proj(MHA(LN1(h)))
        h2 = _ln(h, ln1_g_ref[l], ln1_b_ref[l])
        qkv = jnp.dot(h2, qkv_w_ref[l],
                      preferred_element_type=f32) + qkv_b_ref[l]     # (S, 3H)
        q = qkv[:, 0:HIDDEN] * scale                                 # fold 1/sqrt(dh)
        k = qkv[:, HIDDEN:2 * HIDDEN]
        v = qkv[:, 2 * HIDDEN:3 * HIDDEN]
        out_w = out_w_ref[l]                                         # (H, H)

        proj = None
        for hd in range(HEADS):
            lo, hi = hd * dh, (hd + 1) * dh
            # scores = q_h @ k_h^T  (contract last dims; no materialized transpose)
            s = jax.lax.dot_general(q[:, lo:hi], k[:, lo:hi],
                                    (((1,), (1,)), ((), ())),
                                    preferred_element_type=f32)      # (S, S)
            p = jnp.exp(s - jnp.max(s, axis=-1, keepdims=True))
            p = p * pl.reciprocal(jnp.sum(p, axis=-1, keepdims=True), approx=True)
            oh = jnp.dot(p, v[:, lo:hi], preferred_element_type=f32)  # (S, dh)
            # accumulate this head straight through its out_proj row block,
            # i.e. concat(heads) @ out_w  ==  sum_h head_h @ out_w[h*dh:(h+1)*dh]
            c = jnp.dot(oh, out_w[lo:hi, :], preferred_element_type=f32)
            proj = c if proj is None else proj + c
        h = h + proj + out_b_ref[l]

        # MLP block: h = h + W2(GELU(W1(LN2(h))))
        h2 = _ln(h, ln2_g_ref[l], ln2_b_ref[l])
        m1 = _gelu(jnp.dot(h2, mlp_w1_ref[l],
                           preferred_element_type=f32) + mlp_b1_ref[l])
        h = h + jnp.dot(m1, mlp_w2_ref[l],
                        preferred_element_type=f32) + mlp_b2_ref[l]

    # --- final LayerNorm applied to the class-token row only (== LN(x)[:, 0]) ---
    o_ref[0] = _ln(h[0:1, :], lnf_g_ref[...], lnf_b_ref[...])


# --------------------------------- parameters ---------------------------------
def init_params(key):
    keys = iter(jax.random.split(key, 3 + 4 * LAYERS))

    def nrm(shape, std=0.02):
        return std * jax.random.normal(next(keys), shape, jnp.float32)

    conv_w = nrm((HIDDEN, CH, PATCH, PATCH))   # Conv2d(3, H, 16, stride=16)
    cls = nrm((1, 1, HIDDEN))
    pos = nrm((1, SEQ, HIDDEN))

    params = {
        # all matmul weights stored pre-transposed as (K, N); computed once here
        "wp": conv_w.reshape(HIDDEN, CPP).T,            # (CPP, H)
        "bp": jnp.zeros((1, HIDDEN), jnp.float32),
        "cls_pos0": cls[0] + pos[0, 0:1],               # (1, H)  cls token + pos[0]
        "pos_tok": pos[0, 1:],                          # (NP, H) pos[1:]
        "lnf_g": jnp.ones((1, HIDDEN), jnp.float32),
        "lnf_b": jnp.zeros((1, HIDDEN), jnp.float32),
    }

    ln1_g, ln1_b, qkv_w, qkv_b = [], [], [], []
    out_w, out_b, ln2_g, ln2_b = [], [], [], []
    mlp_w1, mlp_b1, mlp_w2, mlp_b2 = [], [], [], []
    for _ in range(LAYERS):
        ln1_g.append(jnp.ones((1, HIDDEN), jnp.float32))
        ln1_b.append(jnp.zeros((1, HIDDEN), jnp.float32))
        qkv_w.append(nrm((3 * HIDDEN, HIDDEN)).T)       # in_proj_weight^T -> (H, 3H)
        qkv_b.append(jnp.zeros((1, 3 * HIDDEN), jnp.float32))
        out_w.append(nrm((HIDDEN, HIDDEN)).T)           # out_proj.weight^T -> (H, H)
        out_b.append(jnp.zeros((1, HIDDEN), jnp.float32))
        ln2_g.append(jnp.ones((1, HIDDEN), jnp.float32))
        ln2_b.append(jnp.zeros((1, HIDDEN), jnp.float32))
        mlp_w1.append(nrm((MLP, HIDDEN)).T)             # (H, MLP)
        mlp_b1.append(jnp.zeros((1, MLP), jnp.float32))
        mlp_w2.append(nrm((HIDDEN, MLP)).T)             # (MLP, H)
        mlp_b2.append(jnp.zeros((1, HIDDEN), jnp.float32))

    params.update({
        "ln1_g": jnp.stack(ln1_g), "ln1_b": jnp.stack(ln1_b),
        "qkv_w": jnp.stack(qkv_w), "qkv_b": jnp.stack(qkv_b),
        "out_w": jnp.stack(out_w), "out_b": jnp.stack(out_b),
        "ln2_g": jnp.stack(ln2_g), "ln2_b": jnp.stack(ln2_b),
        "mlp_w1": jnp.stack(mlp_w1), "mlp_b1": jnp.stack(mlp_b1),
        "mlp_w2": jnp.stack(mlp_w2), "mlp_b2": jnp.stack(mlp_b2),
    })
    return params


# ---------------------------------- forward -----------------------------------
def dino_forward(params, x):
    """x: (B, 3, IMG, IMG) NCHW float32 -> (B, HIDDEN) class-token embedding."""
    B = x.shape[0]

    # patchify glue (single XLA transpose): NCHW -> (B, n_patches, C*P*P),
    # flattened in (c, kh, kw) order to match conv_w.reshape(HIDDEN, -1).
    patches = x.reshape(B, CH, GRID, PATCH, GRID, PATCH)
    patches = patches.transpose(0, 2, 4, 1, 3, 5).reshape(B, NUM_PATCHES, CPP)

    full = lambda shape: pl.BlockSpec(shape, lambda b: (0,) * len(shape))
    lyr3 = lambda d1, d2: full((LAYERS, d1, d2))

    out = pl.pallas_call(
        _vit_fused_kernel,
        grid=(B,),
        in_specs=[
            pl.BlockSpec((1, NUM_PATCHES, CPP), lambda b: (b, 0, 0)),  # patches
            full((CPP, HIDDEN)),                                       # wp
            full((1, HIDDEN)),                                         # bp
            full((1, HIDDEN)),                                         # cls_pos0
            full((NUM_PATCHES, HIDDEN)),                               # pos_tok
            lyr3(1, HIDDEN), lyr3(1, HIDDEN),                          # ln1 g/b
            lyr3(HIDDEN, 3 * HIDDEN), lyr3(1, 3 * HIDDEN),             # qkv w/b
            lyr3(HIDDEN, HIDDEN), lyr3(1, HIDDEN),                     # out w/b
            lyr3(1, HIDDEN), lyr3(1, HIDDEN),                          # ln2 g/b
            lyr3(HIDDEN, MLP), lyr3(1, MLP),                           # mlp1 w/b
            lyr3(MLP, HIDDEN), lyr3(1, HIDDEN),                        # mlp2 w/b
            full((1, HIDDEN)), full((1, HIDDEN)),                      # final LN g/b
        ],
        out_specs=pl.BlockSpec((1, 1, HIDDEN), lambda b: (b, 0, 0)),
        out_shape=jax.ShapeDtypeStruct((B, 1, HIDDEN), jnp.float32),
        scratch_shapes=[pltpu.VMEM((SEQ, HIDDEN), jnp.float32)],
        compiler_params=pltpu.CompilerParams(
            dimension_semantics=("parallel",)),  # v7x: 2 TCs split the batch
    )(patches, params["wp"], params["bp"], params["cls_pos0"], params["pos_tok"],
      params["ln1_g"], params["ln1_b"], params["qkv_w"], params["qkv_b"],
      params["out_w"], params["out_b"], params["ln2_g"], params["ln2_b"],
      params["mlp_w1"], params["mlp_b1"], params["mlp_w2"], params["mlp_b2"],
      params["lnf_g"], params["lnf_b"])

    return out[:, 0, :]                                 # heads = nn.Identity()


# ------------------------------------ main -------------------------------------
if __name__ == "__main__":
    key = jax.random.PRNGKey(0)
    kp, kx = jax.random.split(key)
    params = init_params(kp)
    x = jax.random.normal(kx, (2, CH, IMG, IMG), jnp.float32)

    out = jax.jit(dino_forward)(params, x)
    out = jax.block_until_ready(out)
    assert out.shape == (2, HIDDEN) and out.dtype == jnp.float32
    print("KERNEL_OK")
</pallas_src>

<mosaic_0001>
module attributes {stable_mosaic.version = 11 : i64} {
  func.func @_vit_fused_kernel(%arg0: i32, %arg1: memref<1x4x768xf32, #tpu.memory_space<vmem>>, %arg2: memref<768x32xf32, #tpu.memory_space<vmem>>, %arg3: memref<1x32xf32, #tpu.memory_space<vmem>>, %arg4: memref<1x32xf32, #tpu.memory_space<vmem>>, %arg5: memref<4x32xf32, #tpu.memory_space<vmem>>, %arg6: memref<2x1x32xf32, #tpu.memory_space<vmem>>, %arg7: memref<2x1x32xf32, #tpu.memory_space<vmem>>, %arg8: memref<2x32x96xf32, #tpu.memory_space<vmem>>, %arg9: memref<2x1x96xf32, #tpu.memory_space<vmem>>, %arg10: memref<2x32x32xf32, #tpu.memory_space<vmem>>, %arg11: memref<2x1x32xf32, #tpu.memory_space<vmem>>, %arg12: memref<2x1x32xf32, #tpu.memory_space<vmem>>, %arg13: memref<2x1x32xf32, #tpu.memory_space<vmem>>, %arg14: memref<2x32x64xf32, #tpu.memory_space<vmem>>, %arg15: memref<2x1x64xf32, #tpu.memory_space<vmem>>, %arg16: memref<2x64x32xf32, #tpu.memory_space<vmem>>, %arg17: memref<2x1x32xf32, #tpu.memory_space<vmem>>, %arg18: memref<1x32xf32, #tpu.memory_space<vmem>>, %arg19: memref<1x32xf32, #tpu.memory_space<vmem>>, %arg20: memref<1x1x32xf32, #tpu.memory_space<vmem>>, %arg21: memref<5x32xf32, #tpu.memory_space<vmem>>) attributes {dimension_semantics = [#tpu.dimension_semantics<parallel>], iteration_bounds = array<i64: 2>, scalar_prefetch = 0 : i64, scratch_operands = 1 : i64, tpu.core_type = #tpu.core_type<tc>, window_params = [{transform_indices = @transform_0, window_bounds = array<i64: 1, 4, 768>}, {pipeline_mode = #tpu.pipeline_mode<synchronous>, transform_indices = @transform_1, window_bounds = array<i64: 768, 32>}, {pipeline_mode = #tpu.pipeline_mode<synchronous>, transform_indices = @transform_2, window_bounds = array<i64: 1, 32>}, {pipeline_mode = #tpu.pipeline_mode<synchronous>, transform_indices = @transform_3, window_bounds = array<i64: 1, 32>}, {pipeline_mode = #tpu.pipeline_mode<synchronous>, transform_indices = @transform_4, window_bounds = array<i64: 4, 32>}, {pipeline_mode = #tpu.pipeline_mode<synchronous>, transform_indices = @transform_5, window_bounds = array<i64: 2, 1, 32>}, {pipeline_mode = #tpu.pipeline_mode<synchronous>, transform_indices = @transform_6, window_bounds = array<i64: 2, 1, 32>}, {pipeline_mode = #tpu.pipeline_mode<synchronous>, transform_indices = @transform_7, window_bounds = array<i64: 2, 32, 96>}, {pipeline_mode = #tpu.pipeline_mode<synchronous>, transform_indices = @transform_8, window_bounds = array<i64: 2, 1, 96>}, {pipeline_mode = #tpu.pipeline_mode<synchronous>, transform_indices = @transform_9, window_bounds = array<i64: 2, 32, 32>}, {pipeline_mode = #tpu.pipeline_mode<synchronous>, transform_indices = @transform_10, window_bounds = array<i64: 2, 1, 32>}, {pipeline_mode = #tpu.pipeline_mode<synchronous>, transform_indices = @transform_11, window_bounds = array<i64: 2, 1, 32>}, {pipeline_mode = #tpu.pipeline_mode<synchronous>, transform_indices = @transform_12, window_bounds = array<i64: 2, 1, 32>}, {pipeline_mode = #tpu.pipeline_mode<synchronous>, transform_indices = @transform_13, window_bounds = array<i64: 2, 32, 64>}, {pipeline_mode = #tpu.pipeline_mode<synchronous>, transform_indices = @transform_14, window_bounds = array<i64: 2, 1, 64>}, {pipeline_mode = #tpu.pipeline_mode<synchronous>, transform_indices = @transform_15, window_bounds = array<i64: 2, 64, 32>}, {pipeline_mode = #tpu.pipeline_mode<synchronous>, transform_indices = @transform_16, window_bounds = array<i64: 2, 1, 32>}, {pipeline_mode = #tpu.pipeline_mode<synchronous>, transform_indices = @transform_17, window_bounds = array<i64: 1, 32>}, {pipeline_mode = #tpu.pipeline_mode<synchronous>, transform_indices = @transform_18, window_bounds = array<i64: 1, 32>}, {transform_indices = @transform_19, window_bounds = array<i64: 1, 1, 32>}]} {
    %c0 = arith.constant 0 : index
    %c0_0 = arith.constant 0 : index
    %c0_1 = arith.constant 0 : index
    %0 = vector.load %arg1[%c0, %c0_0, %c0_1] : memref<1x4x768xf32, #tpu.memory_space<vmem>>, vector<1x4x768xf32>
    %1 = vector.shape_cast %0 : vector<1x4x768xf32> to vector<4x768xf32>
    %c0_2 = arith.constant 0 : index
    %c0_3 = arith.constant 0 : index
    %2 = vector.load %arg2[%c0_2, %c0_3] : memref<768x32xf32, #tpu.memory_space<vmem>>, vector<768x32xf32>
    %cst = arith.constant dense<0.000000e+00> : vector<4x32xf32>
    %3 = tpu.matmul %1, %2, %cst {dimension_numbers = #tpu.dot_dimension_numbers<[1], [0], [0], [1], [0, 0, 1, 1], [], []>} : vector<4x768xf32>, vector<768x32xf32>, vector<4x32xf32> -> vector<4x32xf32>
    %c0_4 = arith.constant 0 : index
    %c0_5 = arith.constant 0 : index
    %4 = vector.load %arg3[%c0_4, %c0_5] : memref<1x32xf32, #tpu.memory_space<vmem>>, vector<1x32xf32>
    %5 = vector.broadcast %4 : vector<1x32xf32> to vector<4x32xf32>
    %6 = arith.addf %3, %5 : vector<4x32xf32>
    %c0_6 = arith.constant 0 : index
    %c0_7 = arith.constant 0 : index
    %7 = vector.load %arg4[%c0_6, %c0_7] : memref<1x32xf32, #tpu.memory_space<vmem>>, vector<1x32xf32>
    %c0_8 = arith.constant 0 : index
    %c0_9 = arith.constant 0 : index
    %8 = vector.load %arg21[%c0_8, %c0_9] : memref<5x32xf32, #tpu.memory_space<vmem>>, vector<1x32xf32>
    tpu.vector_store %arg21[%c0_8, %c0_9], %7 {strides = array<i32>} : memref<5x32xf32, #tpu.memory_space<vmem>>, vector<1x32xf32>,
    %c0_10 = arith.constant 0 : index
    %c0_11 = arith.constant 0 : index
    %9 = vector.load %arg5[%c0_10, %c0_11] : memref<4x32xf32, #tpu.memory_space<vmem>>, vector<4x32xf32>
    %10 = arith.addf %6, %9 : vector<4x32xf32>
    %c1 = arith.constant 1 : index
    %c0_12 = arith.constant 0 : index
    %11 = vector.load %arg21[%c1, %c0_12] : memref<5x32xf32, #tpu.memory_space<vmem>>, vector<4x32xf32>
    tpu.vector_store %arg21[%c1, %c0_12], %10 {strides = array<i32>} : memref<5x32xf32, #tpu.memory_space<vmem>>, vector<4x32xf32>,
    %c0_13 = arith.constant 0 : index
    %c0_14 = arith.constant 0 : index
    %12 = vector.load %arg21[%c0_13, %c0_14] : memref<5x32xf32, #tpu.memory_space<vmem>>, vector<5x32xf32>
    %c0_15 = arith.constant 0 : index
    %c0_16 = arith.constant 0 : index
    %c0_17 = arith.constant 0 : index
    %13 = vector.load %arg6[%c0_15, %c0_16, %c0_17] : memref<2x1x32xf32, #tpu.memory_space<vmem>>, vector<1x1x32xf32>
    %14 = vector.shape_cast %13 : vector<1x1x32xf32> to vector<1x32xf32>
    %c0_18 = arith.constant 0 : index
    %c0_19 = arith.constant 0 : index
    %c0_20 = arith.constant 0 : index
    %15 = vector.load %arg7[%c0_18, %c0_19, %c0_20] : memref<2x1x32xf32, #tpu.memory_space<vmem>>, vector<1x1x32xf32>
    %16 = vector.shape_cast %15 : vector<1x1x32xf32> to vector<1x32xf32>
    %cst_21 = arith.constant dense<0.000000e+00> : vector<5xf32>
    %17 = vector.multi_reduction <add>, %12, %cst_21 [1] : vector<5x32xf32> to vector<5xf32>
    %18 = vector.shape_cast %17 : vector<5xf32> to vector<5x1xf32>
    %cst_22 = arith.constant 3.200000e+01 : f32
    %19 = vector.broadcast %cst_22 : f32 to vector<5x1xf32>
    %20 = arith.divf %18, %19 : vector<5x1xf32>
    %21 = vector.broadcast %20 : vector<5x1xf32> to vector<5x32xf32>
    %22 = arith.subf %12, %21 : vector<5x32xf32>
    %23 = arith.mulf %22, %22 : vector<5x32xf32>
    %cst_23 = arith.constant dense<0.000000e+00> : vector<5xf32>
    %24 = vector.multi_reduction <add>, %23, %cst_23 [1] : vector<5x32xf32> to vector<5xf32>
    %25 = vector.shape_cast %24 : vector<5xf32> to vector<5x1xf32>
    %cst_24 = arith.constant 3.200000e+01 : f32
    %26 = vector.broadcast %cst_24 : f32 to vector<5x1xf32>
    %27 = arith.divf %25, %26 : vector<5x1xf32>
    %cst_25 = arith.constant 9.99999997E-7 : f32
    %28 = vector.broadcast %cst_25 : f32 to vector<5x1xf32>
    %29 = arith.addf %27, %28 : vector<5x1xf32>
    %30 = math.rsqrt %29 : vector<5x1xf32>
    %31 = vector.broadcast %30 : vector<5x1xf32> to vector<5x32xf32>
    %32 = arith.mulf %22, %31 : vector<5x32xf32>
    %33 = vector.broadcast %14 : vector<1x32xf32> to vector<5x32xf32>
    %34 = arith.mulf %32, %33 : vector<5x32xf32>
    %35 = vector.broadcast %16 : vector<1x32xf32> to vector<5x32xf32>
    %36 = arith.addf %34, %35 : vector<5x32xf32>
    %c0_26 = arith.constant 0 : index
    %c0_27 = arith.constant 0 : index
    %c0_28 = arith.constant 0 : index
    %37 = vector.load %arg8[%c0_26, %c0_27, %c0_28] : memref<2x32x96xf32, #tpu.memory_space<vmem>>, vector<1x32x96xf32>
    %38 = vector.shape_cast %37 : vector<1x32x96xf32> to vector<32x96xf32>
    %cst_29 = arith.constant dense<0.000000e+00> : vector<5x96xf32>
    %39 = tpu.matmul %36, %38, %cst_29 {dimension_numbers = #tpu.dot_dimension_numbers<[1], [0], [0], [1], [0, 0, 1, 1], [], []>} : vector<5x32xf32>, vector<32x96xf32>, vector<5x96xf32> -> vector<5x96xf32>
    %c0_30 = arith.constant 0 : index
    %c0_31 = arith.constant 0 : index
    %c0_32 = arith.constant 0 : index
    %40 = vector.load %arg9[%c0_30, %c0_31, %c0_32] : memref<2x1x96xf32, #tpu.memory_space<vmem>>, vector<1x1x96xf32>
    %41 = vector.shape_cast %40 : vector<1x1x96xf32> to vector<1x96xf32>
    %42 = vector.broadcast %41 : vector<1x96xf32> to vector<5x96xf32>
    %43 = arith.addf %39, %42 : vector<5x96xf32>
    %44 = vector.extract_strided_slice %43 {offsets = [0, 0], sizes = [5, 32], strides = [1, 1]} : vector<5x96xf32> to vector<5x32xf32>
    %cst_33 = arith.constant 0.353553385 : f32
    %45 = vector.broadcast %cst_33 : f32 to vector<5x32xf32>
    %46 = arith.mulf %44, %45 : vector<5x32xf32>
    %47 = vector.extract_strided_slice %43 {offsets = [0, 32], sizes = [5, 32], strides = [1, 1]} : vector<5x96xf32> to vector<5x32xf32>
    %48 = vector.extract_strided_slice %43 {offsets = [0, 64], sizes = [5, 32], strides = [1, 1]} : vector<5x96xf32> to vector<5x32xf32>
    %c0_34 = arith.constant 0 : index
    %c0_35 = arith.constant 0 : index
    %c0_36 = arith.constant 0 : index
    %49 = vector.load %arg10[%c0_34, %c0_35, %c0_36] : memref<2x32x32xf32, #tpu.memory_space<vmem>>, vector<1x32x32xf32>
    %50 = vector.shape_cast %49 : vector<1x32x32xf32> to vector<32x32xf32>
    %51 = vector.extract_strided_slice %46 {offsets = [0, 0], sizes = [5, 8], strides = [1, 1]} : vector<5x32xf32> to vector<5x8xf32>
    %52 = vector.extract_strided_slice %47 {offsets = [0, 0], sizes = [5, 8], strides = [1, 1]} : vector<5x32xf32> to vector<5x8xf32>
    %cst_37 = arith.constant dense<0.000000e+00> : vector<5x5xf32>
    %53 = tpu.matmul %51, %52, %cst_37 {dimension_numbers = #tpu.dot_dimension_numbers<[1], [1], [0], [0], [0, 0, 1, 0], [], []>} : vector<5x8xf32>, vector<5x8xf32>, vector<5x5xf32> -> vector<5x5xf32>
    %cst_38 = arith.constant dense<0xFF800000> : vector<5xf32>
    %54 = vector.multi_reduction <maximumf>, %53, %cst_38 [1] : vector<5x5xf32> to vector<5xf32>
    %55 = vector.shape_cast %54 : vector<5xf32> to vector<5x1xf32>
    %56 = vector.broadcast %55 : vector<5x1xf32> to vector<5x5xf32>
    %57 = arith.subf %53, %56 : vector<5x5xf32>
    %58 = math.exp %57 : vector<5x5xf32>
    %cst_39 = arith.constant dense<0.000000e+00> : vector<5xf32>
    %59 = vector.multi_reduction <add>, %58, %cst_39 [1] : vector<5x5xf32> to vector<5xf32>
    %60 = vector.shape_cast %59 : vector<5xf32> to vector<5x1xf32>
    %61 = tpu.reciprocal %60 {approx = true} : vector<5x1xf32> -> vector<5x1xf32>
    %62 = vector.broadcast %61 : vector<5x1xf32> to vector<5x5xf32>
    %63 = arith.mulf %58, %62 : vector<5x5xf32>
    %64 = vector.extract_strided_slice %48 {offsets = [0, 0], sizes = [5, 8], strides = [1, 1]} : vector<5x32xf32> to vector<5x8xf32>
    %cst_40 = arith.constant dense<0.000000e+00> : vector<5x8xf32>
    %65 = tpu.matmul %63, %64, %cst_40 {dimension_numbers = #tpu.dot_dimension_numbers<[1], [0], [0], [1], [0, 0, 1, 1], [], []>} : vector<5x5xf32>, vector<5x8xf32>, vector<5x8xf32> -> vector<5x8xf32>
    %66 = vector.extract_strided_slice %50 {offsets = [0, 0], sizes = [8, 32], strides = [1, 1]} : vector<32x32xf32> to vector<8x32xf32>
    %cst_41 = arith.constant dense<0.000000e+00> : vector<5x32xf32>
    %67 = tpu.matmul %65, %66, %cst_41 {dimension_numbers = #tpu.dot_dimension_numbers<[1], [0], [0], [1], [0, 0, 1, 1], [], []>} : vector<5x8xf32>, vector<8x32xf32>, vector<5x32xf32> -> vector<5x32xf32>
    %68 = vector.extract_strided_slice %46 {offsets = [0, 8], sizes = [5, 8], strides = [1, 1]} : vector<5x32xf32> to vector<5x8xf32>
    %69 = vector.extract_strided_slice %47 {offsets = [0, 8], sizes = [5, 8], strides = [1, 1]} : vector<5x32xf32> to vector<5x8xf32>
    %cst_42 = arith.constant dense<0.000000e+00> : vector<5x5xf32>
    %70 = tpu.matmul %68, %69, %cst_42 {dimension_numbers = #tpu.dot_dimension_numbers<[1], [1], [0], [0], [0, 0, 1, 0], [], []>} : vector<5x8xf32>, vector<5x8xf32>, vector<5x5xf32> -> vector<5x5xf32>
    %cst_43 = arith.constant dense<0xFF800000> : vector<5xf32>
    %71 = vector.multi_reduction <maximumf>, %70, %cst_43 [1] : vector<5x5xf32> to vector<5xf32>
    %72 = vector.shape_cast %71 : vector<5xf32> to vector<5x1xf32>
    %73 = vector.broadcast %72 : vector<5x1xf32> to vector<5x5xf32>
    %74 = arith.subf %70, %73 : vector<5x5xf32>
    %75 = math.exp %74 : vector<5x5xf32>
    %cst_44 = arith.constant dense<0.000000e+00> : vector<5xf32>
    %76 = vector.multi_reduction <add>, %75, %cst_44 [1] : vector<5x5xf32> to vector<5xf32>
    %77 = vector.shape_cast %76 : vector<5xf32> to vector<5x1xf32>
    %78 = tpu.reciprocal %77 {approx = true} : vector<5x1xf32> -> vector<5x1xf32>
    %79 = vector.broadcast %78 : vector<5x1xf32> to vector<5x5xf32>
    %80 = arith.mulf %75, %79 : vector<5x5xf32>
    %81 = vector.extract_strided_slice %48 {offsets = [0, 8], sizes = [5, 8], strides = [1, 1]} : vector<5x32xf32> to vector<5x8xf32>
    %cst_45 = arith.constant dense<0.000000e+00> : vector<5x8xf32>
    %82 = tpu.matmul %80, %81, %cst_45 {dimension_numbers = #tpu.dot_dimension_numbers<[1], [0], [0], [1], [0, 0, 1, 1], [], []>} : vector<5x5xf32>, vector<5x8xf32>, vector<5x8xf32> -> vector<5x8xf32>
    %83 = vector.extract_strided_slice %50 {offsets = [8, 0], sizes = [8, 32], strides = [1, 1]} : vector<32x32xf32> to vector<8x32xf32>
    %cst_46 = arith.constant dense<0.000000e+00> : vector<5x32xf32>
    %84 = tpu.matmul %82, %83, %cst_46 {dimension_numbers = #tpu.dot_dimension_numbers<[1], [0], [0], [1], [0, 0, 1, 1], [], []>} : vector<5x8xf32>, vector<8x32xf32>, vector<5x32xf32> -> vector<5x32xf32>
    %85 = arith.addf %67, %84 : vector<5x32xf32>
    %86 = vector.extract_strided_slice %46 {offsets = [0, 16], sizes = [5, 8], strides = [1, 1]} : vector<5x32xf32> to vector<5x8xf32>
    %87 = vector.extract_strided_slice %47 {offsets = [0, 16], sizes = [5, 8], strides = [1, 1]} : vector<5x32xf32> to vector<5x8xf32>
    %cst_47 = arith.constant dense<0.000000e+00> : vector<5x5xf32>
    %88 = tpu.matmul %86, %87, %cst_47 {dimension_numbers = #tpu.dot_dimension_numbers<[1], [1], [0], [0], [0, 0, 1, 0], [], []>} : vector<5x8xf32>, vector<5x8xf32>, vector<5x5xf32> -> vector<5x5xf32>
    %cst_48 = arith.constant dense<0xFF800000> : vector<5xf32>
    %89 = vector.multi_reduction <maximumf>, %88, %cst_48 [1] : vector<5x5xf32> to vector<5xf32>
    %90 = vector.shape_cast %89 : vector<5xf32> to vector<5x1xf32>
    %91 = vector.broadcast %90 : vector<5x1xf32> to vector<5x5xf32>
    %92 = arith.subf %88, %91 : vector<5x5xf32>
    %93 = math.exp %92 : vector<5x5xf32>
    %cst_49 = arith.constant dense<0.000000e+00> : vector<5xf32>
    %94 = vector.multi_reduction <add>, %93, %cst_49 [1] : vector<5x5xf32> to vector<5xf32>
    %95 = vector.shape_cast %94 : vector<5xf32> to vector<5x1xf32>
    %96 = tpu.reciprocal %95 {approx = true} : vector<5x1xf32> -> vector<5x1xf32>
    %97 = vector.broadcast %96 : vector<5x1xf32> to vector<5x5xf32>
    %98 = arith.mulf %93, %97 : vector<5x5xf32>
    %99 = vector.extract_strided_slice %48 {offsets = [0, 16], sizes = [5, 8], strides = [1, 1]} : vector<5x32xf32> to vector<5x8xf32>
    %cst_50 = arith.constant dense<0.000000e+00> : vector<5x8xf32>
    %100 = tpu.matmul %98, %99, %cst_50 {dimension_numbers = #tpu.dot_dimension_numbers<[1], [0], [0], [1], [0, 0, 1, 1], [], []>} : vector<5x5xf32>, vector<5x8xf32>, vector<5x8xf32> -> vector<5x8xf32>
    %101 = vector.extract_strided_slice %50 {offsets = [16, 0], sizes = [8, 32], strides = [1, 1]} : vector<32x32xf32> to vector<8x32xf32>
    %cst_51 = arith.constant dense<0.000000e+00> : vector<5x32xf32>
    %102 = tpu.matmul %100, %101, %cst_51 {dimension_numbers = #tpu.dot_dimension_numbers<[1], [0], [0], [1], [0, 0, 1, 1], [], []>} : vector<5x8xf32>, vector<8x32xf32>, vector<5x32xf32> -> vector<5x32xf32>
    %103 = arith.addf %85, %102 : vector<5x32xf32>
    %104 = vector.extract_strided_slice %46 {offsets = [0, 24], sizes = [5, 8], strides = [1, 1]} : vector<5x32xf32> to vector<5x8xf32>
    %105 = vector.extract_strided_slice %47 {offsets = [0, 24], sizes = [5, 8], strides = [1, 1]} : vector<5x32xf32> to vector<5x8xf32>
    %cst_52 = arith.constant dense<0.000000e+00> : vector<5x5xf32>
    %106 = tpu.matmul %104, %105, %cst_52 {dimension_numbers = #tpu.dot_dimension_numbers<[1], [1], [0], [0], [0, 0, 1, 0], [], []>} : vector<5x8xf32>, vector<5x8xf32>, vector<5x5xf32> -> vector<5x5xf32>
    %cst_53 = arith.constant dense<0xFF800000> : vector<5xf32>
    %107 = vector.multi_reduction <maximumf>, %106, %cst_53 [1] : vector<5x5xf32> to vector<5xf32>
    %108 = vector.shape_cast %107 : vector<5xf32> to vector<5x1xf32>
    %109 = vector.broadcast %108 : vector<5x1xf32> to vector<5x5xf32>
    %110 = arith.subf %106, %109 : vector<5x5xf32>
    %111 = math.exp %110 : vector<5x5xf32>
    %cst_54 = arith.constant dense<0.000000e+00> : vector<5xf32>
    %112 = vector.multi_reduction <add>, %111, %cst_54 [1] : vector<5x5xf32> to vector<5xf32>
    %113 = vector.shape_cast %112 : vector<5xf32> to vector<5x1xf32>
    %114 = tpu.reciprocal %113 {approx = true} : vector<5x1xf32> -> vector<5x1xf32>
    %115 = vector.broadcast %114 : vector<5x1xf32> to vector<5x5xf32>
    %116 = arith.mulf %111, %115 : vector<5x5xf32>
    %117 = vector.extract_strided_slice %48 {offsets = [0, 24], sizes = [5, 8], strides = [1, 1]} : vector<5x32xf32> to vector<5x8xf32>
    %cst_55 = arith.constant dense<0.000000e+00> : vector<5x8xf32>
    %118 = tpu.matmul %116, %117, %cst_55 {dimension_numbers = #tpu.dot_dimension_numbers<[1], [0], [0], [1], [0, 0, 1, 1], [], []>} : vector<5x5xf32>, vector<5x8xf32>, vector<5x8xf32> -> vector<5x8xf32>
    %119 = vector.extract_strided_slice %50 {offsets = [24, 0], sizes = [8, 32], strides = [1, 1]} : vector<32x32xf32> to vector<8x32xf32>
    %cst_56 = arith.constant dense<0.000000e+00> : vector<5x32xf32>
    %120 = tpu.matmul %118, %119, %cst_56 {dimension_numbers = #tpu.dot_dimension_numbers<[1], [0], [0], [1], [0, 0, 1, 1], [], []>} : vector<5x8xf32>, vector<8x32xf32>, vector<5x32xf32> -> vector<5x32xf32>
    %121 = arith.addf %103, %120 : vector<5x32xf32>
    %122 = arith.addf %12, %121 : vector<5x32xf32>
    %c0_57 = arith.constant 0 : index
    %c0_58 = arith.constant 0 : index
    %c0_59 = arith.constant 0 : index
    %123 = vector.load %arg11[%c0_57, %c0_58, %c0_59] : memref<2x1x32xf32, #tpu.memory_space<vmem>>, vector<1x1x32xf32>
    %124 = vector.shape_cast %123 : vector<1x1x32xf32> to vector<1x32xf32>
    %125 = vector.broadcast %124 : vector<1x32xf32> to vector<5x32xf32>
    %126 = arith.addf %122, %125 : vector<5x32xf32>
    %c0_60 = arith.constant 0 : index
    %c0_61 = arith.constant 0 : index
    %c0_62 = arith.constant 0 : index
    %127 = vector.load %arg12[%c0_60, %c0_61, %c0_62] : memref<2x1x32xf32, #tpu.memory_space<vmem>>, vector<1x1x32xf32>
    %128 = vector.shape_cast %127 : vector<1x1x32xf32> to vector<1x32xf32>
    %c0_63 = arith.constant 0 : index
    %c0_64 = arith.constant 0 : index
    %c0_65 = arith.constant 0 : index
    %129 = vector.load %arg13[%c0_63, %c0_64, %c0_65] : memref<2x1x32xf32, #tpu.memory_space<vmem>>, vector<1x1x32xf32>
    %130 = vector.shape_cast %129 : vector<1x1x32xf32> to vector<1x32xf32>
    %cst_66 = arith.constant dense<0.000000e+00> : vector<5xf32>
    %131 = vector.multi_reduction <add>, %126, %cst_66 [1] : vector<5x32xf32> to vector<5xf32>
    %132 = vector.shape_cast %131 : vector<5xf32> to vector<5x1xf32>
    %cst_67 = arith.constant 3.200000e+01 : f32
    %133 = vector.broadcast %cst_67 : f32 to vector<5x1xf32>
    %134 = arith.divf %132, %133 : vector<5x1xf32>
    %135 = vector.broadcast %134 : vector<5x1xf32> to vector<5x32xf32>
    %136 = arith.subf %126, %135 : vector<5x32xf32>
    %137 = arith.mulf %136, %136 : vector<5x32xf32>
    %cst_68 = arith.constant dense<0.000000e+00> : vector<5xf32>
    %138 = vector.multi_reduction <add>, %137, %cst_68 [1] : vector<5x32xf32> to vector<5xf32>
    %139 = vector.shape_cast %138 : vector<5xf32> to vector<5x1xf32>
    %cst_69 = arith.constant 3.200000e+01 : f32
    %140 = vector.broadcast %cst_69 : f32 to vector<5x1xf32>
    %141 = arith.divf %139, %140 : vector<5x1xf32>
    %cst_70 = arith.constant 9.99999997E-7 : f32
    %142 = vector.broadcast %cst_70 : f32 to vector<5x1xf32>
    %143 = arith.addf %141, %142 : vector<5x1xf32>
    %144 = math.rsqrt %143 : vector<5x1xf32>
    %145 = vector.broadcast %144 : vector<5x1xf32> to vector<5x32xf32>
    %146 = arith.mulf %136, %145 : vector<5x32xf32>
    %147 = vector.broadcast %128 : vector<1x32xf32> to vector<5x32xf32>
    %148 = arith.mulf %146, %147 : vector<5x32xf32>
    %149 = vector.broadcast %130 : vector<1x32xf32> to vector<5x32xf32>
    %150 = arith.addf %148, %149 : vector<5x32xf32>
    %c0_71 = arith.constant 0 : index
    %c0_72 = arith.constant 0 : index
    %c0_73 = arith.constant 0 : index
    %151 = vector.load %arg14[%c0_71, %c0_72, %c0_73] : memref<2x32x64xf32, #tpu.memory_space<vmem>>, vector<1x32x64xf32>
    %152 = vector.shape_cast %151 : vector<1x32x64xf32> to vector<32x64xf32>
    %cst_74 = arith.constant dense<0.000000e+00> : vector<5x64xf32>
    %153 = tpu.matmul %150, %152, %cst_74 {dimension_numbers = #tpu.dot_dimension_numbers<[1], [0], [0], [1], [0, 0, 1, 1], [], []>} : vector<5x32xf32>, vector<32x64xf32>, vector<5x64xf32> -> vector<5x64xf32>
    %c0_75 = arith.constant 0 : index
    %c0_76 = arith.constant 0 : index
    %c0_77 = arith.constant 0 : index
    %154 = vector.load %arg15[%c0_75, %c0_76, %c0_77] : memref<2x1x64xf32, #tpu.memory_space<vmem>>, vector<1x1x64xf32>
    %155 = vector.shape_cast %154 : vector<1x1x64xf32> to vector<1x64xf32>
    %156 = vector.broadcast %155 : vector<1x64xf32> to vector<5x64xf32>
    %157 = arith.addf %153, %156 : vector<5x64xf32>
    %cst_78 = arith.constant 5.000000e-01 : f32
    %158 = vector.broadcast %cst_78 : f32 to vector<5x64xf32>
    %159 = arith.mulf %158, %157 : vector<5x64xf32>
    %cst_79 = arith.constant 0.707106769 : f32
    %160 = vector.broadcast %cst_79 : f32 to vector<5x64xf32>
    %161 = arith.mulf %157, %160 : vector<5x64xf32>
    %cst_80 = arith.constant 0.000000e+00 : f32
    %162 = vector.broadcast %cst_80 : f32 to vector<5x64xf32>
    %163 = arith.cmpf olt, %161, %162 : vector<5x64xf32>
    %cst_81 = arith.constant -1.000000e+00 : f32
    %cst_82 = arith.constant 1.000000e+00 : f32
    %164 = vector.broadcast %cst_81 : f32 to vector<5x64xf32>
    %165 = vector.broadcast %cst_82 : f32 to vector<5x64xf32>
    %166 = arith.select %163, %164, %165 : vector<5x64xi1>, vector<5x64xf32>
    %167 = math.absf %161 : vector<5x64xf32>
    %cst_83 = arith.constant 0.327591091 : f32
    %168 = vector.broadcast %cst_83 : f32 to vector<5x64xf32>
    %169 = arith.mulf %168, %167 : vector<5x64xf32>
    %cst_84 = arith.constant 1.000000e+00 : f32
    %170 = vector.broadcast %cst_84 : f32 to vector<5x64xf32>
    %171 = arith.addf %170, %169 : vector<5x64xf32>
    %cst_85 = arith.constant 1.000000e+00 : f32
    %172 = vector.broadcast %cst_85 : f32 to vector<5x64xf32>
    %173 = arith.divf %172, %171 : vector<5x64xf32>
    %cst_86 = arith.constant 1.06140542 : f32
    %174 = vector.broadcast %cst_86 : f32 to vector<5x64xf32>
    %175 = arith.mulf %174, %173 : vector<5x64xf32>
    %cst_87 = arith.constant -1.45315206 : f32
    %176 = vector.broadcast %cst_87 : f32 to vector<5x64xf32>
    %177 = arith.addf %175, %176 : vector<5x64xf32>
    %178 = arith.mulf %177, %173 : vector<5x64xf32>
    %cst_88 = arith.constant 1.42141378 : f32
    %179 = vector.broadcast %cst_88 : f32 to vector<5x64xf32>
    %180 = arith.addf %178, %179 : vector<5x64xf32>
    %181 = arith.mulf %180, %173 : vector<5x64xf32>
    %cst_89 = arith.constant -0.284496725 : f32
    %182 = vector.broadcast %cst_89 : f32 to vector<5x64xf32>
    %183 = arith.addf %181, %182 : vector<5x64xf32>
    %184 = arith.mulf %183, %173 : vector<5x64xf32>
    %cst_90 = arith.constant 0.254829586 : f32
    %185 = vector.broadcast %cst_90 : f32 to vector<5x64xf32>
    %186 = arith.addf %184, %185 : vector<5x64xf32>
    %187 = arith.mulf %186, %173 : vector<5x64xf32>
    %cst_91 = arith.constant 0.000000e+00 : f32
    %188 = vector.broadcast %cst_91 : f32 to vector<5x64xf32>
    %189 = arith.subf %188, %167 : vector<5x64xf32>
    %190 = arith.mulf %189, %167 : vector<5x64xf32>
    %191 = math.exp %190 : vector<5x64xf32>
    %192 = arith.mulf %187, %191 : vector<5x64xf32>
    %cst_92 = arith.constant 1.000000e+00 : f32
    %193 = vector.broadcast %cst_92 : f32 to vector<5x64xf32>
    %194 = arith.subf %193, %192 : vector<5x64xf32>
    %195 = arith.mulf %166, %194 : vector<5x64xf32>
    %cst_93 = arith.constant 1.000000e+00 : f32
    %196 = vector.broadcast %cst_93 : f32 to vector<5x64xf32>
    %197 = arith.addf %196, %195 : vector<5x64xf32>
    %198 = arith.mulf %159, %197 : vector<5x64xf32>
    %c0_94 = arith.constant 0 : index
    %c0_95 = arith.constant 0 : index
    %c0_96 = arith.constant 0 : index
    %199 = vector.load %arg16[%c0_94, %c0_95, %c0_96] : memref<2x64x32xf32, #tpu.memory_space<vmem>>, vector<1x64x32xf32>
    %200 = vector.shape_cast %199 : vector<1x64x32xf32> to vector<64x32xf32>
    %cst_97 = arith.constant dense<0.000000e+00> : vector<5x32xf32>
    %201 = tpu.matmul %198, %200, %cst_97 {dimension_numbers = #tpu.dot_dimension_numbers<[1], [0], [0], [1], [0, 0, 1, 1], [], []>} : vector<5x64xf32>, vector<64x32xf32>, vector<5x32xf32> -> vector<5x32xf32>
    %202 = arith.addf %126, %201 : vector<5x32xf32>
    %c0_98 = arith.constant 0 : index
    %c0_99 = arith.constant 0 : index
    %c0_100 = arith.constant 0 : index
    %203 = vector.load %arg17[%c0_98, %c0_99, %c0_100] : memref<2x1x32xf32, #tpu.memory_space<vmem>>, vector<1x1x32xf32>
    %204 = vector.shape_cast %203 : vector<1x1x32xf32> to vector<1x32xf32>
    %205 = vector.broadcast %204 : vector<1x32xf32> to vector<5x32xf32>
    %206 = arith.addf %202, %205 : vector<5x32xf32>
    %c1_101 = arith.constant 1 : index
    %c0_102 = arith.constant 0 : index
    %c0_103 = arith.constant 0 : index
    %207 = vector.load %arg6[%c1_101, %c0_102, %c0_103] : memref<2x1x32xf32, #tpu.memory_space<vmem>>, vector<1x1x32xf32>
    %208 = vector.shape_cast %207 : vector<1x1x32xf32> to vector<1x32xf32>
    %c1_104 = arith.constant 1 : index
    %c0_105 = arith.constant 0 : index
    %c0_106 = arith.constant 0 : index
    %209 = vector.load %arg7[%c1_104, %c0_105, %c0_106] : memref<2x1x32xf32, #tpu.memory_space<vmem>>, vector<1x1x32xf32>
    %210 = vector.shape_cast %209 : vector<1x1x32xf32> to vector<1x32xf32>
    %cst_107 = arith.constant dense<0.000000e+00> : vector<5xf32>
    %211 = vector.multi_reduction <add>, %206, %cst_107 [1] : vector<5x32xf32> to vector<5xf32>
    %212 = vector.shape_cast %211 : vector<5xf32> to vector<5x1xf32>
    %cst_108 = arith.constant 3.200000e+01 : f32
    %213 = vector.broadcast %cst_108 : f32 to vector<5x1xf32>
    %214 = arith.divf %212, %213 : vector<5x1xf32>
    %215 = vector.broadcast %214 : vector<5x1xf32> to vector<5x32xf32>
    %216 = arith.subf %206, %215 : vector<5x32xf32>
    %217 = arith.mulf %216, %216 : vector<5x32xf32>
    %cst_109 = arith.constant dense<0.000000e+00> : vector<5xf32>
    %218 = vector.multi_reduction <add>, %217, %cst_109 [1] : vector<5x32xf32> to vector<5xf32>
    %219 = vector.shape_cast %218 : vector<5xf32> to vector<5x1xf32>
    %cst_110 = arith.constant 3.200000e+01 : f32
    %220 = vector.broadcast %cst_110 : f32 to vector<5x1xf32>
    %221 = arith.divf %219, %220 : vector<5x1xf32>
    %cst_111 = arith.constant 9.99999997E-7 : f32
    %222 = vector.broadcast %cst_111 : f32 to vector<5x1xf32>
    %223 = arith.addf %221, %222 : vector<5x1xf32>
    %224 = math.rsqrt %223 : vector<5x1xf32>
    %225 = vector.broadcast %224 : vector<5x1xf32> to vector<5x32xf32>
    %226 = arith.mulf %216, %225 : vector<5x32xf32>
    %227 = vector.broadcast %208 : vector<1x32xf32> to vector<5x32xf32>
    %228 = arith.mulf %226, %227 : vector<5x32xf32>
    %229 = vector.broadcast %210 : vector<1x32xf32> to vector<5x32xf32>
    %230 = arith.addf %228, %229 : vector<5x32xf32>
    %c1_112 = arith.constant 1 : index
    %c0_113 = arith.constant 0 : index
    %c0_114 = arith.constant 0 : index
    %231 = vector.load %arg8[%c1_112, %c0_113, %c0_114] : memref<2x32x96xf32, #tpu.memory_space<vmem>>, vector<1x32x96xf32>
    %232 = vector.shape_cast %231 : vector<1x32x96xf32> to vector<32x96xf32>
    %cst_115 = arith.constant dense<0.000000e+00> : vector<5x96xf32>
    %233 = tpu.matmul %230, %232, %cst_115 {dimension_numbers = #tpu.dot_dimension_numbers<[1], [0], [0], [1], [0, 0, 1, 1], [], []>} : vector<5x32xf32>, vector<32x96xf32>, vector<5x96xf32> -> vector<5x96xf32>
    %c1_116 = arith.constant 1 : index
    %c0_117 = arith.constant 0 : index
    %c0_118 = arith.constant 0 : index
    %234 = vector.load %arg9[%c1_116, %c0_117, %c0_118] : memref<2x1x96xf32, #tpu.memory_space<vmem>>, vector<1x1x96xf32>
    %235 = vector.shape_cast %234 : vector<1x1x96xf32> to vector<1x96xf32>
    %236 = vector.broadcast %235 : vector<1x96xf32> to vector<5x96xf32>
    %237 = arith.addf %233, %236 : vector<5x96xf32>
    %238 = vector.extract_strided_slice %237 {offsets = [0, 0], sizes = [5, 32], strides = [1, 1]} : vector<5x96xf32> to vector<5x32xf32>
    %cst_119 = arith.constant 0.353553385 : f32
    %239 = vector.broadcast %cst_119 : f32 to vector<5x32xf32>
    %240 = arith.mulf %238, %239 : vector<5x32xf32>
    %241 = vector.extract_strided_slice %237 {offsets = [0, 32], sizes = [5, 32], strides = [1, 1]} : vector<5x96xf32> to vector<5x32xf32>
    %242 = vector.extract_strided_slice %237 {offsets = [0, 64], sizes = [5, 32], strides = [1, 1]} : vector<5x96xf32> to vector<5x32xf32>
    %c1_120 = arith.constant 1 : index
    %c0_121 = arith.constant 0 : index
    %c0_122 = arith.constant 0 : index
    %243 = vector.load %arg10[%c1_120, %c0_121, %c0_122] : memref<2x32x32xf32, #tpu.memory_space<vmem>>, vector<1x32x32xf32>
    %244 = vector.shape_cast %243 : vector<1x32x32xf32> to vector<32x32xf32>
    %245 = vector.extract_strided_slice %240 {offsets = [0, 0], sizes = [5, 8], strides = [1, 1]} : vector<5x32xf32> to vector<5x8xf32>
    %246 = vector.extract_strided_slice %241 {offsets = [0, 0], sizes = [5, 8], strides = [1, 1]} : vector<5x32xf32> to vector<5x8xf32>
    %cst_123 = arith.constant dense<0.000000e+00> : vector<5x5xf32>
    %247 = tpu.matmul %245, %246, %cst_123 {dimension_numbers = #tpu.dot_dimension_numbers<[1], [1], [0], [0], [0, 0, 1, 0], [], []>} : vector<5x8xf32>, vector<5x8xf32>, vector<5x5xf32> -> vector<5x5xf32>
    %cst_124 = arith.constant dense<0xFF800000> : vector<5xf32>
    %248 = vector.multi_reduction <maximumf>, %247, %cst_124 [1] : vector<5x5xf32> to vector<5xf32>
    %249 = vector.shape_cast %248 : vector<5xf32> to vector<5x1xf32>
    %250 = vector.broadcast %249 : vector<5x1xf32> to vector<5x5xf32>
    %251 = arith.subf %247, %250 : vector<5x5xf32>
    %252 = math.exp %251 : vector<5x5xf32>
    %cst_125 = arith.constant dense<0.000000e+00> : vector<5xf32>
    %253 = vector.multi_reduction <add>, %252, %cst_125 [1] : vector<5x5xf32> to vector<5xf32>
    %254 = vector.shape_cast %253 : vector<5xf32> to vector<5x1xf32>
    %255 = tpu.reciprocal %254 {approx = true} : vector<5x1xf32> -> vector<5x1xf32>
    %256 = vector.broadcast %255 : vector<5x1xf32> to vector<5x5xf32>
    %257 = arith.mulf %252, %256 : vector<5x5xf32>
    %258 = vector.extract_strided_slice %242 {offsets = [0, 0], sizes = [5, 8], strides = [1, 1]} : vector<5x32xf32> to vector<5x8xf32>
    %cst_126 = arith.constant dense<0.000000e+00> : vector<5x8xf32>
    %259 = tpu.matmul %257, %258, %cst_126 {dimension_numbers = #tpu.dot_dimension_numbers<[1], [0], [0], [1], [0, 0, 1, 1], [], []>} : vector<5x5xf32>, vector<5x8xf32>, vector<5x8xf32> -> vector<5x8xf32>
    %260 = vector.extract_strided_slice %244 {offsets = [0, 0], sizes = [8, 32], strides = [1, 1]} : vector<32x32xf32> to vector<8x32xf32>
    %cst_127 = arith.constant dense<0.000000e+00> : vector<5x32xf32>
    %261 = tpu.matmul %259, %260, %cst_127 {dimension_numbers = #tpu.dot_dimension_numbers<[1], [0], [0], [1], [0, 0, 1, 1], [], []>} : vector<5x8xf32>, vector<8x32xf32>, vector<5x32xf32> -> vector<5x32xf32>
    %262 = vector.extract_strided_slice %240 {offsets = [0, 8], sizes = [5, 8], strides = [1, 1]} : vector<5x32xf32> to vector<5x8xf32>
    %263 = vector.extract_strided_slice %241 {offsets = [0, 8], sizes = [5, 8], strides = [1, 1]} : vector<5x32xf32> to vector<5x8xf32>
    %cst_128 = arith.constant dense<0.000000e+00> : vector<5x5xf32>
    %264 = tpu.matmul %262, %263, %cst_128 {dimension_numbers = #tpu.dot_dimension_numbers<[1], [1], [0], [0], [0, 0, 1, 0], [], []>} : vector<5x8xf32>, vector<5x8xf32>, vector<5x5xf32> -> vector<5x5xf32>
    %cst_129 = arith.constant dense<0xFF800000> : vector<5xf32>
    %265 = vector.multi_reduction <maximumf>, %264, %cst_129 [1] : vector<5x5xf32> to vector<5xf32>
    %266 = vector.shape_cast %265 : vector<5xf32> to vector<5x1xf32>
    %267 = vector.broadcast %266 : vector<5x1xf32> to vector<5x5xf32>
    %268 = arith.subf %264, %267 : vector<5x5xf32>
    %269 = math.exp %268 : vector<5x5xf32>
    %cst_130 = arith.constant dense<0.000000e+00> : vector<5xf32>
    %270 = vector.multi_reduction <add>, %269, %cst_130 [1] : vector<5x5xf32> to vector<5xf32>
    %271 = vector.shape_cast %270 : vector<5xf32> to vector<5x1xf32>
    %272 = tpu.reciprocal %271 {approx = true} : vector<5x1xf32> -> vector<5x1xf32>
    %273 = vector.broadcast %272 : vector<5x1xf32> to vector<5x5xf32>
    %274 = arith.mulf %269, %273 : vector<5x5xf32>
    %275 = vector.extract_strided_slice %242 {offsets = [0, 8], sizes = [5, 8], strides = [1, 1]} : vector<5x32xf32> to vector<5x8xf32>
    %cst_131 = arith.constant dense<0.000000e+00> : vector<5x8xf32>
    %276 = tpu.matmul %274, %275, %cst_131 {dimension_numbers = #tpu.dot_dimension_numbers<[1], [0], [0], [1], [0, 0, 1, 1], [], []>} : vector<5x5xf32>, vector<5x8xf32>, vector<5x8xf32> -> vector<5x8xf32>
    %277 = vector.extract_strided_slice %244 {offsets = [8, 0], sizes = [8, 32], strides = [1, 1]} : vector<32x32xf32> to vector<8x32xf32>
    %cst_132 = arith.constant dense<0.000000e+00> : vector<5x32xf32>
    %278 = tpu.matmul %276, %277, %cst_132 {dimension_numbers = #tpu.dot_dimension_numbers<[1], [0], [0], [1], [0, 0, 1, 1], [], []>} : vector<5x8xf32>, vector<8x32xf32>, vector<5x32xf32> -> vector<5x32xf32>
    %279 = arith.addf %261, %278 : vector<5x32xf32>
    %280 = vector.extract_strided_slice %240 {offsets = [0, 16], sizes = [5, 8], strides = [1, 1]} : vector<5x32xf32> to vector<5x8xf32>
    %281 = vector.extract_strided_slice %241 {offsets = [0, 16], sizes = [5, 8], strides = [1, 1]} : vector<5x32xf32> to vector<5x8xf32>
    %cst_133 = arith.constant dense<0.000000e+00> : vector<5x5xf32>
    %282 = tpu.matmul %280, %281, %cst_133 {dimension_numbers = #tpu.dot_dimension_numbers<[1], [1], [0], [0], [0, 0, 1, 0], [], []>} : vector<5x8xf32>, vector<5x8xf32>, vector<5x5xf32> -> vector<5x5xf32>
    %cst_134 = arith.constant dense<0xFF800000> : vector<5xf32>
    %283 = vector.multi_reduction <maximumf>, %282, %cst_134 [1] : vector<5x5xf32> to vector<5xf32>
    %284 = vector.shape_cast %283 : vector<5xf32> to vector<5x1xf32>
    %285 = vector.broadcast %284 : vector<5x1xf32> to vector<5x5xf32>
    %286 = arith.subf %282, %285 : vector<5x5xf32>
    %287 = math.exp %286 : vector<5x5xf32>
    %cst_135 = arith.constant dense<0.000000e+00> : vector<5xf32>
    %288 = vector.multi_reduction <add>, %287, %cst_135 [1] : vector<5x5xf32> to vector<5xf32>
    %289 = vector.shape_cast %288 : vector<5xf32> to vector<5x1xf32>
    %290 = tpu.reciprocal %289 {approx = true} : vector<5x1xf32> -> vector<5x1xf32>
    %291 = vector.broadcast %290 : vector<5x1xf32> to vector<5x5xf32>
    %292 = arith.mulf %287, %291 : vector<5x5xf32>
    %293 = vector.extract_strided_slice %242 {offsets = [0, 16], sizes = [5, 8], strides = [1, 1]} : vector<5x32xf32> to vector<5x8xf32>
    %cst_136 = arith.constant dense<0.000000e+00> : vector<5x8xf32>
    %294 = tpu.matmul %292, %293, %cst_136 {dimension_numbers = #tpu.dot_dimension_numbers<[1], [0], [0], [1], [0, 0, 1, 1], [], []>} : vector<5x5xf32>, vector<5x8xf32>, vector<5x8xf32> -> vector<5x8xf32>
    %295 = vector.extract_strided_slice %244 {offsets = [16, 0], sizes = [8, 32], strides = [1, 1]} : vector<32x32xf32> to vector<8x32xf32>
    %cst_137 = arith.constant dense<0.000000e+00> : vector<5x32xf32>
    %296 = tpu.matmul %294, %295, %cst_137 {dimension_numbers = #tpu.dot_dimension_numbers<[1], [0], [0], [1], [0, 0, 1, 1], [], []>} : vector<5x8xf32>, vector<8x32xf32>, vector<5x32xf32> -> vector<5x32xf32>
    %297 = arith.addf %279, %296 : vector<5x32xf32>
    %298 = vector.extract_strided_slice %240 {offsets = [0, 24], sizes = [5, 8], strides = [1, 1]} : vector<5x32xf32> to vector<5x8xf32>
    %299 = vector.extract_strided_slice %241 {offsets = [0, 24], sizes = [5, 8], strides = [1, 1]} : vector<5x32xf32> to vector<5x8xf32>
    %cst_138 = arith.constant dense<0.000000e+00> : vector<5x5xf32>
    %300 = tpu.matmul %298, %299, %cst_138 {dimension_numbers = #tpu.dot_dimension_numbers<[1], [1], [0], [0], [0, 0, 1, 0], [], []>} : vector<5x8xf32>, vector<5x8xf32>, vector<5x5xf32> -> vector<5x5xf32>
    %cst_139 = arith.constant dense<0xFF800000> : vector<5xf32>
    %301 = vector.multi_reduction <maximumf>, %300, %cst_139 [1] : vector<5x5xf32> to vector<5xf32>
    %302 = vector.shape_cast %301 : vector<5xf32> to vector<5x1xf32>
    %303 = vector.broadcast %302 : vector<5x1xf32> to vector<5x5xf32>
    %304 = arith.subf %300, %303 : vector<5x5xf32>
    %305 = math.exp %304 : vector<5x5xf32>
    %cst_140 = arith.constant dense<0.000000e+00> : vector<5xf32>
    %306 = vector.multi_reduction <add>, %305, %cst_140 [1] : vector<5x5xf32> to vector<5xf32>
    %307 = vector.shape_cast %306 : vector<5xf32> to vector<5x1xf32>
    %308 = tpu.reciprocal %307 {approx = true} : vector<5x1xf32> -> vector<5x1xf32>
    %309 = vector.broadcast %308 : vector<5x1xf32> to vector<5x5xf32>
    %310 = arith.mulf %305, %309 : vector<5x5xf32>
    %311 = vector.extract_strided_slice %242 {offsets = [0, 24], sizes = [5, 8], strides = [1, 1]} : vector<5x32xf32> to vector<5x8xf32>
    %cst_141 = arith.constant dense<0.000000e+00> : vector<5x8xf32>
    %312 = tpu.matmul %310, %311, %cst_141 {dimension_numbers = #tpu.dot_dimension_numbers<[1], [0], [0], [1], [0, 0, 1, 1], [], []>} : vector<5x5xf32>, vector<5x8xf32>, vector<5x8xf32> -> vector<5x8xf32>
    %313 = vector.extract_strided_slice %244 {offsets = [24, 0], sizes = [8, 32], strides = [1, 1]} : vector<32x32xf32> to vector<8x32xf32>
    %cst_142 = arith.constant dense<0.000000e+00> : vector<5x32xf32>
    %314 = tpu.matmul %312, %313, %cst_142 {dimension_numbers = #tpu.dot_dimension_numbers<[1], [0], [0], [1], [0, 0, 1, 1], [], []>} : vector<5x8xf32>, vector<8x32xf32>, vector<5x32xf32> -> vector<5x32xf32>
    %315 = arith.addf %297, %314 : vector<5x32xf32>
    %316 = arith.addf %206, %315 : vector<5x32xf32>
    %c1_143 = arith.constant 1 : index
    %c0_144 = arith.constant 0 : index
    %c0_145 = arith.constant 0 : index
    %317 = vector.load %arg11[%c1_143, %c0_144, %c0_145] : memref<2x1x32xf32, #tpu.memory_space<vmem>>, vector<1x1x32xf32>
    %318 = vector.shape_cast %317 : vector<1x1x32xf32> to vector<1x32xf32>
    %319 = vector.broadcast %318 : vector<1x32xf32> to vector<5x32xf32>
    %320 = arith.addf %316, %319 : vector<5x32xf32>
    %c1_146 = arith.constant 1 : index
    %c0_147 = arith.constant 0 : index
    %c0_148 = arith.constant 0 : index
    %321 = vector.load %arg12[%c1_146, %c0_147, %c0_148] : memref<2x1x32xf32, #tpu.memory_space<vmem>>, vector<1x1x32xf32>
    %322 = vector.shape_cast %321 : vector<1x1x32xf32> to vector<1x32xf32>
    %c1_149 = arith.constant 1 : index
    %c0_150 = arith.constant 0 : index
    %c0_151 = arith.constant 0 : index
    %323 = vector.load %arg13[%c1_149, %c0_150, %c0_151] : memref<2x1x32xf32, #tpu.memory_space<vmem>>, vector<1x1x32xf32>
    %324 = vector.shape_cast %323 : vector<1x1x32xf32> to vector<1x32xf32>
    %cst_152 = arith.constant dense<0.000000e+00> : vector<5xf32>
    %325 = vector.multi_reduction <add>, %320, %cst_152 [1] : vector<5x32xf32> to vector<5xf32>
    %326 = vector.shape_cast %325 : vector<5xf32> to vector<5x1xf32>
    %cst_153 = arith.constant 3.200000e+01 : f32
    %327 = vector.broadcast %cst_153 : f32 to vector<5x1xf32>
    %328 = arith.divf %326, %327 : vector<5x1xf32>
    %329 = vector.broadcast %328 : vector<5x1xf32> to vector<5x32xf32>
    %330 = arith.subf %320, %329 : vector<5x32xf32>
    %331 = arith.mulf %330, %330 : vector<5x32xf32>
    %cst_154 = arith.constant dense<0.000000e+00> : vector<5xf32>
    %332 = vector.multi_reduction <add>, %331, %cst_154 [1] : vector<5x32xf32> to vector<5xf32>
    %333 = vector.shape_cast %332 : vector<5xf32> to vector<5x1xf32>
    %cst_155 = arith.constant 3.200000e+01 : f32
    %334 = vector.broadcast %cst_155 : f32 to vector<5x1xf32>
    %335 = arith.divf %333, %334 : vector<5x1xf32>
    %cst_156 = arith.constant 9.99999997E-7 : f32
    %336 = vector.broadcast %cst_156 : f32 to vector<5x1xf32>
    %337 = arith.addf %335, %336 : vector<5x1xf32>
    %338 = math.rsqrt %337 : vector<5x1xf32>
    %339 = vector.broadcast %338 : vector<5x1xf32> to vector<5x32xf32>
    %340 = arith.mulf %330, %339 : vector<5x32xf32>
    %341 = vector.broadcast %322 : vector<1x32xf32> to vector<5x32xf32>
    %342 = arith.mulf %340, %341 : vector<5x32xf32>
    %343 = vector.broadcast %324 : vector<1x32xf32> to vector<5x32xf32>
    %344 = arith.addf %342, %343 : vector<5x32xf32>
    %c1_157 = arith.constant 1 : index
    %c0_158 = arith.constant 0 : index
    %c0_159 = arith.constant 0 : index
    %345 = vector.load %arg14[%c1_157, %c0_158, %c0_159] : memref<2x32x64xf32, #tpu.memory_space<vmem>>, vector<1x32x64xf32>
    %346 = vector.shape_cast %345 : vector<1x32x64xf32> to vector<32x64xf32>
    %cst_160 = arith.constant dense<0.000000e+00> : vector<5x64xf32>
    %347 = tpu.matmul %344, %346, %cst_160 {dimension_numbers = #tpu.dot_dimension_numbers<[1], [0], [0], [1], [0, 0, 1, 1], [], []>} : vector<5x32xf32>, vector<32x64xf32>, vector<5x64xf32> -> vector<5x64xf32>
    %c1_161 = arith.constant 1 : index
    %c0_162 = arith.constant 0 : index
    %c0_163 = arith.constant 0 : index
    %348 = vector.load %arg15[%c1_161, %c0_162, %c0_163] : memref<2x1x64xf32, #tpu.memory_space<vmem>>, vector<1x1x64xf32>
    %349 = vector.shape_cast %348 : vector<1x1x64xf32> to vector<1x64xf32>
    %350 = vector.broadcast %349 : vector<1x64xf32> to vector<5x64xf32>
    %351 = arith.addf %347, %350 : vector<5x64xf32>
    %cst_164 = arith.constant 5.000000e-01 : f32
    %352 = vector.broadcast %cst_164 : f32 to vector<5x64xf32>
    %353 = arith.mulf %352, %351 : vector<5x64xf32>
    %cst_165 = arith.constant 0.707106769 : f32
    %354 = vector.broadcast %cst_165 : f32 to vector<5x64xf32>
    %355 = arith.mulf %351, %354 : vector<5x64xf32>
    %cst_166 = arith.constant 0.000000e+00 : f32
    %356 = vector.broadcast %cst_166 : f32 to vector<5x64xf32>
    %357 = arith.cmpf olt, %355, %356 : vector<5x64xf32>
    %cst_167 = arith.constant -1.000000e+00 : f32
    %cst_168 = arith.constant 1.000000e+00 : f32
    %358 = vector.broadcast %cst_167 : f32 to vector<5x64xf32>
    %359 = vector.broadcast %cst_168 : f32 to vector<5x64xf32>
    %360 = arith.select %357, %358, %359 : vector<5x64xi1>, vector<5x64xf32>
    %361 = math.absf %355 : vector<5x64xf32>
    %cst_169 = arith.constant 0.327591091 : f32
    %362 = vector.broadcast %cst_169 : f32 to vector<5x64xf32>
    %363 = arith.mulf %362, %361 : vector<5x64xf32>
    %cst_170 = arith.constant 1.000000e+00 : f32
    %364 = vector.broadcast %cst_170 : f32 to vector<5x64xf32>
    %365 = arith.addf %364, %363 : vector<5x64xf32>
    %cst_171 = arith.constant 1.000000e+00 : f32
    %366 = vector.broadcast %cst_171 : f32 to vector<5x64xf32>
    %367 = arith.divf %366, %365 : vector<5x64xf32>
    %cst_172 = arith.constant 1.06140542 : f32
    %368 = vector.broadcast %cst_172 : f32 to vector<5x64xf32>
    %369 = arith.mulf %368, %367 : vector<5x64xf32>
    %cst_173 = arith.constant -1.45315206 : f32
    %370 = vector.broadcast %cst_173 : f32 to vector<5x64xf32>
    %371 = arith.addf %369, %370 : vector<5x64xf32>
    %372 = arith.mulf %371, %367 : vector<5x64xf32>
    %cst_174 = arith.constant 1.42141378 : f32
    %373 = vector.broadcast %cst_174 : f32 to vector<5x64xf32>
    %374 = arith.addf %372, %373 : vector<5x64xf32>
    %375 = arith.mulf %374, %367 : vector<5x64xf32>
    %cst_175 = arith.constant -0.284496725 : f32
    %376 = vector.broadcast %cst_175 : f32 to vector<5x64xf32>
    %377 = arith.addf %375, %376 : vector<5x64xf32>
    %378 = arith.mulf %377, %367 : vector<5x64xf32>
    %cst_176 = arith.constant 0.254829586 : f32
    %379 = vector.broadcast %cst_176 : f32 to vector<5x64xf32>
    %380 = arith.addf %378, %379 : vector<5x64xf32>
    %381 = arith.mulf %380, %367 : vector<5x64xf32>
    %cst_177 = arith.constant 0.000000e+00 : f32
    %382 = vector.broadcast %cst_177 : f32 to vector<5x64xf32>
    %383 = arith.subf %382, %361 : vector<5x64xf32>
    %384 = arith.mulf %383, %361 : vector<5x64xf32>
    %385 = math.exp %384 : vector<5x64xf32>
    %386 = arith.mulf %381, %385 : vector<5x64xf32>
    %cst_178 = arith.constant 1.000000e+00 : f32
    %387 = vector.broadcast %cst_178 : f32 to vector<5x64xf32>
    %388 = arith.subf %387, %386 : vector<5x64xf32>
    %389 = arith.mulf %360, %388 : vector<5x64xf32>
    %cst_179 = arith.constant 1.000000e+00 : f32
    %390 = vector.broadcast %cst_179 : f32 to vector<5x64xf32>
    %391 = arith.addf %390, %389 : vector<5x64xf32>
    %392 = arith.mulf %353, %391 : vector<5x64xf32>
    %c1_180 = arith.constant 1 : index
    %c0_181 = arith.constant 0 : index
    %c0_182 = arith.constant 0 : index
    %393 = vector.load %arg16[%c1_180, %c0_181, %c0_182] : memref<2x64x32xf32, #tpu.memory_space<vmem>>, vector<1x64x32xf32>
    %394 = vector.shape_cast %393 : vector<1x64x32xf32> to vector<64x32xf32>
    %cst_183 = arith.constant dense<0.000000e+00> : vector<5x32xf32>
    %395 = tpu.matmul %392, %394, %cst_183 {dimension_numbers = #tpu.dot_dimension_numbers<[1], [0], [0], [1], [0, 0, 1, 1], [], []>} : vector<5x64xf32>, vector<64x32xf32>, vector<5x32xf32> -> vector<5x32xf32>
    %396 = arith.addf %320, %395 : vector<5x32xf32>
    %c1_184 = arith.constant 1 : index
    %c0_185 = arith.constant 0 : index
    %c0_186 = arith.constant 0 : index
    %397 = vector.load %arg17[%c1_184, %c0_185, %c0_186] : memref<2x1x32xf32, #tpu.memory_space<vmem>>, vector<1x1x32xf32>
    %398 = vector.shape_cast %397 : vector<1x1x32xf32> to vector<1x32xf32>
    %399 = vector.broadcast %398 : vector<1x32xf32> to vector<5x32xf32>
    %400 = arith.addf %396, %399 : vector<5x32xf32>
    %401 = vector.extract_strided_slice %400 {offsets = [0, 0], sizes = [1, 32], strides = [1, 1]} : vector<5x32xf32> to vector<1x32xf32>
    %c0_187 = arith.constant 0 : index
    %c0_188 = arith.constant 0 : index
    %402 = vector.load %arg18[%c0_187, %c0_188] : memref<1x32xf32, #tpu.memory_space<vmem>>, vector<1x32xf32>
    %c0_189 = arith.constant 0 : index
    %c0_190 = arith.constant 0 : index
    %403 = vector.load %arg19[%c0_189, %c0_190] : memref<1x32xf32, #tpu.memory_space<vmem>>, vector<1x32xf32>
    %cst_191 = arith.constant dense<0.000000e+00> : vector<1xf32>
    %404 = vector.multi_reduction <add>, %401, %cst_191 [1] : vector<1x32xf32> to vector<1xf32>
    %405 = vector.shape_cast %404 : vector<1xf32> to vector<1x1xf32>
    %cst_192 = arith.constant 3.200000e+01 : f32
    %406 = vector.broadcast %cst_192 : f32 to vector<1x1xf32>
    %407 = arith.divf %405, %406 : vector<1x1xf32>
    %408 = vector.broadcast %407 : vector<1x1xf32> to vector<1x32xf32>
    %409 = arith.subf %401, %408 : vector<1x32xf32>
    %410 = arith.mulf %409, %409 : vector<1x32xf32>
    %cst_193 = arith.constant dense<0.000000e+00> : vector<1xf32>
    %411 = vector.multi_reduction <add>, %410, %cst_193 [1] : vector<1x32xf32> to vector<1xf32>
    %412 = vector.shape_cast %411 : vector<1xf32> to vector<1x1xf32>
    %cst_194 = arith.constant 3.200000e+01 : f32
    %413 = vector.broadcast %cst_194 : f32 to vector<1x1xf32>
    %414 = arith.divf %412, %413 : vector<1x1xf32>
    %cst_195 = arith.constant 9.99999997E-7 : f32
    %415 = vector.broadcast %cst_195 : f32 to vector<1x1xf32>
    %416 = arith.addf %414, %415 : vector<1x1xf32>
    %417 = math.rsqrt %416 : vector<1x1xf32>
    %418 = vector.broadcast %417 : vector<1x1xf32> to vector<1x32xf32>
    %419 = arith.mulf %409, %418 : vector<1x32xf32>
    %420 = arith.mulf %419, %402 : vector<1x32xf32>
    %421 = arith.addf %420, %403 : vector<1x32xf32>
    %c0_196 = arith.constant 0 : index
    %c0_197 = arith.constant 0 : index
    %c0_198 = arith.constant 0 : index
    %422 = vector.load %arg20[%c0_196, %c0_197, %c0_198] : memref<1x1x32xf32, #tpu.memory_space<vmem>>, vector<1x1x32xf32>
    %423 = vector.shape_cast %422 : vector<1x1x32xf32> to vector<1x32xf32>
    %424 = vector.shape_cast %421 : vector<1x32xf32> to vector<1x1x32xf32>
    tpu.vector_store %arg20[%c0_196, %c0_197, %c0_198], %424 {strides = array<i32>} : memref<1x1x32xf32, #tpu.memory_space<vmem>>, vector<1x1x32xf32>,
    return
  }
  func.func @transform_0(%arg0: i32) -> (i32, i32, i32) {
    %c0_i32 = arith.constant 0 : i32
    %c0_i32_0 = arith.constant 0 : i32
    %c0_i32_1 = arith.constant 0 : i32
    return %arg0, %c0_i32, %c0_i32_0 : i32, i32, i32
  }
  func.func @transform_1(%arg0: i32) -> (i32, i32) {
    %c0_i32 = arith.constant 0 : i32
    %c0_i32_0 = arith.constant 0 : i32
    %c0_i32_1 = arith.constant 0 : i32
    return %c0_i32, %c0_i32_0 : i32, i32
  }
  func.func @transform_2(%arg0: i32) -> (i32, i32) {
    %c0_i32 = arith.constant 0 : i32
    %c0_i32_0 = arith.constant 0 : i32
    %c0_i32_1 = arith.constant 0 : i32
    return %c0_i32, %c0_i32_0 : i32, i32
  }
  func.func @transform_3(%arg0: i32) -> (i32, i32) {
    %c0_i32 = arith.constant 0 : i32
    %c0_i32_0 = arith.constant 0 : i32
    %c0_i32_1 = arith.constant 0 : i32
    return %c0_i32, %c0_i32_0 : i32, i32
  }
  func.func @transform_4(%arg0: i32) -> (i32, i32) {
    %c0_i32 = arith.constant 0 : i32
    %c0_i32_0 = arith.constant 0 : i32
    %c0_i32_1 = arith.constant 0 : i32
    return %c0_i32, %c0_i32_0 : i32, i32
  }
  func.func @transform_5(%arg0: i32) -> (i32, i32, i32) {
    %c0_i32 = arith.constant 0 : i32
    %c0_i32_0 = arith.constant 0 : i32
    %c0_i32_1 = arith.constant 0 : i32
    %c0_i32_2 = arith.constant 0 : i32
    return %c0_i32, %c0_i32_0, %c0_i32_1 : i32, i32, i32
  }
  func.func @transform_6(%arg0: i32) -> (i32, i32, i32) {
    %c0_i32 = arith.constant 0 : i32
    %c0_i32_0 = arith.constant 0 : i32
    %c0_i32_1 = arith.constant 0 : i32
    %c0_i32_2 = arith.constant 0 : i32
    return %c0_i32, %c0_i32_0, %c0_i32_1 : i32, i32, i32
  }
  func.func @transform_7(%arg0: i32) -> (i32, i32, i32) {
    %c0_i32 = arith.constant 0 : i32
    %c0_i32_0 = arith.constant 0 : i32
    %c0_i32_1 = arith.constant 0 : i32
    %c0_i32_2 = arith.constant 0 : i32
    return %c0_i32, %c0_i32_0, %c0_i32_1 : i32, i32, i32
  }
  func.func @transform_8(%arg0: i32) -> (i32, i32, i32) {
    %c0_i32 = arith.constant 0 : i32
    %c0_i32_0 = arith.constant 0 : i32
    %c0_i32_1 = arith.constant 0 : i32
    %c0_i32_2 = arith.constant 0 : i32
    return %c0_i32, %c0_i32_0, %c0_i32_1 : i32, i32, i32
  }
  func.func @transform_9(%arg0: i32) -> (i32, i32, i32) {
    %c0_i32 = arith.constant 0 : i32
    %c0_i32_0 = arith.constant 0 : i32
    %c0_i32_1 = arith.constant 0 : i32
    %c0_i32_2 = arith.constant 0 : i32
    return %c0_i32, %c0_i32_0, %c0_i32_1 : i32, i32, i32
  }
  func.func @transform_10(%arg0: i32) -> (i32, i32, i32) {
    %c0_i32 = arith.constant 0 : i32
    %c0_i32_0 = arith.constant 0 : i32
    %c0_i32_1 = arith.constant 0 : i32
    %c0_i32_2 = arith.constant 0 : i32
    return %c0_i32, %c0_i32_0, %c0_i32_1 : i32, i32, i32
  }
  func.func @transform_11(%arg0: i32) -> (i32, i32, i32) {
    %c0_i32 = arith.constant 0 : i32
    %c0_i32_0 = arith.constant 0 : i32
    %c0_i32_1 = arith.constant 0 : i32
    %c0_i32_2 = arith.constant 0 : i32
    return %c0_i32, %c0_i32_0, %c0_i32_1 : i32, i32, i32
  }
  func.func @transform_12(%arg0: i32) -> (i32, i32, i32) {
    %c0_i32 = arith.constant 0 : i32
    %c0_i32_0 = arith.constant 0 : i32
    %c0_i32_1 = arith.constant 0 : i32
    %c0_i32_2 = arith.constant 0 : i32
    return %c0_i32, %c0_i32_0, %c0_i32_1 : i32, i32, i32
  }
  func.func @transform_13(%arg0: i32) -> (i32, i32, i32) {
    %c0_i32 = arith.constant 0 : i32
    %c0_i32_0 = arith.constant 0 : i32
    %c0_i32_1 = arith.constant 0 : i32
    %c0_i32_2 = arith.constant 0 : i32
    return %c0_i32, %c0_i32_0, %c0_i32_1 : i32, i32, i32
  }
  func.func @transform_14(%arg0: i32) -> (i32, i32, i32) {
    %c0_i32 = arith.constant 0 : i32
    %c0_i32_0 = arith.constant 0 : i32
    %c0_i32_1 = arith.constant 0 : i32
    %c0_i32_2 = arith.constant 0 : i32
    return %c0_i32, %c0_i32_0, %c0_i32_1 : i32, i32, i32
  }
  func.func @transform_15(%arg0: i32) -> (i32, i32, i32) {
    %c0_i32 = arith.constant 0 : i32
    %c0_i32_0 = arith.constant 0 : i32
    %c0_i32_1 = arith.constant 0 : i32
    %c0_i32_2 = arith.constant 0 : i32
    return %c0_i32, %c0_i32_0, %c0_i32_1 : i32, i32, i32
  }
  func.func @transform_16(%arg0: i32) -> (i32, i32, i32) {
    %c0_i32 = arith.constant 0 : i32
    %c0_i32_0 = arith.constant 0 : i32
    %c0_i32_1 = arith.constant 0 : i32
    %c0_i32_2 = arith.constant 0 : i32
    return %c0_i32, %c0_i32_0, %c0_i32_1 : i32, i32, i32
  }
  func.func @transform_17(%arg0: i32) -> (i32, i32) {
    %c0_i32 = arith.constant 0 : i32
    %c0_i32_0 = arith.constant 0 : i32
    %c0_i32_1 = arith.constant 0 : i32
    return %c0_i32, %c0_i32_0 : i32, i32
  }
  func.func @transform_18(%arg0: i32) -> (i32, i32) {
    %c0_i32 = arith.constant 0 : i32
    %c0_i32_0 = arith.constant 0 : i32
    %c0_i32_1 = arith.constant 0 : i32
    return %c0_i32, %c0_i32_0 : i32, i32
  }
  func.func @transform_19(%arg0: i32) -> (i32, i32, i32) {
    %c0_i32 = arith.constant 0 : i32
    %c0_i32_0 = arith.constant 0 : i32
    %c0_i32_1 = arith.constant 0 : i32
    return %arg0, %c0_i32, %c0_i32_0 : i32, i32, i32
  }
}

</mosaic_0001>

<llo_original>
// kernel: dino_forward.1
$region0: #{dino_forward.1}
  #allocation0 [shape = 'u32[]', space=smem, size = 0x4, offset = 0x4, fixed_abs, tag = 'smem constant byte address 0x4 - core index']
  #allocation1 [shape = 'u32[144,128]{1,0:T(1,128)}', space=vmem, size = 0x12000, scoped, tag = 'internal scratch']
  #allocation2 [shape = 'f32[5,32]{1,0:T(8,128)}', space=vmem, size = 0x1000, scoped, tag = 'scratch operand']
  %s0 = inlined_call_operand.vmem [shape: f32[2,4,768], index: 0, kind: input, shape index: {}]
  %s1 = inlined_call_operand.vmem [shape: f32[768,32], index: 1, kind: input, shape index: {}]
  %s2 = inlined_call_operand.vmem [shape: f32[1,32], index: 2, kind: input, shape index: {}]
  %s3 = inlined_call_operand.vmem [shape: f32[1,32], index: 3, kind: input, shape index: {}]
  %s4 = inlined_call_operand.vmem [shape: f32[4,32], index: 4, kind: input, shape index: {}]
  %s5 = inlined_call_operand.vmem [shape: f32[2,1,32], index: 5, kind: input, shape index: {}]
  %s6 = inlined_call_operand.vmem [shape: f32[2,1,32], index: 6, kind: input, shape index: {}]
  %s7 = inlined_call_operand.vmem [shape: f32[2,32,96], index: 7, kind: input, shape index: {}]
  %s8 = inlined_call_operand.vmem [shape: f32[2,1,96], index: 8, kind: input, shape index: {}]
  %s9 = inlined_call_operand.vmem [shape: f32[2,32,32], index: 9, kind: input, shape index: {}]
  %s10 = inlined_call_operand.vmem [shape: f32[2,1,32], index: 10, kind: input, shape index: {}]
  %s11 = inlined_call_operand.vmem [shape: f32[2,1,32], index: 11, kind: input, shape index: {}]
  %s12 = inlined_call_operand.vmem [shape: f32[2,1,32], index: 12, kind: input, shape index: {}]
  %s13 = inlined_call_operand.vmem [shape: f32[2,32,64], index: 13, kind: input, shape index: {}]
  %s14 = inlined_call_operand.vmem [shape: f32[2,1,64], index: 14, kind: input, shape index: {}]
  %s15 = inlined_call_operand.vmem [shape: f32[2,64,32], index: 15, kind: input, shape index: {}]
  %s16 = inlined_call_operand.vmem [shape: f32[2,1,32], index: 16, kind: input, shape index: {}]
  %s17 = inlined_call_operand.vmem [shape: f32[1,32], index: 17, kind: input, shape index: {}]
  %s18 = inlined_call_operand.vmem [shape: f32[1,32], index: 18, kind: input, shape index: {}]
  %s19 = inlined_call_operand.hbm [shape: f32[2,1,32], index: 19, kind: output, shape index: {}]
  %s20 = sld [smem:[#allocation0]]
  $region109: #{dino_forward.1} parent=0
    _
  %s22 = ssub.s32 1, %s20
  %s23 = scalar_select 0, %s22, %s20
  $region1: #{dino_forward.1} parent=0
    #allocation3 [shape = 'u8[1024]{0}', space=vmem, size = 0x400, scoped, tag = 'output window, operand 0']
    #allocation4 [shape = 's32[2]{0}', space=sflag, size = 0x8, scoped, tag = 'scoped memory for dino_forward.1']
    %24 = vsyncpa [#allocation4], 0
    %s25 = scalar_lea.sflag [#allocation4], 1
    %26 = vsyncpa %s25, 0
    loop: start=0, step=1, limit=4
    $region2: #{dino_forward.1} parent=1 // loop_pre_header
      _
    $region3: #{dino_forward.1} parent=1 // loop_header
      %s28 = sphi 0, %s32
      %p29 = scmp.ge.s32.totalorder %s28, 4
      %s38 = sphi 0, %s40
      %s41 = sphi 0, %s38
      %s42 = sphi 0, %s41
      %s58 = sphi 0, %s42
      %s62 = sphi 0, %s62
      %s64 = sphi 0, %s62
      %s65 = sphi 0, %s64
      %s79 = sphi 0, %s65
      %s83 = sphi 0, %s83
      %s85 = sphi 0, %s83
      %s86 = sphi 0, %s85
      %s100 = sphi 0, %s86
      %s104 = sphi 0, %s104
      %s106 = sphi 0, %s104
      %s107 = sphi 0, %s106
      %s121 = sphi 0, %s107
      %s125 = sphi 0, %s125
      %s127 = sphi 0, %s125
      %s128 = sphi 0, %s127
      %s142 = sphi 0, %s128
      %s146 = sphi 0, %s146
      %s148 = sphi 0, %s146
      %s149 = sphi 0, %s148
      %s163 = sphi 0, %s149
      %s167 = sphi 0, %s167
      %s169 = sphi 0, %s167
      %s170 = sphi 0, %s169
      %s184 = sphi 0, %s170
      %s188 = sphi 0, %s188
      %s190 = sphi 0, %s188
      %s191 = sphi 0, %s190
      %s205 = sphi 0, %s191
      %s209 = sphi 0, %s209
      %s211 = sphi 0, %s209
      %s212 = sphi 0, %s211
      %s226 = sphi 0, %s212
      %s230 = sphi 0, %s230
      %s232 = sphi 0, %s230
      %s233 = sphi 0, %s232
      %s247 = sphi 0, %s233
      %s251 = sphi 0, %s251
      %s253 = sphi 0, %s251
      %s254 = sphi 0, %s253
      %s268 = sphi 0, %s254
      %s272 = sphi 0, %s272
      %s274 = sphi 0, %s272
      %s275 = sphi 0, %s274
      %s289 = sphi 0, %s275
      %s293 = sphi 0, %s293
      %s295 = sphi 0, %s293
      %s296 = sphi 0, %s295
      %s310 = sphi 0, %s296
      %s314 = sphi 0, %s314
      %s316 = sphi 0, %s314
      %s317 = sphi 0, %s316
      %s331 = sphi 0, %s317
      %s335 = sphi 0, %s335
      %s337 = sphi 0, %s335
      %s338 = sphi 0, %s337
      %s352 = sphi 0, %s338
      %s356 = sphi 0, %s356
      %s358 = sphi 0, %s356
      %s359 = sphi 0, %s358
      %s373 = sphi 0, %s359
      %s377 = sphi 0, %s377
      %s379 = sphi 0, %s377
      %s380 = sphi 0, %s379
      %s394 = sphi 0, %s380
      %s398 = sphi 0, %s398
      %s400 = sphi 0, %s398
      %s401 = sphi 0, %s400
      %s415 = sphi 0, %s401
      %s419 = sphi 0, %s419
      %s421 = sphi 0, %s419
      %s422 = sphi 0, %s421
      %s436 = sphi 0, %s422
      %s442 = sphi 0, %s444
      %s445 = sphi 0, %s442
      %s446 = sphi 0, %s445
      %s462 = sphi 0, %s446
    $region4: #{dino_forward.1} parent=1 // loop_header_branch
      %31 = sbr.rel (%p29) target = $region8
    $region5: #{dino_forward.1} parent=1 // loop_body
      %s33 = ssub.s32 %s28, 1
      %s34 = ssub.s32 %s28, 2
      %s35 = sadd.s32 %s28, 1
      %s36 = ssub.s32 %s28, %s35
      %p37 = scmp.eq.s32.totalorder %s36, 0
      %s39 = sadd.s32 %s38, 1
      %s40 = scalar_select %p37, %s38, %s39
      %p43 = pneg %p37
      %p44 = scmp.eq.s32.totalorder %s28, 1
      %p45 = por %p43, %p44
      %p46 = scmp.ne.s32.totalorder %s38, %s41
      %p47 = scmp.eq.s32.totalorder %s28, 0
      %p48 = por %p46, %p47
      %p49 = scmp.ne.s32.totalorder %s38, %s41
      %p50 = scmp.eq.s32.totalorder %s33, 1
      %p51 = por %p49, %p50
      %p52 = scmp.ne.s32.totalorder %s41, %s42
      %p53 = scmp.eq.s32.totalorder %s33, 0
      %p54 = por %p52, %p53
      %p55 = scmp.ne.s32.totalorder %s41, %s42
      %p56 = scmp.eq.s32.totalorder %s34, 1
      %p57 = por %p55, %p56
      %p59 = scmp.ne.s32.totalorder %s42, %s58
      %p60 = scmp.eq.s32.totalorder %s34, 0
      %p61 = por %p59, %p60
      %s63 = sadd.s32 %s62, 1
      %p66 = scmp.eq.s32.totalorder %s28, 1
      %p67 = scmp.ne.s32.totalorder %s62, %s64
      %p68 = scmp.eq.s32.totalorder %s28, 0
      %p69 = por %p67, %p68
      %p70 = scmp.ne.s32.totalorder %s62, %s64
      %p71 = scmp.eq.s32.totalorder %s33, 1
      %p72 = por %p70, %p71
      %p73 = scmp.ne.s32.totalorder %s64, %s65
      %p74 = scmp.eq.s32.totalorder %s33, 0
      %p75 = por %p73, %p74
      %p76 = scmp.ne.s32.totalorder %s64, %s65
      %p77 = scmp.eq.s32.totalorder %s34, 1
      %p78 = por %p76, %p77
      %p80 = scmp.ne.s32.totalorder %s65, %s79
      %p81 = scmp.eq.s32.totalorder %s34, 0
      %p82 = por %p80, %p81
      %s84 = sadd.s32 %s83, 1
      %p87 = scmp.eq.s32.totalorder %s28, 1
      %p88 = scmp.ne.s32.totalorder %s83, %s85
      %p89 = scmp.eq.s32.totalorder %s28, 0
      %p90 = por %p88, %p89
      %p91 = scmp.ne.s32.totalorder %s83, %s85
      %p92 = scmp.eq.s32.totalorder %s33, 1
      %p93 = por %p91, %p92
      %p94 = scmp.ne.s32.totalorder %s85, %s86
      %p95 = scmp.eq.s32.totalorder %s33, 0
      %p96 = por %p94, %p95
      %p97 = scmp.ne.s32.totalorder %s85, %s86
      %p98 = scmp.eq.s32.totalorder %s34, 1
      %p99 = por %p97, %p98
      %p101 = scmp.ne.s32.totalorder %s86, %s100
      %p102 = scmp.eq.s32.totalorder %s34, 0
      %p103 = por %p101, %p102
      %s105 = sadd.s32 %s104, 1
      %p108 = scmp.eq.s32.totalorder %s28, 1
      %p109 = scmp.ne.s32.totalorder %s104, %s106
      %p110 = scmp.eq.s32.totalorder %s28, 0
      %p111 = por %p109, %p110
      %p112 = scmp.ne.s32.totalorder %s104, %s106
      %p113 = scmp.eq.s32.totalorder %s33, 1
      %p114 = por %p112, %p113
      %p115 = scmp.ne.s32.totalorder %s106, %s107
      %p116 = scmp.eq.s32.totalorder %s33, 0
      %p117 = por %p115, %p116
      %p118 = scmp.ne.s32.totalorder %s106, %s107
      %p119 = scmp.eq.s32.totalorder %s34, 1
      %p120 = por %p118, %p119
      %p122 = scmp.ne.s32.totalorder %s107, %s121
      %p123 = scmp.eq.s32.totalorder %s34, 0
      %p124 = por %p122, %p123
      %s126 = sadd.s32 %s125, 1
      %p129 = scmp.eq.s32.totalorder %s28, 1
      %p130 = scmp.ne.s32.totalorder %s125, %s127
      %p131 = scmp.eq.s32.totalorder %s28, 0
      %p132 = por %p130, %p131
      %p133 = scmp.ne.s32.totalorder %s125, %s127
      %p134 = scmp.eq.s32.totalorder %s33, 1
      %p135 = por %p133, %p134
      %p136 = scmp.ne.s32.totalorder %s127, %s128
      %p137 = scmp.eq.s32.totalorder %s33, 0
      %p138 = por %p136, %p137
      %p139 = scmp.ne.s32.totalorder %s127, %s128
      %p140 = scmp.eq.s32.totalorder %s34, 1
      %p141 = por %p139, %p140
      %p143 = scmp.ne.s32.totalorder %s128, %s142
      %p144 = scmp.eq.s32.totalorder %s34, 0
      %p145 = por %p143, %p144
      %s147 = sadd.s32 %s146, 1
      %p150 = scmp.eq.s32.totalorder %s28, 1
      %p151 = scmp.ne.s32.totalorder %s146, %s148
      %p152 = scmp.eq.s32.totalorder %s28, 0
      %p153 = por %p151, %p152
      %p154 = scmp.ne.s32.totalorder %s146, %s148
      %p155 = scmp.eq.s32.totalorder %s33, 1
      %p156 = por %p154, %p155
      %p157 = scmp.ne.s32.totalorder %s148, %s149
      %p158 = scmp.eq.s32.totalorder %s33, 0
      %p159 = por %p157, %p158
      %p160 = scmp.ne.s32.totalorder %s148, %s149
      %p161 = scmp.eq.s32.totalorder %s34, 1
      %p162 = por %p160, %p161
      %p164 = scmp.ne.s32.totalorder %s149, %s163
      %p165 = scmp.eq.s32.totalorder %s34, 0
      %p166 = por %p164, %p165
      %s168 = sadd.s32 %s167, 1
      %p171 = scmp.eq.s32.totalorder %s28, 1
      %p172 = scmp.ne.s32.totalorder %s167, %s169
      %p173 = scmp.eq.s32.totalorder %s28, 0
      %p174 = por %p172, %p173
      %p175 = scmp.ne.s32.totalorder %s167, %s169
      %p176 = scmp.eq.s32.totalorder %s33, 1
      %p177 = por %p175, %p176
      %p178 = scmp.ne.s32.totalorder %s169, %s170
      %p179 = scmp.eq.s32.totalorder %s33, 0
      %p180 = por %p178, %p179
      %p181 = scmp.ne.s32.totalorder %s169, %s170
      %p182 = scmp.eq.s32.totalorder %s34, 1
      %p183 = por %p181, %p182
      %p185 = scmp.ne.s32.totalorder %s170, %s184
      %p186 = scmp.eq.s32.totalorder %s34, 0
      %p187 = por %p185, %p186
      %s189 = sadd.s32 %s188, 1
      %p192 = scmp.eq.s32.totalorder %s28, 1
      %p193 = scmp.ne.s32.totalorder %s188, %s190
      %p194 = scmp.eq.s32.totalorder %s28, 0
      %p195 = por %p193, %p194
      %p196 = scmp.ne.s32.totalorder %s188, %s190
      %p197 = scmp.eq.s32.totalorder %s33, 1
      %p198 = por %p196, %p197
      %p199 = scmp.ne.s32.totalorder %s190, %s191
      %p200 = scmp.eq.s32.totalorder %s33, 0
      %p201 = por %p199, %p200
      %p202 = scmp.ne.s32.totalorder %s190, %s191
      %p203 = scmp.eq.s32.totalorder %s34, 1
      %p204 = por %p202, %p203
      %p206 = scmp.ne.s32.totalorder %s191, %s205
      %p207 = scmp.eq.s32.totalorder %s34, 0
      %p208 = por %p206, %p207
      %s210 = sadd.s32 %s209, 1
      %p213 = scmp.eq.s32.totalorder %s28, 1
      %p214 = scmp.ne.s32.totalorder %s209, %s211
      %p215 = scmp.eq.s32.totalorder %s28, 0
      %p216 = por %p214, %p215
      %p217 = scmp.ne.s32.totalorder %s209, %s211
      %p218 = scmp.eq.s32.totalorder %s33, 1
      %p219 = por %p217, %p218
      %p220 = scmp.ne.s32.totalorder %s211, %s212
      %p221 = scmp.eq.s32.totalorder %s33, 0
      %p222 = por %p220, %p221
      %p223 = scmp.ne.s32.totalorder %s211, %s212
      %p224 = scmp.eq.s32.totalorder %s34, 1
      %p225 = por %p223, %p224
      %p227 = scmp.ne.s32.totalorder %s212, %s226
      %p228 = scmp.eq.s32.totalorder %s34, 0
      %p229 = por %p227, %p228
      %s231 = sadd.s32 %s230, 1
      %p234 = scmp.eq.s32.totalorder %s28, 1
      %p235 = scmp.ne.s32.totalorder %s230, %s232
      %p236 = scmp.eq.s32.totalorder %s28, 0
      %p237 = por %p235, %p236
      %p238 = scmp.ne.s32.totalorder %s230, %s232
      %p239 = scmp.eq.s32.totalorder %s33, 1
      %p240 = por %p238, %p239
      %p241 = scmp.ne.s32.totalorder %s232, %s233
      %p242 = scmp.eq.s32.totalorder %s33, 0
      %p243 = por %p241, %p242
      %p244 = scmp.ne.s32.totalorder %s232, %s233
      %p245 = scmp.eq.s32.totalorder %s34, 1
      %p246 = por %p244, %p245
      %p248 = scmp.ne.s32.totalorder %s233, %s247
      %p249 = scmp.eq.s32.totalorder %s34, 0
      %p250 = por %p248, %p249
      %s252 = sadd.s32 %s251, 1
      %p255 = scmp.eq.s32.totalorder %s28, 1
      %p256 = scmp.ne.s32.totalorder %s251, %s253
      %p257 = scmp.eq.s32.totalorder %s28, 0
      %p258 = por %p256, %p257
      %p259 = scmp.ne.s32.totalorder %s251, %s253
      %p260 = scmp.eq.s32.totalorder %s33, 1
      %p261 = por %p259, %p260
      %p262 = scmp.ne.s32.totalorder %s253, %s254
      %p263 = scmp.eq.s32.totalorder %s33, 0
      %p264 = por %p262, %p263
      %p265 = scmp.ne.s32.totalorder %s253, %s254
      %p266 = scmp.eq.s32.totalorder %s34, 1
      %p267 = por %p265, %p266
      %p269 = scmp.ne.s32.totalorder %s254, %s268
      %p270 = scmp.eq.s32.totalorder %s34, 0
      %p271 = por %p269, %p270
      %s273 = sadd.s32 %s272, 1
      %p276 = scmp.eq.s32.totalorder %s28, 1
      %p277 = scmp.ne.s32.totalorder %s272, %s274
      %p278 = scmp.eq.s32.totalorder %s28, 0
      %p279 = por %p277, %p278
      %p280 = scmp.ne.s32.totalorder %s272, %s274
      %p281 = scmp.eq.s32.totalorder %s33, 1
      %p282 = por %p280, %p281
      %p283 = scmp.ne.s32.totalorder %s274, %s275
      %p284 = scmp.eq.s32.totalorder %s33, 0
      %p285 = por %p283, %p284
      %p286 = scmp.ne.s32.totalorder %s274, %s275
      %p287 = scmp.eq.s32.totalorder %s34, 1
      %p288 = por %p286, %p287
      %p290 = scmp.ne.s32.totalorder %s275, %s289
      %p291 = scmp.eq.s32.totalorder %s34, 0
      %p292 = por %p290, %p291
      %s294 = sadd.s32 %s293, 1
      %p297 = scmp.eq.s32.totalorder %s28, 1
      %p298 = scmp.ne.s32.totalorder %s293, %s295
      %p299 = scmp.eq.s32.totalorder %s28, 0
      %p300 = por %p298, %p299
      %p301 = scmp.ne.s32.totalorder %s293, %s295
      %p302 = scmp.eq.s32.totalorder %s33, 1
      %p303 = por %p301, %p302
      %p304 = scmp.ne.s32.totalorder %s295, %s296
      %p305 = scmp.eq.s32.totalorder %s33, 0
      %p306 = por %p304, %p305
      %p307 = scmp.ne.s32.totalorder %s295, %s296
      %p308 = scmp.eq.s32.totalorder %s34, 1
      %p309 = por %p307, %p308
      %p311 = scmp.ne.s32.totalorder %s296, %s310
      %p312 = scmp.eq.s32.totalorder %s34, 0
      %p313 = por %p311, %p312
      %s315 = sadd.s32 %s314, 1
      %p318 = scmp.eq.s32.totalorder %s28, 1
      %p319 = scmp.ne.s32.totalorder %s314, %s316
      %p320 = scmp.eq.s32.totalorder %s28, 0
      %p321 = por %p319, %p320
      %p322 = scmp.ne.s32.totalorder %s314, %s316
      %p323 = scmp.eq.s32.totalorder %s33, 1
      %p324 = por %p322, %p323
      %p325 = scmp.ne.s32.totalorder %s316, %s317
      %p326 = scmp.eq.s32.totalorder %s33, 0
      %p327 = por %p325, %p326
      %p328 = scmp.ne.s32.totalorder %s316, %s317
      %p329 = scmp.eq.s32.totalorder %s34, 1
      %p330 = por %p328, %p329
      %p332 = scmp.ne.s32.totalorder %s317, %s331
      %p333 = scmp.eq.s32.totalorder %s34, 0
      %p334 = por %p332, %p333
      %s336 = sadd.s32 %s335, 1
      %p339 = scmp.eq.s32.totalorder %s28, 1
      %p340 = scmp.ne.s32.totalorder %s335, %s337
      %p341 = scmp.eq.s32.totalorder %s28, 0
      %p342 = por %p340, %p341
      %p343 = scmp.ne.s32.totalorder %s335, %s337
      %p344 = scmp.eq.s32.totalorder %s33, 1
      %p345 = por %p343, %p344
      %p346 = scmp.ne.s32.totalorder %s337, %s338
      %p347 = scmp.eq.s32.totalorder %s33, 0
      %p348 = por %p346, %p347
      %p349 = scmp.ne.s32.totalorder %s337, %s338
      %p350 = scmp.eq.s32.totalorder %s34, 1
      %p351 = por %p349, %p350
      %p353 = scmp.ne.s32.totalorder %s338, %s352
      %p354 = scmp.eq.s32.totalorder %s34, 0
      %p355 = por %p353, %p354
      %s357 = sadd.s32 %s356, 1
      %p360 = scmp.eq.s32.totalorder %s28, 1
      %p361 = scmp.ne.s32.totalorder %s356, %s358
      %p362 = scmp.eq.s32.totalorder %s28, 0
      %p363 = por %p361, %p362
      %p364 = scmp.ne.s32.totalorder %s356, %s358
      %p365 = scmp.eq.s32.totalorder %s33, 1
      %p366 = por %p364, %p365
      %p367 = scmp.ne.s32.totalorder %s358, %s359
      %p368 = scmp.eq.s32.totalorder %s33, 0
      %p369 = por %p367, %p368
      %p370 = scmp.ne.s32.totalorder %s358, %s359
      %p371 = scmp.eq.s32.totalorder %s34, 1
      %p372 = por %p370, %p371
      %p374 = scmp.ne.s32.totalorder %s359, %s373
      %p375 = scmp.eq.s32.totalorder %s34, 0
      %p376 = por %p374, %p375
      %s378 = sadd.s32 %s377, 1
      %p381 = scmp.eq.s32.totalorder %s28, 1
      %p382 = scmp.ne.s32.totalorder %s377, %s379
      %p383 = scmp.eq.s32.totalorder %s28, 0
      %p384 = por %p382, %p383
      %p385 = scmp.ne.s32.totalorder %s377, %s379
      %p386 = scmp.eq.s32.totalorder %s33, 1
      %p387 = por %p385, %p386
      %p388 = scmp.ne.s32.totalorder %s379, %s380
      %p389 = scmp.eq.s32.totalorder %s33, 0
      %p390 = por %p388, %p389
      %p391 = scmp.ne.s32.totalorder %s379, %s380
      %p392 = scmp.eq.s32.totalorder %s34, 1
      %p393 = por %p391, %p392
      %p395 = scmp.ne.s32.totalorder %s380, %s394
      %p396 = scmp.eq.s32.totalorder %s34, 0
      %p397 = por %p395, %p396
      %s399 = sadd.s32 %s398, 1
      %p402 = scmp.eq.s32.totalorder %s28, 1
      %p403 = scmp.ne.s32.totalorder %s398, %s400
      %p404 = scmp.eq.s32.totalorder %s28, 0
      %p405 = por %p403, %p404
      %p406 = scmp.ne.s32.totalorder %s398, %s400
      %p407 = scmp.eq.s32.totalorder %s33, 1
      %p408 = por %p406, %p407
      %p409 = scmp.ne.s32.totalorder %s400, %s401
      %p410 = scmp.eq.s32.totalorder %s33, 0
      %p411 = por %p409, %p410
      %p412 = scmp.ne.s32.totalorder %s400, %s401
      %p413 = scmp.eq.s32.totalorder %s34, 1
      %p414 = por %p412, %p413
      %p416 = scmp.ne.s32.totalorder %s401, %s415
      %p417 = scmp.eq.s32.totalorder %s34, 0
      %p418 = por %p416, %p417
      %s420 = sadd.s32 %s419, 1
      %p423 = scmp.eq.s32.totalorder %s28, 1
      %p424 = scmp.ne.s32.totalorder %s419, %s421
      %p425 = scmp.eq.s32.totalorder %s28, 0
      %p426 = por %p424, %p425
      %p427 = scmp.ne.s32.totalorder %s419, %s421
      %p428 = scmp.eq.s32.totalorder %s33, 1
      %p429 = por %p427, %p428
      %p430 = scmp.ne.s32.totalorder %s421, %s422
      %p431 = scmp.eq.s32.totalorder %s33, 0
      %p432 = por %p430, %p431
      %p433 = scmp.ne.s32.totalorder %s421, %s422
      %p434 = scmp.eq.s32.totalorder %s34, 1
      %p435 = por %p433, %p434
      %p437 = scmp.ne.s32.totalorder %s422, %s436
      %p438 = scmp.eq.s32.totalorder %s34, 0
      %p439 = por %p437, %p438
      %s440 = ssub.s32 %s28, %s35
      %p441 = scmp.eq.s32.totalorder %s440, 0
      %s443 = sadd.s32 %s442, 1
      %s444 = scalar_select %p441, %s442, %s443
      %p447 = pneg %p441
      %p448 = scmp.eq.s32.totalorder %s28, 1
      %p449 = por %p447, %p448
      %p450 = scmp.ne.s32.totalorder %s442, %s445
      %p451 = scmp.eq.s32.totalorder %s28, 0
      %p452 = por %p450, %p451
      %p453 = scmp.ne.s32.totalorder %s442, %s445
      %p454 = scmp.eq.s32.totalorder %s33, 1
      %p455 = por %p453, %p454
      %p456 = scmp.ne.s32.totalorder %s445, %s446
      %p457 = scmp.eq.s32.totalorder %s33, 0
      %p458 = por %p456, %p457
      %p459 = scmp.ne.s32.totalorder %s445, %s446
      %p460 = scmp.eq.s32.totalorder %s34, 1
      %p461 = por %p459, %p460
      %p463 = scmp.ne.s32.totalorder %s446, %s462
      %p464 = scmp.eq.s32.totalorder %s34, 0
      %p465 = por %p463, %p464
      %p466 = scmp.le.s32.totalorder 1, %s28
      %p467 = scmp.lt.s32.totalorder %s28, 3
      %p468 = pnand %p466, %p467
      %p469 = pneg %p468
      // Predicated region
      $region9: #{dino_forward.1} parent=5 // pred_check
        _
      $region10: #{dino_forward.1} parent=5 // pred_check_branch
        %471 = sbr.rel (%p468) target = $region12
      $region11: #{dino_forward.1} parent=5 // pred_region
        %s472 = ssub.s32 %s28, 1
        // Predicated region
        $region13: #{dino_forward.1} parent=11 // pred_check
          %p473 = pneg %p75
        $region14: #{dino_forward.1} parent=11 // pred_check_branch
          %475 = sbr.rel (%p473) target = $region16
        $region15: #{dino_forward.1} parent=11 // pred_region
          _
        $region16: #{dino_forward.1} parent=11 // pred_fallthru
          _
        // Predicated region
        $region17: #{dino_forward.1} parent=11 // pred_check
          %p476 = pneg %p96
        $region18: #{dino_forward.1} parent=11 // pred_check_branch
          %478 = sbr.rel (%p476) target = $region20
        $region19: #{dino_forward.1} parent=11 // pred_region
          _
        $region20: #{dino_forward.1} parent=11 // pred_fallthru
          _
        // Predicated region
        $region21: #{dino_forward.1} parent=11 // pred_check
          %p479 = pneg %p117
        $region22: #{dino_forward.1} parent=11 // pred_check_branch
          %481 = sbr.rel (%p479) target = $region24
        $region23: #{dino_forward.1} parent=11 // pred_region
          _
        $region24: #{dino_forward.1} parent=11 // pred_fallthru
          _
        // Predicated region
        $region25: #{dino_forward.1} parent=11 // pred_check
          %p482 = pneg %p138
        $region26: #{dino_forward.1} parent=11 // pred_check_branch
          %484 = sbr.rel (%p482) target = $region28
        $region27: #{dino_forward.1} parent=11 // pred_region
          _
        $region28: #{dino_forward.1} parent=11 // pred_fallthru
          _
        // Predicated region
        $region29: #{dino_forward.1} parent=11 // pred_check
          %p485 = pneg %p159
        $region30: #{dino_forward.1} parent=11 // pred_check_branch
          %487 = sbr.rel (%p485) target = $region32
        $region31: #{dino_forward.1} parent=11 // pred_region
          _
        $region32: #{dino_forward.1} parent=11 // pred_fallthru
          _
        // Predicated region
        $region33: #{dino_forward.1} parent=11 // pred_check
          %p488 = pneg %p180
        $region34: #{dino_forward.1} parent=11 // pred_check_branch
          %490 = sbr.rel (%p488) target = $region36
        $region35: #{dino_forward.1} parent=11 // pred_region
          _
        $region36: #{dino_forward.1} parent=11 // pred_fallthru
          _
        // Predicated region
        $region37: #{dino_forward.1} parent=11 // pred_check
          %p491 = pneg %p201
        $region38: #{dino_forward.1} parent=11 // pred_check_branch
          %493 = sbr.rel (%p491) target = $region40
        $region39: #{dino_forward.1} parent=11 // pred_region
          _
        $region40: #{dino_forward.1} parent=11 // pred_fallthru
          _
        // Predicated region
        $region41: #{dino_forward.1} parent=11 // pred_check
          %p494 = pneg %p222
        $region42: #{dino_forward.1} parent=11 // pred_check_branch
          %496 = sbr.rel (%p494) target = $region44
        $region43: #{dino_forward.1} parent=11 // pred_region
          _
        $region44: #{dino_forward.1} parent=11 // pred_fallthru
          _
        // Predicated region
        $region45: #{dino_forward.1} parent=11 // pred_check
          %p497 = pneg %p243
        $region46: #{dino_forward.1} parent=11 // pred_check_branch
          %499 = sbr.rel (%p497) target = $region48
        $region47: #{dino_forward.1} parent=11 // pred_region
          _
        $region48: #{dino_forward.1} parent=11 // pred_fallthru
          _
        // Predicated region
        $region49: #{dino_forward.1} parent=11 // pred_check
          %p500 = pneg %p264
        $region50: #{dino_forward.1} parent=11 // pred_check_branch
          %502 = sbr.rel (%p500) target = $region52
        $region51: #{dino_forward.1} parent=11 // pred_region
          _
        $region52: #{dino_forward.1} parent=11 // pred_fallthru
          _
        // Predicated region
        $region53: #{dino_forward.1} parent=11 // pred_check
          %p503 = pneg %p285
        $region54: #{dino_forward.1} parent=11 // pred_check_branch
          %505 = sbr.rel (%p503) target = $region56
        $region55: #{dino_forward.1} parent=11 // pred_region
          _
        $region56: #{dino_forward.1} parent=11 // pred_fallthru
          _
        // Predicated region
        $region57: #{dino_forward.1} parent=11 // pred_check
          %p506 = pneg %p306
        $region58: #{dino_forward.1} parent=11 // pred_check_branch
          %508 = sbr.rel (%p506) target = $region60
        $region59: #{dino_forward.1} parent=11 // pred_region
          _
        $region60: #{dino_forward.1} parent=11 // pred_fallthru
          _
        // Predicated region
        $region61: #{dino_forward.1} parent=11 // pred_check
          %p509 = pneg %p327
        $region62: #{dino_forward.1} parent=11 // pred_check_branch
          %511 = sbr.rel (%p509) target = $region64
        $region63: #{dino_forward.1} parent=11 // pred_region
          _
        $region64: #{dino_forward.1} parent=11 // pred_fallthru
          _
        // Predicated region
        $region65: #{dino_forward.1} parent=11 // pred_check
          %p512 = pneg %p348
        $region66: #{dino_forward.1} parent=11 // pred_check_branch
          %514 = sbr.rel (%p512) target = $region68
        $region67: #{dino_forward.1} parent=11 // pred_region
          _
        $region68: #{dino_forward.1} parent=11 // pred_fallthru
          _
        // Predicated region
        $region69: #{dino_forward.1} parent=11 // pred_check
          %p515 = pneg %p369
        $region70: #{dino_forward.1} parent=11 // pred_check_branch
          %517 = sbr.rel (%p515) target = $region72
        $region71: #{dino_forward.1} parent=11 // pred_region
          _
        $region72: #{dino_forward.1} parent=11 // pred_fallthru
          _
        // Predicated region
        $region73: #{dino_forward.1} parent=11 // pred_check
          %p518 = pneg %p390
        $region74: #{dino_forward.1} parent=11 // pred_check_branch
          %520 = sbr.rel (%p518) target = $region76
        $region75: #{dino_forward.1} parent=11 // pred_region
          _
        $region76: #{dino_forward.1} parent=11 // pred_fallthru
          _
        // Predicated region
        $region77: #{dino_forward.1} parent=11 // pred_check
          %p521 = pneg %p411
        $region78: #{dino_forward.1} parent=11 // pred_check_branch
          %523 = sbr.rel (%p521) target = $region80
        $region79: #{dino_forward.1} parent=11 // pred_region
          _
        $region80: #{dino_forward.1} parent=11 // pred_fallthru
          _
        // Predicated region
        $region81: #{dino_forward.1} parent=11 // pred_check
          %p524 = pneg %p432
        $region82: #{dino_forward.1} parent=11 // pred_check_branch
          %526 = sbr.rel (%p524) target = $region84
        $region83: #{dino_forward.1} parent=11 // pred_region
          _
        $region84: #{dino_forward.1} parent=11 // pred_fallthru
          _
      $region12: #{dino_forward.1} parent=5 // pred_fallthru
        _
      %p527 = scmp.lt.s32.totalorder %s28, 2
      // Predicated region
      $region85: #{dino_forward.1} parent=5 // pred_check
        %p528 = pneg %p527
      $region86: #{dino_forward.1} parent=5 // pred_check_branch
        %530 = sbr.rel (%p528) target = $region88
      $region87: #{dino_forward.1} parent=5 // pred_region
        // Predicated region
        $region89: #{dino_forward.1} parent=87 // pred_check
          %p531 = pneg %p48
        $region90: #{dino_forward.1} parent=87 // pred_check_branch
          %533 = sbr.rel (%p531) target = $region92
        $region91: #{dino_forward.1} parent=87 // pred_region
          %p534 = scmp.lt.s32.totalorder %s28, 1
          %s535 = scalar_select %p534, %s28, 1
          %s536 = smul.addr %s535, 6
          %s537 = smul.addr %s536, 4
          %s538 = scalar_lea.vmem %s0, %s537
        $region92: #{dino_forward.1} parent=87 // pred_fallthru
          _
      $region88: #{dino_forward.1} parent=5 // pred_fallthru
        _
      %p539 = scmp.le.s32.totalorder 1, %s28
      %p540 = scmp.lt.s32.totalorder %s28, 3
      %p541 = pnand %p539, %p540
      %p542 = pneg %p541
      // Predicated region
      $region93: #{dino_forward.1} parent=5 // pred_check
        _
      $region94: #{dino_forward.1} parent=5 // pred_check_branch
        %544 = sbr.rel (%p541) target = $region96
      $region95: #{dino_forward.1} parent=5 // pred_region
        %s545 = ssub.s32 %s28, 1
        %p546 = scmp.lt.s32.totalorder %s33, 1
        %s547 = scalar_select %p546, %s33, 1
        %s548 = smul.addr %s547, 6
        %s549 = smul.addr %s548, 4
        %s550 = scalar_lea.vmem %s0, %s549
        %p551 = pneg %p54
        %p552 = pneg %p51
        %p553 = pneg %p75
        %p554 = pneg %p72
        %p555 = pneg %p96
        %p556 = pneg %p93
        %p557 = pneg %p117
        %p558 = pneg %p114
        %p559 = pneg %p138
        %p560 = pneg %p135
        %p561 = pneg %p159
        %p562 = pneg %p156
        %p563 = pneg %p180
        %p564 = pneg %p177
        %p565 = pneg %p201
        %p566 = pneg %p198
        %p567 = pneg %p222
        %p568 = pneg %p219
        %p569 = pneg %p243
        %p570 = pneg %p240
        %p571 = pneg %p264
        %p572 = pneg %p261
        %p573 = pneg %p285
        %p574 = pneg %p282
        %p575 = pneg %p306
        %p576 = pneg %p303
        %p577 = pneg %p327
        %p578 = pneg %p324
        %p579 = pneg %p348
        %p580 = pneg %p345
        %p581 = pneg %p369
        %p582 = pneg %p366
        %p583 = pneg %p390
        %p584 = pneg %p387
        %p585 = pneg %p411
        %p586 = pneg %p408
        %p587 = pneg %p432
        %p588 = pneg %p429
        %p589 = pneg %p458
        %p590 = pneg %p455
        %s591 = sand.u32 %s445, 1
        %s592 = scalar_lea.sflag [#allocation4], %s591
        %s593 = sand.u32 %s445, 1
        %s594 = scalar_lea.vmem [#allocation3], %s593
        %p595 = scmp.lt.s32.totalorder %s33, 1
        %s596 = scalar_select %p595, %s33, 1
        %s597 = smul.addr %s596, 6
        %s598 = smul.addr %s597, 4
        %s599 = scalar_lea.vmem %s0, %s598
        %v600 = vld [vmem:[%s599] sm:$0xff]
        %v601 = vld [vmem:[%s599 + $0x8] sm:$0xff]
        %v602 = vld [vmem:[%s599 + $0x10] sm:$0xff]
        %v603 = vld [vmem:[%s1] sm:$0xff]
        %v604 = vld [vmem:[%s1 + $0x8] sm:$0xff]
        %v605 = vld [vmem:[%s1 + $0x10] sm:$0xff]
        %v606 = vld [vmem:[%s1 + $0x18] sm:$0xff]
        %v607 = vld [vmem:[%s1 + $0x20] sm:$0xff]
        %v608 = vld [vmem:[%s1 + $0x28] sm:$0xff]
        %v609 = vld [vmem:[%s1 + $0x30] sm:$0xff]
        %v610 = vld [vmem:[%s1 + $0x38] sm:$0xff]
        %v611 = vld [vmem:[%s1 + $0x40] sm:$0xff]
        %v612 = vld [vmem:[%s1 + $0x48] sm:$0xff]
        %v613 = vld [vmem:[%s1 + $0x50] sm:$0xff]
        %v614 = vld [vmem:[%s1 + $0x58] sm:$0xff]
        %v615 = vld [vmem:[%s1 + $0x60] sm:$0xff]
        %v616 = vld [vmem:[%s1 + $0x68] sm:$0xff]
        %v617 = vld [vmem:[%s1 + $0x70] sm:$0xff]
        %v618 = vld [vmem:[%s1 + $0x78] sm:$0xff]
        %v619 = vld [vmem:[%s1 + $0x80] sm:$0xff]
        %v620 = vld [vmem:[%s1 + $0x88] sm:$0xff]
        %v621 = vld [vmem:[%s1 + $0x90] sm:$0xff]
        %v622 = vld [vmem:[%s1 + $0x98] sm:$0xff]
        %v623 = vld [vmem:[%s1 + $0xa0] sm:$0xff]
        %v624 = vld [vmem:[%s1 + $0xa8] sm:$0xff]
        %v625 = vld [vmem:[%s1 + $0xb0] sm:$0xff]
        %v626 = vld [vmem:[%s1 + $0xb8] sm:$0xff]
        %v627 = vld [vmem:[%s1 + $0xc0] sm:$0xff]
        %v628 = vld [vmem:[%s1 + $0xc8] sm:$0xff]
        %v629 = vld [vmem:[%s1 + $0xd0] sm:$0xff]
        %v630 = vld [vmem:[%s1 + $0xd8] sm:$0xff]
        %v631 = vld [vmem:[%s1 + $0xe0] sm:$0xff]
        %v632 = vld [vmem:[%s1 + $0xe8] sm:$0xff]
        %v633 = vld [vmem:[%s1 + $0xf0] sm:$0xff]
        %v634 = vld [vmem:[%s1 + $0xf8] sm:$0xff]
        %v635 = vld [vmem:[%s1 + $0x100] sm:$0xff]
        %v636 = vld [vmem:[%s1 + $0x108] sm:$0xff]
        %v637 = vld [vmem:[%s1 + $0x110] sm:$0xff]
        %v638 = vld [vmem:[%s1 + $0x118] sm:$0xff]
        %v639 = vld [vmem:[%s1 + $0x120] sm:$0xff]
        %v640 = vld [vmem:[%s1 + $0x128] sm:$0xff]
        %v641 = vld [vmem:[%s1 + $0x130] sm:$0xff]
        %v642 = vld [vmem:[%s1 + $0x138] sm:$0xff]
        %v643 = vld [vmem:[%s1 + $0x140] sm:$0xff]
        %v644 = vld [vmem:[%s1 + $0x148] sm:$0xff]
        %v645 = vld [vmem:[%s1 + $0x150] sm:$0xff]
        %v646 = vld [vmem:[%s1 + $0x158] sm:$0xff]
        %v647 = vld [vmem:[%s1 + $0x160] sm:$0xff]
        %v648 = vld [vmem:[%s1 + $0x168] sm:$0xff]
        %v649 = vld [vmem:[%s1 + $0x170] sm:$0xff]
        %v650 = vld [vmem:[%s1 + $0x178] sm:$0xff]
        %v651 = vld [vmem:[%s1 + $0x180] sm:$0xff]
        %v652 = vld [vmem:[%s1 + $0x188] sm:$0xff]
        %v653 = vld [vmem:[%s1 + $0x190] sm:$0xff]
        %v654 = vld [vmem:[%s1 + $0x198] sm:$0xff]
        %v655 = vld [vmem:[%s1 + $0x1a0] sm:$0xff]
        %v656 = vld [vmem:[%s1 + $0x1a8] sm:$0xff]
        %v657 = vld [vmem:[%s1 + $0x1b0] sm:$0xff]
        %v658 = vld [vmem:[%s1 + $0x1b8] sm:$0xff]
        %v659 = vld [vmem:[%s1 + $0x1c0] sm:$0xff]
        %v660 = vld [vmem:[%s1 + $0x1c8] sm:$0xff]
        %v661 = vld [vmem:[%s1 + $0x1d0] sm:$0xff]
        %v662 = vld [vmem:[%s1 + $0x1d8] sm:$0xff]
        %v663 = vld [vmem:[%s1 + $0x1e0] sm:$0xff]
        %v664 = vld [vmem:[%s1 + $0x1e8] sm:$0xff]
        %v665 = vld [vmem:[%s1 + $0x1f0] sm:$0xff]
        %v666 = vld [vmem:[%s1 + $0x1f8] sm:$0xff]
        %v667 = vld [vmem:[%s1 + $0x200] sm:$0xff]
        %v668 = vld [vmem:[%s1 + $0x208] sm:$0xff]
        %v669 = vld [vmem:[%s1 + $0x210] sm:$0xff]
        %v670 = vld [vmem:[%s1 + $0x218] sm:$0xff]
        %v671 = vld [vmem:[%s1 + $0x220] sm:$0xff]
        %v672 = vld [vmem:[%s1 + $0x228] sm:$0xff]
        %v673 = vld [vmem:[%s1 + $0x230] sm:$0xff]
        %v674 = vld [vmem:[%s1 + $0x238] sm:$0xff]
        %v675 = vld [vmem:[%s1 + $0x240] sm:$0xff]
        %v676 = vld [vmem:[%s1 + $0x248] sm:$0xff]
        %v677 = vld [vmem:[%s1 + $0x250] sm:$0xff]
        %v678 = vld [vmem:[%s1 + $0x258] sm:$0xff]
        %v679 = vld [vmem:[%s1 + $0x260] sm:$0xff]
        %v680 = vld [vmem:[%s1 + $0x268] sm:$0xff]
        %v681 = vld [vmem:[%s1 + $0x270] sm:$0xff]
        %v682 = vld [vmem:[%s1 + $0x278] sm:$0xff]
        %v683 = vld [vmem:[%s1 + $0x280] sm:$0xff]
        %v684 = vld [vmem:[%s1 + $0x288] sm:$0xff]
        %v685 = vld [vmem:[%s1 + $0x290] sm:$0xff]
        %v686 = vld [vmem:[%s1 + $0x298] sm:$0xff]
        %v687 = vld [vmem:[%s1 + $0x2a0] sm:$0xff]
        %v688 = vld [vmem:[%s1 + $0x2a8] sm:$0xff]
        %v689 = vld [vmem:[%s1 + $0x2b0] sm:$0xff]
        %v690 = vld [vmem:[%s1 + $0x2b8] sm:$0xff]
        %v691 = vld [vmem:[%s1 + $0x2c0] sm:$0xff]
        %v692 = vld [vmem:[%s1 + $0x2c8] sm:$0xff]
        %v693 = vld [vmem:[%s1 + $0x2d0] sm:$0xff]
        %v694 = vld [vmem:[%s1 + $0x2d8] sm:$0xff]
        %v695 = vld [vmem:[%s1 + $0x2e0] sm:$0xff]
        %v696 = vld [vmem:[%s1 + $0x2e8] sm:$0xff]
        %v697 = vld [vmem:[%s1 + $0x2f0] sm:$0xff]
        %v698 = vld [vmem:[%s1 + $0x2f8] sm:$0xff]
        %v699 = vld [vmem:[%s2] sm:$0x1]
        %v701 = vlaneseq
        %v702 = vshrl.u32 %v701, 7
        %v703 = vsub.s32 0, %v702
        %v704 = vrot.slane %v699, %v703
        %v709 = vcombine.high %v600, %v600
        %v710 = vcombine.high %v601, %v601
        %v711 = vcombine.high %v602, %v602
        %715 = vmatprep.subr.mxu0 0.0
        %716 = vmatpush1.msra.mxu0 %v603
        %717 = vmatprep.subr.mxu0 0.0
        %718 = vmatpush1.msra.mxu0 %v604
        %719 = vmatprep.subr.mxu0 0.0
        %720 = vmatpush1.msra.mxu0 %v605
        %721 = vmatprep.subr.mxu0 0.0
        %722 = vmatpush1.msra.mxu0 %v606
        %723 = vmatprep.subr.mxu0 0.0
        %724 = vmatpush1.msra.mxu0 %v607
        %725 = vmatprep.subr.mxu0 0.0
        %726 = vmatpush1.msra.mxu0 %v608
        %727 = vmatprep.subr.mxu0 0.0
        %728 = vmatpush1.msra.mxu0 %v609
        %729 = vmatprep.subr.mxu0 0.0
        %730 = vmatpush1.msra.mxu0 %v610
        %731 = vmatprep.subr.mxu0 0.0
        %732 = vmatpush1.msra.mxu0 %v611
        %733 = vmatprep.subr.mxu0 0.0
        %734 = vmatpush1.msra.mxu0 %v612
        %735 = vmatprep.subr.mxu0 0.0
        %736 = vmatpush1.msra.mxu0 %v613
        %737 = vmatprep.subr.mxu0 0.0
        %738 = vmatpush1.msra.mxu0 %v614
        %739 = vmatprep.subr.mxu0 0.0
        %740 = vmatpush1.msra.mxu0 %v615
        %741 = vmatprep.subr.mxu0 0.0
        %742 = vmatpush1.msra.mxu0 %v616
        %743 = vmatprep.subr.mxu0 0.0
        %744 = vmatpush1.msra.mxu0 %v617
        %745 = vmatprep.subr.mxu0 0.0
        %746 = vmatpush1.msra.mxu0 %v618
        %747 = vmatprep.subr.mxu0 0.0
        %748 = vmatpush1.msra.mxu0 %v619
        %749 = vmatprep.subr.mxu0 0.0
        %750 = vmatpush1.msra.mxu0 %v620
        %751 = vmatprep.subr.mxu0 0.0
        %752 = vmatpush1.msra.mxu0 %v621
        %753 = vmatprep.subr.mxu0 0.0
        %754 = vmatpush1.msra.mxu0 %v622
        %755 = vmatprep.subr.mxu0 0.0
        %756 = vmatpush1.msra.mxu0 %v623
        %757 = vmatprep.subr.mxu0 0.0
        %758 = vmatpush1.msra.mxu0 %v624
        %759 = vmatprep.subr.mxu0 0.0
        %760 = vmatpush1.msra.mxu0 %v625
        %761 = vmatprep.subr.mxu0 0.0
        %762 = vmatpush1.msra.mxu0 %v626
        %763 = vmatprep.subr.mxu0 0.0
        %764 = vmatpush1.msra.mxu0 %v627
        %765 = vmatprep.subr.mxu0 0.0
        %766 = vmatpush1.msra.mxu0 %v628
        %767 = vmatprep.subr.mxu0 0.0
        %768 = vmatpush1.msra.mxu0 %v629
        %769 = vmatprep.subr.mxu0 0.0
        %770 = vmatpush1.msra.mxu0 %v630
        %771 = vmatprep.subr.mxu0 0.0
        %772 = vmatpush1.msra.mxu0 %v631
        %773 = vmatprep.subr.mxu0 0.0
        %774 = vmatpush1.msra.mxu0 %v632
        %775 = vmatprep.subr.mxu0 0.0
        %776 = vmatpush1.msra.mxu0 %v633
        %777 = vmatprep.subr.mxu0 0.0
        %778 = vmatpush1.msra.mxu0 %v634
        %779 = vmatprep.mubr.f32.mxu0 %v709
        %780 = vmatmul.mubr.f32.gmra.mrb[0].mxu0 %v600
        %v781 = vpop.f32.mrb[0].mxu0
        %v782 = vadd.f32 %v704, %v781
        %v783 = vpop.f32.mrb[0].mxu0
        %784 = vdwg.mxu0
        %785 = vmatprep.subr.mxu0 0.0
        %786 = vmatpush1.msra.mxu0 %v635
        %787 = vmatprep.subr.mxu0 0.0
        %788 = vmatpush1.msra.mxu0 %v636
        %789 = vmatprep.subr.mxu0 0.0
        %790 = vmatpush1.msra.mxu0 %v637
        %791 = vmatprep.subr.mxu0 0.0
        %792 = vmatpush1.msra.mxu0 %v638
        %793 = vmatprep.subr.mxu0 0.0
        %794 = vmatpush1.msra.mxu0 %v639
        %795 = vmatprep.subr.mxu0 0.0
        %796 = vmatpush1.msra.mxu0 %v640
        %797 = vmatprep.subr.mxu0 0.0
        %798 = vmatpush1.msra.mxu0 %v641
        %799 = vmatprep.subr.mxu0 0.0
        %800 = vmatpush1.msra.mxu0 %v642
        %801 = vmatprep.subr.mxu0 0.0
        %802 = vmatpush1.msra.mxu0 %v643
        %803 = vmatprep.subr.mxu0 0.0
        %804 = vmatpush1.msra.mxu0 %v644
        %805 = vmatprep.subr.mxu0 0.0
        %806 = vmatpush1.msra.mxu0 %v645
        %807 = vmatprep.subr.mxu0 0.0
        %808 = vmatpush1.msra.mxu0 %v646
        %809 = vmatprep.subr.mxu0 0.0
        %810 = vmatpush1.msra.mxu0 %v647
        %811 = vmatprep.subr.mxu0 0.0
        %812 = vmatpush1.msra.mxu0 %v648
        %813 = vmatprep.subr.mxu0 0.0
        %814 = vmatpush1.msra.mxu0 %v649
        %815 = vmatprep.subr.mxu0 0.0
        %816 = vmatpush1.msra.mxu0 %v650
        %817 = vmatprep.subr.mxu0 0.0
        %818 = vmatpush1.msra.mxu0 %v651
        %819 = vmatprep.subr.mxu0 0.0
        %820 = vmatpush1.msra.mxu0 %v652
        %821 = vmatprep.subr.mxu0 0.0
        %822 = vmatpush1.msra.mxu0 %v653
        %823 = vmatprep.subr.mxu0 0.0
        %824 = vmatpush1.msra.mxu0 %v654
        %825 = vmatprep.subr.mxu0 0.0
        %826 = vmatpush1.msra.mxu0 %v655
        %827 = vmatprep.subr.mxu0 0.0
        %828 = vmatpush1.msra.mxu0 %v656
        %829 = vmatprep.subr.mxu0 0.0
        %830 = vmatpush1.msra.mxu0 %v657
        %831 = vmatprep.subr.mxu0 0.0
        %832 = vmatpush1.msra.mxu0 %v658
        %833 = vmatprep.subr.mxu0 0.0
        %834 = vmatpush1.msra.mxu0 %v659
        %835 = vmatprep.subr.mxu0 0.0
        %836 = vmatpush1.msra.mxu0 %v660
        %837 = vmatprep.subr.mxu0 0.0
        %838 = vmatpush1.msra.mxu0 %v661
        %839 = vmatprep.subr.mxu0 0.0
        %840 = vmatpush1.msra.mxu0 %v662
        %841 = vmatprep.subr.mxu0 0.0
        %842 = vmatpush1.msra.mxu0 %v663
        %843 = vmatprep.subr.mxu0 0.0
        %844 = vmatpush1.msra.mxu0 %v664
        %845 = vmatprep.subr.mxu0 0.0
        %846 = vmatpush1.msra.mxu0 %v665
        %847 = vmatprep.subr.mxu0 0.0
        %848 = vmatpush1.msra.mxu0 %v666
        %849 = vmatprep.mubr.f32.mxu0 %v710
        %850 = vmatmul.mubr.f32.gmra.mrb[0].mxu0 %v601
        %v851 = vpop.f32.mrb[0].mxu0
        %v852 = vadd.f32 %v782, %v851
        %v853 = vpop.f32.mrb[0].mxu0
        %854 = vdwg.mxu0
        %855 = vmatprep.subr.mxu0 0.0
        %856 = vmatpush1.msra.mxu0 %v667
        %857 = vmatprep.subr.mxu0 0.0
        %858 = vmatpush1.msra.mxu0 %v668
        %859 = vmatprep.subr.mxu0 0.0
        %860 = vmatpush1.msra.mxu0 %v669
        %861 = vmatprep.subr.mxu0 0.0
        %862 = vmatpush1.msra.mxu0 %v670
        %863 = vmatprep.subr.mxu0 0.0
        %864 = vmatpush1.msra.mxu0 %v671
        %865 = vmatprep.subr.mxu0 0.0
        %866 = vmatpush1.msra.mxu0 %v672
        %867 = vmatprep.subr.mxu0 0.0
        %868 = vmatpush1.msra.mxu0 %v673
        %869 = vmatprep.subr.mxu0 0.0
        %870 = vmatpush1.msra.mxu0 %v674
        %871 = vmatprep.subr.mxu0 0.0
        %872 = vmatpush1.msra.mxu0 %v675
        %873 = vmatprep.subr.mxu0 0.0
        %874 = vmatpush1.msra.mxu0 %v676
        %875 = vmatprep.subr.mxu0 0.0
        %876 = vmatpush1.msra.mxu0 %v677
        %877 = vmatprep.subr.mxu0 0.0
        %878 = vmatpush1.msra.mxu0 %v678
        %879 = vmatprep.subr.mxu0 0.0
        %880 = vmatpush1.msra.mxu0 %v679
        %881 = vmatprep.subr.mxu0 0.0
        %882 = vmatpush1.msra.mxu0 %v680
        %883 = vmatprep.subr.mxu0 0.0
        %884 = vmatpush1.msra.mxu0 %v681
        %885 = vmatprep.subr.mxu0 0.0
        %886 = vmatpush1.msra.mxu0 %v682
        %887 = vmatprep.subr.mxu0 0.0
        %888 = vmatpush1.msra.mxu0 %v683
        %889 = vmatprep.subr.mxu0 0.0
        %890 = vmatpush1.msra.mxu0 %v684
        %891 = vmatprep.subr.mxu0 0.0
        %892 = vmatpush1.msra.mxu0 %v685
        %893 = vmatprep.subr.mxu0 0.0
        %894 = vmatpush1.msra.mxu0 %v686
        %895 = vmatprep.subr.mxu0 0.0
        %896 = vmatpush1.msra.mxu0 %v687
        %897 = vmatprep.subr.mxu0 0.0
        %898 = vmatpush1.msra.mxu0 %v688
        %899 = vmatprep.subr.mxu0 0.0
        %900 = vmatpush1.msra.mxu0 %v689
        %901 = vmatprep.subr.mxu0 0.0
        %902 = vmatpush1.msra.mxu0 %v690
        %903 = vmatprep.subr.mxu0 0.0
        %904 = vmatpush1.msra.mxu0 %v691
        %905 = vmatprep.subr.mxu0 0.0
        %906 = vmatpush1.msra.mxu0 %v692
        %907 = vmatprep.subr.mxu0 0.0
        %908 = vmatpush1.msra.mxu0 %v693
        %909 = vmatprep.subr.mxu0 0.0
        %910 = vmatpush1.msra.mxu0 %v694
        %911 = vmatprep.subr.mxu0 0.0
        %912 = vmatpush1.msra.mxu0 %v695
        %913 = vmatprep.subr.mxu0 0.0
        %914 = vmatpush1.msra.mxu0 %v696
        %915 = vmatprep.subr.mxu0 0.0
        %916 = vmatpush1.msra.mxu0 %v697
        %917 = vmatprep.subr.mxu0 0.0
        %918 = vmatpush1.msra.mxu0 %v698
        %919 = vmatprep.mubr.f32.mxu0 %v711
        %920 = vmatmul.mubr.f32.gmra.mrb[0].mxu0 %v602
        %v921 = vpop.f32.mrb[0].mxu0
        %v922 = vadd.f32 %v852, %v921
        %v923 = vpop.f32.mrb[0].mxu0
        %924 = vdwg.mxu0
        %v925 = vld [vmem:[%s3] sm:$0x1]
        %vm926 = vcmask 253952
        %927 = vst.msk [vmem:[#allocation2] sm:$0x1] %vm926, %v925
        %v928 = vld [vmem:[%s4] sm:$0xf]
        %v929 = vadd.f32 %v922, %v928
        %vm930 = vcmask 257024
        %931 = vst.msk [vmem:[#allocation2 + $0x1] sm:$0xf] %vm930, %v929
        %v932 = vld [vmem:[#allocation2] sm:$0x1f]
        %v933 = vld [vmem:[%s5] sm:$0x1]
        %v934 = vld [vmem:[%s6] sm:$0x1]
        %vm935 = vcmask 258048
        %v936 = vsel %vm935, %v932, 0.0
        %937 = vadd.xlane.f32.xlu0 %v936
        %v938 = vpop.xlane.xlu0 %937
        %v939 = vrcp.pop 32.0
        %v940 = vmul.f32 %v938, %v939
        %v941 = vsub.f32 %v932, %v940
        %v942 = vmul.f32 %v941, %v941
        %v943 = vsel %vm935, %v942, 0.0
        %944 = vadd.xlane.f32.xlu0 %v943
        %v945 = vpop.xlane.xlu0 %944
        %v946 = vmul.f32 %v945, %v939
        %v947 = vadd.f32 %v946, 1e-06
        %v948 = vrsqrt.pop %v947
        %v949 = vmul.f32 %v941, %v948
        %v951 = vlaneseq
        %v952 = vshrl.u32 %v951, 7
        %v953 = vsub.s32 0, %v952
        %v954 = vrot.slane %v933, %v953
        %v956 = vmul.f32 %v949, %v954
        %v958 = vlaneseq
        %v959 = vshrl.u32 %v958, 7
        %v960 = vsub.s32 0, %v959
        %v961 = vrot.slane %v934, %v960
        %v963 = vadd.f32 %v956, %v961
        %v964 = vld [vmem:[%s7] sm:$0xff]
        %v965 = vld [vmem:[%s7 + $0x8] sm:$0xff]
        %v966 = vld [vmem:[%s7 + $0x10] sm:$0xff]
        %v967 = vld [vmem:[%s7 + $0x18] sm:$0xff]
        %v968 = vld [vmem:[%s8] sm:$0x1]
        %v970 = vlaneseq
        %v971 = vshrl.u32 %v970, 7
        %v972 = vsub.s32 0, %v971
        %v973 = vrot.slane %v968, %v972
        %vm975 = vcmask 261120
        %v977 = vsel %vm975, %v963, 0
        %979 = vmatprep.subr.mxu0 0.0
        %980 = vmatpush1.msra.mxu0 %v964
        %981 = vmatprep.subr.mxu0 0.0
        %982 = vmatpush1.msra.mxu0 %v965
        %983 = vmatprep.subr.mxu0 0.0
        %984 = vmatpush1.msra.mxu0 %v966
        %985 = vmatprep.subr.mxu0 0.0
        %986 = vmatpush1.msra.mxu0 %v967
        %987 = vmatprep.subr.mxu0 0.0
        %988 = vmatpush1.msra.mxu0 0.0
        %989 = vmatprep.subr.mxu0 0.0
        %990 = vmatpush1.msra.mxu0 0.0
        %991 = vmatprep.subr.mxu0 0.0
        %992 = vmatpush1.msra.mxu0 0.0
        %993 = vmatprep.subr.mxu0 0.0
        %994 = vmatpush1.msra.mxu0 0.0
        %995 = vmatprep.subr.mxu0 0.0
        %996 = vmatpush1.msra.mxu0 0.0
        %997 = vmatprep.subr.mxu0 0.0
        %998 = vmatpush1.msra.mxu0 0.0
        %999 = vmatprep.subr.mxu0 0.0
        %1000 = vmatpush1.msra.mxu0 0.0
        %1001 = vmatprep.subr.mxu0 0.0
        %1002 = vmatpush1.msra.mxu0 0.0
        %1003 = vmatprep.subr.mxu0 0.0
        %1004 = vmatpush1.msra.mxu0 0.0
        %1005 = vmatprep.subr.mxu0 0.0
        %1006 = vmatpush1.msra.mxu0 0.0
        %1007 = vmatprep.subr.mxu0 0.0
        %1008 = vmatpush1.msra.mxu0 0.0
        %1009 = vmatprep.subr.mxu0 0.0
        %1010 = vmatpush1.msra.mxu0 0.0
        %1011 = vmatprep.subr.mxu0 0.0
        %1012 = vmatpush1.msra.mxu0 0.0
        %1013 = vmatprep.subr.mxu0 0.0
        %1014 = vmatpush1.msra.mxu0 0.0
        %1015 = vmatprep.subr.mxu0 0.0
        %1016 = vmatpush1.msra.mxu0 0.0
        %1017 = vmatprep.subr.mxu0 0.0
        %1018 = vmatpush1.msra.mxu0 0.0
        %1019 = vmatprep.subr.mxu0 0.0
        %1020 = vmatpush1.msra.mxu0 0.0
        %1021 = vmatprep.subr.mxu0 0.0
        %1022 = vmatpush1.msra.mxu0 0.0
        %1023 = vmatprep.subr.mxu0 0.0
        %1024 = vmatpush1.msra.mxu0 0.0
        %1025 = vmatprep.subr.mxu0 0.0
        %1026 = vmatpush1.msra.mxu0 0.0
        %1027 = vmatprep.subr.mxu0 0.0
        %1028 = vmatpush1.msra.mxu0 0.0
        %1029 = vmatprep.subr.mxu0 0.0
        %1030 = vmatpush1.msra.mxu0 0.0
        %1031 = vmatprep.subr.mxu0 0.0
        %1032 = vmatpush1.msra.mxu0 0.0
        %1033 = vmatprep.subr.mxu0 0.0
        %1034 = vmatpush1.msra.mxu0 0.0
        %1035 = vmatprep.subr.mxu0 0.0
        %1036 = vmatpush1.msra.mxu0 0.0
        %1037 = vmatprep.subr.mxu0 0.0
        %1038 = vmatpush1.msra.mxu0 0.0
        %1039 = vmatprep.subr.mxu0 0.0
        %1040 = vmatpush1.msra.mxu0 0.0
        %1041 = vmatprep.subr.mxu0 0.0
        %1042 = vmatpush1.msra.mxu0 0.0
        %1043 = vmatprep.mubr.f32.mxu0 0.0
        %1044 = vmatmul.mubr.f32.gmra.mrb[0].mxu0 %v977
        %v1045 = vpop.f32.mrb[0].mxu0
        %v1046 = vadd.f32 %v973, %v1045
        %v1047 = vpop.f32.mrb[0].mxu0
        %1048 = vdwg.mxu0
        %v1049 = vmul.f32 %v1046, 0.35355338
        %v1050 = vld [vmem:[%s9] sm:$0xff]
        %v1051 = vld [vmem:[%s9 + $0x8] sm:$0xff]
        %v1052 = vld [vmem:[%s9 + $0x10] sm:$0xff]
        %v1053 = vld [vmem:[%s9 + $0x18] sm:$0xff]
        %1055 = vrot.lane.b32.xlu0 %v1046, 96
        %v1056 = vpop.permute.xlu0 %1055
        %vm1057 = vcmask 64512
        %v1059 = vsel %vm1057, %v1049, 0
        %v1061 = vsel %vm1057, %v1056, 0
        %1063 = vmatprep.subr.mxu0 0.0
        %1064 = vmatpush1.xpose.msra.mxu0 %v1061
        %1065 = vmatprep.subr.mxu0 0.0
        %1066 = vmatpush1.xpose.msra.mxu0 0.0
        %1067 = vmatprep.subr.mxu0 0.0
        %1068 = vmatpush1.xpose.msra.mxu0 0.0
        %1069 = vmatprep.subr.mxu0 0.0
        %1070 = vmatpush1.xpose.msra.mxu0 0.0
        %1071 = vmatprep.subr.mxu0 0.0
        %1072 = vmatpush1.xpose.msra.mxu0 0.0
        %1073 = vmatprep.subr.mxu0 0.0
        %1074 = vmatpush1.xpose.msra.mxu0 0.0
        %1075 = vmatprep.subr.mxu0 0.0
        %1076 = vmatpush1.xpose.msra.mxu0 0.0
        %1077 = vmatprep.subr.mxu0 0.0
        %1078 = vmatpush1.xpose.msra.mxu0 0.0
        %1079 = vmatprep.subr.mxu0 0.0
        %1080 = vmatpush1.xpose.msra.mxu0 0.0
        %1081 = vmatprep.subr.mxu0 0.0
        %1082 = vmatpush1.xpose.msra.mxu0 0.0
        %1083 = vmatprep.subr.mxu0 0.0
        %1084 = vmatpush1.xpose.msra.mxu0 0.0
        %1085 = vmatprep.subr.mxu0 0.0
        %1086 = vmatpush1.xpose.msra.mxu0 0.0
        %1087 = vmatprep.subr.mxu0 0.0
        %1088 = vmatpush1.xpose.msra.mxu0 0.0
        %1089 = vmatprep.subr.mxu0 0.0
        %1090 = vmatpush1.xpose.msra.mxu0 0.0
        %1091 = vmatprep.subr.mxu0 0.0
        %1092 = vmatpush1.xpose.msra.mxu0 0.0
        %1093 = vmatprep.subr.mxu0 0.0
        %1094 = vmatpush1.xpose.msra.mxu0 0.0
        %1095 = vmatprep.subr.mxu0 0.0
        %1096 = vmatpush1.xpose.msra.mxu0 0.0
        %1097 = vmatprep.subr.mxu0 0.0
        %1098 = vmatpush1.xpose.msra.mxu0 0.0
        %1099 = vmatprep.subr.mxu0 0.0
        %1100 = vmatpush1.xpose.msra.mxu0 0.0
        %1101 = vmatprep.subr.mxu0 0.0
        %1102 = vmatpush1.xpose.msra.mxu0 0.0
        %1103 = vmatprep.subr.mxu0 0.0
        %1104 = vmatpush1.xpose.msra.mxu0 0.0
        %1105 = vmatprep.subr.mxu0 0.0
        %1106 = vmatpush1.xpose.msra.mxu0 0.0
        %1107 = vmatprep.subr.mxu0 0.0
        %1108 = vmatpush1.xpose.msra.mxu0 0.0
        %1109 = vmatprep.subr.mxu0 0.0
        %1110 = vmatpush1.xpose.msra.mxu0 0.0
        %1111 = vmatprep.subr.mxu0 0.0
        %1112 = vmatpush1.xpose.msra.mxu0 0.0
        %1113 = vmatprep.subr.mxu0 0.0
        %1114 = vmatpush1.xpose.msra.mxu0 0.0
        %1115 = vmatprep.subr.mxu0 0.0
        %1116 = vmatpush1.xpose.msra.mxu0 0.0
        %1117 = vmatprep.subr.mxu0 0.0
        %1118 = vmatpush1.xpose.msra.mxu0 0.0
        %1119 = vmatprep.subr.mxu0 0.0
        %1120 = vmatpush1.xpose.msra.mxu0 0.0
        %1121 = vmatprep.subr.mxu0 0.0
        %1122 = vmatpush1.xpose.msra.mxu0 0.0
        %1123 = vmatprep.subr.mxu0 0.0
        %1124 = vmatpush1.xpose.msra.mxu0 0.0
        %1125 = vmatprep.subr.mxu0 0.0
        %1126 = vmatpush1.xpose.msra.mxu0 0.0
        %1127 = vmatprep.mubr.f32.mxu0 0.0
        %1128 = vmatmul.mubr.f32.gmra.mrb[0].mxu0 %v1059
        %v1129 = vpop.f32.mrb[0].mxu0
        %v1130 = vadd.f32 0.0, %v1129
        %v1131 = vpop.f32.mrb[0].mxu0
        %1132 = vdwg.mxu0
        %vm1133 = vcmask 36864
        %v1134 = vsel %vm1133, %v1130, -inf
        %1135 = vmax.xlane.f32.xlu0 %v1134
        %v1136 = vpop.xlane.xlu0 %1135
        %v1137 = vsub.f32 %v1130, %v1136
        %v1138 = vmul.f32 %v1137, 1.442695
        %v1139 = vpow.pop %v1138
        %v1140 = vsel %vm1133, %v1139, 0.0
        %1141 = vadd.xlane.f32.xlu0 %v1140
        %v1142 = vpop.xlane.xlu0 %1141
        %v1143 = vrcp.pop %v1142
        %v1144 = vmul.f32 %v1139, %v1143
        %1145 = vrot.lane.b32.xlu0 %v1046, 64
        %v1146 = vpop.permute.xlu0 %1145
        %vm1147 = vcmask 39936
        %v1149 = vsel %vm1147, %v1144, 0
        %vm1151 = vcmask 1044480
        %v1152 = vsel %vm1151, %v1146, 0
        %1154 = vmatprep.subr.mxu0 0.0
        %1155 = vmatpush1.msra.mxu0 %v1152
        %1156 = vmatprep.subr.mxu0 0.0
        %1157 = vmatpush1.msra.mxu0 0.0
        %1158 = vmatprep.subr.mxu0 0.0
        %1159 = vmatpush1.msra.mxu0 0.0
        %1160 = vmatprep.subr.mxu0 0.0
        %1161 = vmatpush1.msra.mxu0 0.0
        %1162 = vmatprep.subr.mxu0 0.0
        %1163 = vmatpush1.msra.mxu0 0.0
        %1164 = vmatprep.subr.mxu0 0.0
        %1165 = vmatpush1.msra.mxu0 0.0
        %1166 = vmatprep.subr.mxu0 0.0
        %1167 = vmatpush1.msra.mxu0 0.0
        %1168 = vmatprep.subr.mxu0 0.0
        %1169 = vmatpush1.msra.mxu0 0.0
        %1170 = vmatprep.subr.mxu0 0.0
        %1171 = vmatpush1.msra.mxu0 0.0
        %1172 = vmatprep.subr.mxu0 0.0
        %1173 = vmatpush1.msra.mxu0 0.0
        %1174 = vmatprep.subr.mxu0 0.0
        %1175 = vmatpush1.msra.mxu0 0.0
        %1176 = vmatprep.subr.mxu0 0.0
        %1177 = vmatpush1.msra.mxu0 0.0
        %1178 = vmatprep.subr.mxu0 0.0
        %1179 = vmatpush1.msra.mxu0 0.0
        %1180 = vmatprep.subr.mxu0 0.0
        %1181 = vmatpush1.msra.mxu0 0.0
        %1182 = vmatprep.subr.mxu0 0.0
        %1183 = vmatpush1.msra.mxu0 0.0
        %1184 = vmatprep.subr.mxu0 0.0
        %1185 = vmatpush1.msra.mxu0 0.0
        %1186 = vmatprep.subr.mxu0 0.0
        %1187 = vmatpush1.msra.mxu0 0.0
        %1188 = vmatprep.subr.mxu0 0.0
        %1189 = vmatpush1.msra.mxu0 0.0
        %1190 = vmatprep.subr.mxu0 0.0
        %1191 = vmatpush1.msra.mxu0 0.0
        %1192 = vmatprep.subr.mxu0 0.0
        %1193 = vmatpush1.msra.mxu0 0.0
        %1194 = vmatprep.subr.mxu0 0.0
        %1195 = vmatpush1.msra.mxu0 0.0
        %1196 = vmatprep.subr.mxu0 0.0
        %1197 = vmatpush1.msra.mxu0 0.0
        %1198 = vmatprep.subr.mxu0 0.0
        %1199 = vmatpush1.msra.mxu0 0.0
        %1200 = vmatprep.subr.mxu0 0.0
        %1201 = vmatpush1.msra.mxu0 0.0
        %1202 = vmatprep.subr.mxu0 0.0
        %1203 = vmatpush1.msra.mxu0 0.0
        %1204 = vmatprep.subr.mxu0 0.0
        %1205 = vmatpush1.msra.mxu0 0.0
        %1206 = vmatprep.subr.mxu0 0.0
        %1207 = vmatpush1.msra.mxu0 0.0
        %1208 = vmatprep.subr.mxu0 0.0
        %1209 = vmatpush1.msra.mxu0 0.0
        %1210 = vmatprep.subr.mxu0 0.0
        %1211 = vmatpush1.msra.mxu0 0.0
        %1212 = vmatprep.subr.mxu0 0.0
        %1213 = vmatpush1.msra.mxu0 0.0
        %1214 = vmatprep.subr.mxu0 0.0
        %1215 = vmatpush1.msra.mxu0 0.0
        %1216 = vmatprep.subr.mxu0 0.0
        %1217 = vmatpush1.msra.mxu0 0.0
        %1218 = vmatprep.mubr.f32.mxu0 0.0
        %1219 = vmatmul.mubr.f32.gmra.mrb[0].mxu0 %v1149
        %v1220 = vpop.f32.mrb[0].mxu0
        %v1221 = vadd.f32 0.0, %v1220
        %v1222 = vpop.f32.mrb[0].mxu0
        %1223 = vdwg.mxu0
        %1224 = vrot.lane.b32.xlu0 %v1049, 120
        %v1225 = vpop.permute.xlu0 %1224
        %1226 = vrot.lane.b32.xlu0 %v1046, 88
        %v1227 = vpop.permute.xlu0 %1226
        %v1228 = vsel %vm1057, %v1225, 0
        %v1230 = vsel %vm1057, %v1227, 0
        %1232 = vmatprep.subr.mxu0 0.0
        %1233 = vmatpush1.xpose.msra.mxu0 %v1230
        %1234 = vmatprep.subr.mxu0 0.0
        %1235 = vmatpush1.xpose.msra.mxu0 0.0
        %1236 = vmatprep.subr.mxu0 0.0
        %1237 = vmatpush1.xpose.msra.mxu0 0.0
        %1238 = vmatprep.subr.mxu0 0.0
        %1239 = vmatpush1.xpose.msra.mxu0 0.0
        %1240 = vmatprep.subr.mxu0 0.0
        %1241 = vmatpush1.xpose.msra.mxu0 0.0
        %1242 = vmatprep.subr.mxu0 0.0
        %1243 = vmatpush1.xpose.msra.mxu0 0.0
        %1244 = vmatprep.subr.mxu0 0.0
        %1245 = vmatpush1.xpose.msra.mxu0 0.0
        %1246 = vmatprep.subr.mxu0 0.0
        %1247 = vmatpush1.xpose.msra.mxu0 0.0
        %1248 = vmatprep.subr.mxu0 0.0
        %1249 = vmatpush1.xpose.msra.mxu0 0.0
        %1250 = vmatprep.subr.mxu0 0.0
        %1251 = vmatpush1.xpose.msra.mxu0 0.0
        %1252 = vmatprep.subr.mxu0 0.0
        %1253 = vmatpush1.xpose.msra.mxu0 0.0
        %1254 = vmatprep.subr.mxu0 0.0
        %1255 = vmatpush1.xpose.msra.mxu0 0.0
        %1256 = vmatprep.subr.mxu0 0.0
        %1257 = vmatpush1.xpose.msra.mxu0 0.0
        %1258 = vmatprep.subr.mxu0 0.0
        %1259 = vmatpush1.xpose.msra.mxu0 0.0
        %1260 = vmatprep.subr.mxu0 0.0
        %1261 = vmatpush1.xpose.msra.mxu0 0.0
        %1262 = vmatprep.subr.mxu0 0.0
        %1263 = vmatpush1.xpose.msra.mxu0 0.0
        %1264 = vmatprep.subr.mxu0 0.0
        %1265 = vmatpush1.xpose.msra.mxu0 0.0
        %1266 = vmatprep.subr.mxu0 0.0
        %1267 = vmatpush1.xpose.msra.mxu0 0.0
        %1268 = vmatprep.subr.mxu0 0.0
        %1269 = vmatpush1.xpose.msra.mxu0 0.0
        %1270 = vmatprep.subr.mxu0 0.0
        %1271 = vmatpush1.xpose.msra.mxu0 0.0
        %1272 = vmatprep.subr.mxu0 0.0
        %1273 = vmatpush1.xpose.msra.mxu0 0.0
        %1274 = vmatprep.subr.mxu0 0.0
        %1275 = vmatpush1.xpose.msra.mxu0 0.0
        %1276 = vmatprep.subr.mxu0 0.0
        %1277 = vmatpush1.xpose.msra.mxu0 0.0
        %1278 = vmatprep.subr.mxu0 0.0
        %1279 = vmatpush1.xpose.msra.mxu0 0.0
        %1280 = vmatprep.subr.mxu0 0.0
        %1281 = vmatpush1.xpose.msra.mxu0 0.0
        %1282 = vmatprep.subr.mxu0 0.0
        %1283 = vmatpush1.xpose.msra.mxu0 0.0
        %1284 = vmatprep.subr.mxu0 0.0
        %1285 = vmatpush1.xpose.msra.mxu0 0.0
        %1286 = vmatprep.subr.mxu0 0.0
        %1287 = vmatpush1.xpose.msra.mxu0 0.0
        %1288 = vmatprep.subr.mxu0 0.0
        %1289 = vmatpush1.xpose.msra.mxu0 0.0
        %1290 = vmatprep.subr.mxu0 0.0
        %1291 = vmatpush1.xpose.msra.mxu0 0.0
        %1292 = vmatprep.subr.mxu0 0.0
        %1293 = vmatpush1.xpose.msra.mxu0 0.0
        %1294 = vmatprep.subr.mxu0 0.0
        %1295 = vmatpush1.xpose.msra.mxu0 0.0
        %1296 = vmatprep.mubr.f32.mxu0 0.0
        %1297 = vmatmul.mubr.f32.gmra.mrb[0].mxu0 %v1228
        %v1298 = vpop.f32.mrb[0].mxu0
        %v1299 = vadd.f32 0.0, %v1298
        %v1300 = vpop.f32.mrb[0].mxu0
        %1301 = vdwg.mxu0
        %v1302 = vsel %vm1133, %v1299, -inf
        %1303 = vmax.xlane.f32.xlu0 %v1302
        %v1304 = vpop.xlane.xlu0 %1303
        %v1305 = vsub.f32 %v1299, %v1304
        %v1306 = vmul.f32 %v1305, 1.442695
        %v1307 = vpow.pop %v1306
        %v1308 = vsel %vm1133, %v1307, 0.0
        %1309 = vadd.xlane.f32.xlu0 %v1308
        %v1310 = vpop.xlane.xlu0 %1309
        %v1311 = vrcp.pop %v1310
        %v1312 = vmul.f32 %v1307, %v1311
        %1313 = vrot.lane.b32.xlu0 %v1046, 56
        %v1314 = vpop.permute.xlu0 %1313
        %v1316 = vsel %vm1147, %v1312, 0
        %v1318 = vsel %vm1151, %v1314, 0
        %1320 = vmatprep.subr.mxu0 0.0
        %1321 = vmatpush1.msra.mxu0 %v1318
        %1322 = vmatprep.subr.mxu0 0.0
        %1323 = vmatpush1.msra.mxu0 0.0
        %1324 = vmatprep.subr.mxu0 0.0
        %1325 = vmatpush1.msra.mxu0 0.0
        %1326 = vmatprep.subr.mxu0 0.0
        %1327 = vmatpush1.msra.mxu0 0.0
        %1328 = vmatprep.subr.mxu0 0.0
        %1329 = vmatpush1.msra.mxu0 0.0
        %1330 = vmatprep.subr.mxu0 0.0
        %1331 = vmatpush1.msra.mxu0 0.0
        %1332 = vmatprep.subr.mxu0 0.0
        %1333 = vmatpush1.msra.mxu0 0.0
        %1334 = vmatprep.subr.mxu0 0.0
        %1335 = vmatpush1.msra.mxu0 0.0
        %1336 = vmatprep.subr.mxu0 0.0
        %1337 = vmatpush1.msra.mxu0 0.0
        %1338 = vmatprep.subr.mxu0 0.0
        %1339 = vmatpush1.msra.mxu0 0.0
        %1340 = vmatprep.subr.mxu0 0.0
        %1341 = vmatpush1.msra.mxu0 0.0
        %1342 = vmatprep.subr.mxu0 0.0
        %1343 = vmatpush1.msra.mxu0 0.0
        %1344 = vmatprep.subr.mxu0 0.0
        %1345 = vmatpush1.msra.mxu0 0.0
        %1346 = vmatprep.subr.mxu0 0.0
        %1347 = vmatpush1.msra.mxu0 0.0
        %1348 = vmatprep.subr.mxu0 0.0
        %1349 = vmatpush1.msra.mxu0 0.0
        %1350 = vmatprep.subr.mxu0 0.0
        %1351 = vmatpush1.msra.mxu0 0.0
        %1352 = vmatprep.subr.mxu0 0.0
        %1353 = vmatpush1.msra.mxu0 0.0
        %1354 = vmatprep.subr.mxu0 0.0
        %1355 = vmatpush1.msra.mxu0 0.0
        %1356 = vmatprep.subr.mxu0 0.0
        %1357 = vmatpush1.msra.mxu0 0.0
        %1358 = vmatprep.subr.mxu0 0.0
        %1359 = vmatpush1.msra.mxu0 0.0
        %1360 = vmatprep.subr.mxu0 0.0
        %1361 = vmatpush1.msra.mxu0 0.0
        %1362 = vmatprep.subr.mxu0 0.0
        %1363 = vmatpush1.msra.mxu0 0.0
        %1364 = vmatprep.subr.mxu0 0.0
        %1365 = vmatpush1.msra.mxu0 0.0
        %1366 = vmatprep.subr.mxu0 0.0
        %1367 = vmatpush1.msra.mxu0 0.0
        %1368 = vmatprep.subr.mxu0 0.0
        %1369 = vmatpush1.msra.mxu0 0.0
        %1370 = vmatprep.subr.mxu0 0.0
        %1371 = vmatpush1.msra.mxu0 0.0
        %1372 = vmatprep.subr.mxu0 0.0
        %1373 = vmatpush1.msra.mxu0 0.0
        %1374 = vmatprep.subr.mxu0 0.0
        %1375 = vmatpush1.msra.mxu0 0.0
        %1376 = vmatprep.subr.mxu0 0.0
        %1377 = vmatpush1.msra.mxu0 0.0
        %1378 = vmatprep.subr.mxu0 0.0
        %1379 = vmatpush1.msra.mxu0 0.0
        %1380 = vmatprep.subr.mxu0 0.0
        %1381 = vmatpush1.msra.mxu0 0.0
        %1382 = vmatprep.subr.mxu0 0.0
        %1383 = vmatpush1.msra.mxu0 0.0
        %1384 = vmatprep.mubr.f32.mxu0 0.0
        %1385 = vmatmul.mubr.f32.gmra.mrb[0].mxu0 %v1316
        %v1386 = vpop.f32.mrb[0].mxu0
        %v1387 = vadd.f32 0.0, %v1386
        %v1388 = vpop.f32.mrb[0].mxu0
        %1389 = vdwg.mxu0
        %v1391 = vsel %vm1057, %v1387, 0
        %1393 = vmatprep.subr.mxu0 0.0
        %1394 = vmatpush1.msra.mxu0 %v1051
        %1395 = vmatprep.subr.mxu0 0.0
        %1396 = vmatpush1.msra.mxu0 0.0
        %1397 = vmatprep.subr.mxu0 0.0
        %1398 = vmatpush1.msra.mxu0 0.0
        %1399 = vmatprep.subr.mxu0 0.0
        %1400 = vmatpush1.msra.mxu0 0.0
        %1401 = vmatprep.subr.mxu0 0.0
        %1402 = vmatpush1.msra.mxu0 0.0
        %1403 = vmatprep.subr.mxu0 0.0
        %1404 = vmatpush1.msra.mxu0 0.0
        %1405 = vmatprep.subr.mxu0 0.0
        %1406 = vmatpush1.msra.mxu0 0.0
        %1407 = vmatprep.subr.mxu0 0.0
        %1408 = vmatpush1.msra.mxu0 0.0
        %1409 = vmatprep.subr.mxu0 0.0
        %1410 = vmatpush1.msra.mxu0 0.0
        %1411 = vmatprep.subr.mxu0 0.0
        %1412 = vmatpush1.msra.mxu0 0.0
        %1413 = vmatprep.subr.mxu0 0.0
        %1414 = vmatpush1.msra.mxu0 0.0
        %1415 = vmatprep.subr.mxu0 0.0
        %1416 = vmatpush1.msra.mxu0 0.0
        %1417 = vmatprep.subr.mxu0 0.0
        %1418 = vmatpush1.msra.mxu0 0.0
        %1419 = vmatprep.subr.mxu0 0.0
        %1420 = vmatpush1.msra.mxu0 0.0
        %1421 = vmatprep.subr.mxu0 0.0
        %1422 = vmatpush1.msra.mxu0 0.0
        %1423 = vmatprep.subr.mxu0 0.0
        %1424 = vmatpush1.msra.mxu0 0.0
        %1425 = vmatprep.subr.mxu0 0.0
        %1426 = vmatpush1.msra.mxu0 0.0
        %1427 = vmatprep.subr.mxu0 0.0
        %1428 = vmatpush1.msra.mxu0 0.0
        %1429 = vmatprep.subr.mxu0 0.0
        %1430 = vmatpush1.msra.mxu0 0.0
        %1431 = vmatprep.subr.mxu0 0.0
        %1432 = vmatpush1.msra.mxu0 0.0
        %1433 = vmatprep.subr.mxu0 0.0
        %1434 = vmatpush1.msra.mxu0 0.0
        %1435 = vmatprep.subr.mxu0 0.0
        %1436 = vmatpush1.msra.mxu0 0.0
        %1437 = vmatprep.subr.mxu0 0.0
        %1438 = vmatpush1.msra.mxu0 0.0
        %1439 = vmatprep.subr.mxu0 0.0
        %1440 = vmatpush1.msra.mxu0 0.0
        %1441 = vmatprep.subr.mxu0 0.0
        %1442 = vmatpush1.msra.mxu0 0.0
        %1443 = vmatprep.subr.mxu0 0.0
        %1444 = vmatpush1.msra.mxu0 0.0
        %1445 = vmatprep.subr.mxu0 0.0
        %1446 = vmatpush1.msra.mxu0 0.0
        %1447 = vmatprep.subr.mxu0 0.0
        %1448 = vmatpush1.msra.mxu0 0.0
        %1449 = vmatprep.subr.mxu0 0.0
        %1450 = vmatpush1.msra.mxu0 0.0
        %1451 = vmatprep.subr.mxu0 0.0
        %1452 = vmatpush1.msra.mxu0 0.0
        %1453 = vmatprep.subr.mxu0 0.0
        %1454 = vmatpush1.msra.mxu0 0.0
        %1455 = vmatprep.subr.mxu0 0.0
        %1456 = vmatpush1.msra.mxu0 0.0
        %1457 = vmatprep.mubr.f32.mxu0 0.0
        %1458 = vmatmul.mubr.f32.gmra.mrb[0].mxu0 %v1391
        %v1459 = vpop.f32.mrb[0].mxu0
        %v1460 = vadd.f32 0.0, %v1459
        %v1461 = vpop.f32.mrb[0].mxu0
        %1462 = vdwg.mxu0
        %v1464 = vsel %vm1057, %v1221, 0
        %1466 = vmatprep.subr.mxu0 0.0
        %1467 = vmatpush1.msra.mxu0 %v1050
        %1468 = vmatprep.subr.mxu0 0.0
        %1469 = vmatpush1.msra.mxu0 0.0
        %1470 = vmatprep.subr.mxu0 0.0
        %1471 = vmatpush1.msra.mxu0 0.0
        %1472 = vmatprep.subr.mxu0 0.0
        %1473 = vmatpush1.msra.mxu0 0.0
        %1474 = vmatprep.subr.mxu0 0.0
        %1475 = vmatpush1.msra.mxu0 0.0
        %1476 = vmatprep.subr.mxu0 0.0
        %1477 = vmatpush1.msra.mxu0 0.0
        %1478 = vmatprep.subr.mxu0 0.0
        %1479 = vmatpush1.msra.mxu0 0.0
        %1480 = vmatprep.subr.mxu0 0.0
        %1481 = vmatpush1.msra.mxu0 0.0
        %1482 = vmatprep.subr.mxu0 0.0
        %1483 = vmatpush1.msra.mxu0 0.0
        %1484 = vmatprep.subr.mxu0 0.0
        %1485 = vmatpush1.msra.mxu0 0.0
        %1486 = vmatprep.subr.mxu0 0.0
        %1487 = vmatpush1.msra.mxu0 0.0
        %1488 = vmatprep.subr.mxu0 0.0
        %1489 = vmatpush1.msra.mxu0 0.0
        %1490 = vmatprep.subr.mxu0 0.0
        %1491 = vmatpush1.msra.mxu0 0.0
        %1492 = vmatprep.subr.mxu0 0.0
        %1493 = vmatpush1.msra.mxu0 0.0
        %1494 = vmatprep.subr.mxu0 0.0
        %1495 = vmatpush1.msra.mxu0 0.0
        %1496 = vmatprep.subr.mxu0 0.0
        %1497 = vmatpush1.msra.mxu0 0.0
        %1498 = vmatprep.subr.mxu0 0.0
        %1499 = vmatpush1.msra.mxu0 0.0
        %1500 = vmatprep.subr.mxu0 0.0
        %1501 = vmatpush1.msra.mxu0 0.0
        %1502 = vmatprep.subr.mxu0 0.0
        %1503 = vmatpush1.msra.mxu0 0.0
        %1504 = vmatprep.subr.mxu0 0.0
        %1505 = vmatpush1.msra.mxu0 0.0
        %1506 = vmatprep.subr.mxu0 0.0
        %1507 = vmatpush1.msra.mxu0 0.0
        %1508 = vmatprep.subr.mxu0 0.0
        %1509 = vmatpush1.msra.mxu0 0.0
        %1510 = vmatprep.subr.mxu0 0.0
        %1511 = vmatpush1.msra.mxu0 0.0
        %1512 = vmatprep.subr.mxu0 0.0
        %1513 = vmatpush1.msra.mxu0 0.0
        %1514 = vmatprep.subr.mxu0 0.0
        %1515 = vmatpush1.msra.mxu0 0.0
        %1516 = vmatprep.subr.mxu0 0.0
        %1517 = vmatpush1.msra.mxu0 0.0
        %1518 = vmatprep.subr.mxu0 0.0
        %1519 = vmatpush1.msra.mxu0 0.0
        %1520 = vmatprep.subr.mxu0 0.0
        %1521 = vmatpush1.msra.mxu0 0.0
        %1522 = vmatprep.subr.mxu0 0.0
        %1523 = vmatpush1.msra.mxu0 0.0
        %1524 = vmatprep.subr.mxu0 0.0
        %1525 = vmatpush1.msra.mxu0 0.0
        %1526 = vmatprep.subr.mxu0 0.0
        %1527 = vmatpush1.msra.mxu0 0.0
        %1528 = vmatprep.subr.mxu0 0.0
        %1529 = vmatpush1.msra.mxu0 0.0
        %1530 = vmatprep.mubr.f32.mxu0 0.0
        %1531 = vmatmul.mubr.f32.gmra.mrb[0].mxu0 %v1464
        %v1532 = vpop.f32.mrb[0].mxu0
        %v1533 = vadd.f32 %v1460, %v1532
        %v1534 = vpop.f32.mrb[0].mxu0
        %1535 = vdwg.mxu0
        %1536 = vrot.lane.b32.xlu0 %v1049, 112
        %v1537 = vpop.permute.xlu0 %1536
        %1538 = vrot.lane.b32.xlu0 %v1046, 80
        %v1539 = vpop.permute.xlu0 %1538
        %v1540 = vsel %vm1057, %v1537, 0
        %v1542 = vsel %vm1057, %v1539, 0
        %1544 = vmatprep.subr.mxu0 0.0
        %1545 = vmatpush1.xpose.msra.mxu0 %v1542
        %1546 = vmatprep.subr.mxu0 0.0
        %1547 = vmatpush1.xpose.msra.mxu0 0.0
        %1548 = vmatprep.subr.mxu0 0.0
        %1549 = vmatpush1.xpose.msra.mxu0 0.0
        %1550 = vmatprep.subr.mxu0 0.0
        %1551 = vmatpush1.xpose.msra.mxu0 0.0
        %1552 = vmatprep.subr.mxu0 0.0
        %1553 = vmatpush1.xpose.msra.mxu0 0.0
        %1554 = vmatprep.subr.mxu0 0.0
        %1555 = vmatpush1.xpose.msra.mxu0 0.0
        %1556 = vmatprep.subr.mxu0 0.0
        %1557 = vmatpush1.xpose.msra.mxu0 0.0
        %1558 = vmatprep.subr.mxu0 0.0
        %1559 = vmatpush1.xpose.msra.mxu0 0.0
        %1560 = vmatprep.subr.mxu0 0.0
        %1561 = vmatpush1.xpose.msra.mxu0 0.0
        %1562 = vmatprep.subr.mxu0 0.0
        %1563 = vmatpush1.xpose.msra.mxu0 0.0
        %1564 = vmatprep.subr.mxu0 0.0
        %1565 = vmatpush1.xpose.msra.mxu0 0.0
        %1566 = vmatprep.subr.mxu0 0.0
        %1567 = vmatpush1.xpose.msra.mxu0 0.0
        %1568 = vmatprep.subr.mxu0 0.0
        %1569 = vmatpush1.xpose.msra.mxu0 0.0
        %1570 = vmatprep.subr.mxu0 0.0
        %1571 = vmatpush1.xpose.msra.mxu0 0.0
        %1572 = vmatprep.subr.mxu0 0.0
        %1573 = vmatpush1.xpose.msra.mxu0 0.0
        %1574 = vmatprep.subr.mxu0 0.0
        %1575 = vmatpush1.xpose.msra.mxu0 0.0
        %1576 = vmatprep.subr.mxu0 0.0
        %1577 = vmatpush1.xpose.msra.mxu0 0.0
        %1578 = vmatprep.subr.mxu0 0.0
        %1579 = vmatpush1.xpose.msra.mxu0 0.0
        %1580 = vmatprep.subr.mxu0 0.0
        %1581 = vmatpush1.xpose.msra.mxu0 0.0
        %1582 = vmatprep.subr.mxu0 0.0
        %1583 = vmatpush1.xpose.msra.mxu0 0.0
        %1584 = vmatprep.subr.mxu0 0.0
        %1585 = vmatpush1.xpose.msra.mxu0 0.0
        %1586 = vmatprep.subr.mxu0 0.0
        %1587 = vmatpush1.xpose.msra.mxu0 0.0
        %1588 = vmatprep.subr.mxu0 0.0
        %1589 = vmatpush1.xpose.msra.mxu0 0.0
        %1590 = vmatprep.subr.mxu0 0.0
        %1591 = vmatpush1.xpose.msra.mxu0 0.0
        %1592 = vmatprep.subr.mxu0 0.0
        %1593 = vmatpush1.xpose.msra.mxu0 0.0
        %1594 = vmatprep.subr.mxu0 0.0
        %1595 = vmatpush1.xpose.msra.mxu0 0.0
        %1596 = vmatprep.subr.mxu0 0.0
        %1597 = vmatpush1.xpose.msra.mxu0 0.0
        %1598 = vmatprep.subr.mxu0 0.0
        %1599 = vmatpush1.xpose.msra.mxu0 0.0
        %1600 = vmatprep.subr.mxu0 0.0
        %1601 = vmatpush1.xpose.msra.mxu0 0.0
        %1602 = vmatprep.subr.mxu0 0.0
        %1603 = vmatpush1.xpose.msra.mxu0 0.0
        %1604 = vmatprep.subr.mxu0 0.0
        %1605 = vmatpush1.xpose.msra.mxu0 0.0
        %1606 = vmatprep.subr.mxu0 0.0
        %1607 = vmatpush1.xpose.msra.mxu0 0.0
        %1608 = vmatprep.mubr.f32.mxu0 0.0
        %1609 = vmatmul.mubr.f32.gmra.mrb[0].mxu0 %v1540
        %v1610 = vpop.f32.mrb[0].mxu0
        %v1611 = vadd.f32 0.0, %v1610
        %v1612 = vpop.f32.mrb[0].mxu0
        %1613 = vdwg.mxu0
        %v1614 = vsel %vm1133, %v1611, -inf
        %1615 = vmax.xlane.f32.xlu0 %v1614
        %v1616 = vpop.xlane.xlu0 %1615
        %v1617 = vsub.f32 %v1611, %v1616
        %v1618 = vmul.f32 %v1617, 1.442695
        %v1619 = vpow.pop %v1618
        %v1620 = vsel %vm1133, %v1619, 0.0
        %1621 = vadd.xlane.f32.xlu0 %v1620
        %v1622 = vpop.xlane.xlu0 %1621
        %v1623 = vrcp.pop %v1622
        %v1624 = vmul.f32 %v1619, %v1623
        %1625 = vrot.lane.b32.xlu0 %v1046, 48
        %v1626 = vpop.permute.xlu0 %1625
        %v1628 = vsel %vm1147, %v1624, 0
        %v1630 = vsel %vm1151, %v1626, 0
        %1632 = vmatprep.subr.mxu0 0.0
        %1633 = vmatpush1.msra.mxu0 %v1630
        %1634 = vmatprep.subr.mxu0 0.0
        %1635 = vmatpush1.msra.mxu0 0.0
        %1636 = vmatprep.subr.mxu0 0.0
        %1637 = vmatpush1.msra.mxu0 0.0
        %1638 = vmatprep.subr.mxu0 0.0
        %1639 = vmatpush1.msra.mxu0 0.0
        %1640 = vmatprep.subr.mxu0 0.0
        %1641 = vmatpush1.msra.mxu0 0.0
        %1642 = vmatprep.subr.mxu0 0.0
        %1643 = vmatpush1.msra.mxu0 0.0
        %1644 = vmatprep.subr.mxu0 0.0
        %1645 = vmatpush1.msra.mxu0 0.0
        %1646 = vmatprep.subr.mxu0 0.0
        %1647 = vmatpush1.msra.mxu0 0.0
        %1648 = vmatprep.subr.mxu0 0.0
        %1649 = vmatpush1.msra.mxu0 0.0
        %1650 = vmatprep.subr.mxu0 0.0
        %1651 = vmatpush1.msra.mxu0 0.0
        %1652 = vmatprep.subr.mxu0 0.0
        %1653 = vmatpush1.msra.mxu0 0.0
        %1654 = vmatprep.subr.mxu0 0.0
        %1655 = vmatpush1.msra.mxu0 0.0
        %1656 = vmatprep.subr.mxu0 0.0
        %1657 = vmatpush1.msra.mxu0 0.0
        %1658 = vmatprep.subr.mxu0 0.0
        %1659 = vmatpush1.msra.mxu0 0.0
        %1660 = vmatprep.subr.mxu0 0.0
        %1661 = vmatpush1.msra.mxu0 0.0
        %1662 = vmatprep.subr.mxu0 0.0
        %1663 = vmatpush1.msra.mxu0 0.0
        %1664 = vmatprep.subr.mxu0 0.0
        %1665 = vmatpush1.msra.mxu0 0.0
        %1666 = vmatprep.subr.mxu0 0.0
        %1667 = vmatpush1.msra.mxu0 0.0
        %1668 = vmatprep.subr.mxu0 0.0
        %1669 = vmatpush1.msra.mxu0 0.0
        %1670 = vmatprep.subr.mxu0 0.0
        %1671 = vmatpush1.msra.mxu0 0.0
        %1672 = vmatprep.subr.mxu0 0.0
        %1673 = vmatpush1.msra.mxu0 0.0
        %1674 = vmatprep.subr.mxu0 0.0
        %1675 = vmatpush1.msra.mxu0 0.0
        %1676 = vmatprep.subr.mxu0 0.0
        %1677 = vmatpush1.msra.mxu0 0.0
        %1678 = vmatprep.subr.mxu0 0.0
        %1679 = vmatpush1.msra.mxu0 0.0
        %1680 = vmatprep.subr.mxu0 0.0
        %1681 = vmatpush1.msra.mxu0 0.0
        %1682 = vmatprep.subr.mxu0 0.0
        %1683 = vmatpush1.msra.mxu0 0.0
        %1684 = vmatprep.subr.mxu0 0.0
        %1685 = vmatpush1.msra.mxu0 0.0
        %1686 = vmatprep.subr.mxu0 0.0
        %1687 = vmatpush1.msra.mxu0 0.0
        %1688 = vmatprep.subr.mxu0 0.0
        %1689 = vmatpush1.msra.mxu0 0.0
        %1690 = vmatprep.subr.mxu0 0.0
        %1691 = vmatpush1.msra.mxu0 0.0
        %1692 = vmatprep.subr.mxu0 0.0
        %1693 = vmatpush1.msra.mxu0 0.0
        %1694 = vmatprep.subr.mxu0 0.0
        %1695 = vmatpush1.msra.mxu0 0.0
        %1696 = vmatprep.mubr.f32.mxu0 0.0
        %1697 = vmatmul.mubr.f32.gmra.mrb[0].mxu0 %v1628
        %v1698 = vpop.f32.mrb[0].mxu0
        %v1699 = vadd.f32 0.0, %v1698
        %v1700 = vpop.f32.mrb[0].mxu0
        %1701 = vdwg.mxu0
        %v1703 = vsel %vm1057, %v1699, 0
        %1705 = vmatprep.subr.mxu0 0.0
        %1706 = vmatpush1.msra.mxu0 %v1052
        %1707 = vmatprep.subr.mxu0 0.0
        %1708 = vmatpush1.msra.mxu0 0.0
        %1709 = vmatprep.subr.mxu0 0.0
        %1710 = vmatpush1.msra.mxu0 0.0
        %1711 = vmatprep.subr.mxu0 0.0
        %1712 = vmatpush1.msra.mxu0 0.0
        %1713 = vmatprep.subr.mxu0 0.0
        %1714 = vmatpush1.msra.mxu0 0.0
        %1715 = vmatprep.subr.mxu0 0.0
        %1716 = vmatpush1.msra.mxu0 0.0
        %1717 = vmatprep.subr.mxu0 0.0
        %1718 = vmatpush1.msra.mxu0 0.0
        %1719 = vmatprep.subr.mxu0 0.0
        %1720 = vmatpush1.msra.mxu0 0.0
        %1721 = vmatprep.subr.mxu0 0.0
        %1722 = vmatpush1.msra.mxu0 0.0
        %1723 = vmatprep.subr.mxu0 0.0
        %1724 = vmatpush1.msra.mxu0 0.0
        %1725 = vmatprep.subr.mxu0 0.0
        %1726 = vmatpush1.msra.mxu0 0.0
        %1727 = vmatprep.subr.mxu0 0.0
        %1728 = vmatpush1.msra.mxu0 0.0
        %1729 = vmatprep.subr.mxu0 0.0
        %1730 = vmatpush1.msra.mxu0 0.0
        %1731 = vmatprep.subr.mxu0 0.0
        %1732 = vmatpush1.msra.mxu0 0.0
        %1733 = vmatprep.subr.mxu0 0.0
        %1734 = vmatpush1.msra.mxu0 0.0
        %1735 = vmatprep.subr.mxu0 0.0
        %1736 = vmatpush1.msra.mxu0 0.0
        %1737 = vmatprep.subr.mxu0 0.0
        %1738 = vmatpush1.msra.mxu0 0.0
        %1739 = vmatprep.subr.mxu0 0.0
        %1740 = vmatpush1.msra.mxu0 0.0
        %1741 = vmatprep.subr.mxu0 0.0
        %1742 = vmatpush1.msra.mxu0 0.0
        %1743 = vmatprep.subr.mxu0 0.0
        %1744 = vmatpush1.msra.mxu0 0.0
        %1745 = vmatprep.subr.mxu0 0.0
        %1746 = vmatpush1.msra.mxu0 0.0
        %1747 = vmatprep.subr.mxu0 0.0
        %1748 = vmatpush1.msra.mxu0 0.0
        %1749 = vmatprep.subr.mxu0 0.0
        %1750 = vmatpush1.msra.mxu0 0.0
        %1751 = vmatprep.subr.mxu0 0.0
        %1752 = vmatpush1.msra.mxu0 0.0
        %1753 = vmatprep.subr.mxu0 0.0
        %1754 = vmatpush1.msra.mxu0 0.0
        %1755 = vmatprep.subr.mxu0 0.0
        %1756 = vmatpush1.msra.mxu0 0.0
        %1757 = vmatprep.subr.mxu0 0.0
        %1758 = vmatpush1.msra.mxu0 0.0
        %1759 = vmatprep.subr.mxu0 0.0
        %1760 = vmatpush1.msra.mxu0 0.0
        %1761 = vmatprep.subr.mxu0 0.0
        %1762 = vmatpush1.msra.mxu0 0.0
        %1763 = vmatprep.subr.mxu0 0.0
        %1764 = vmatpush1.msra.mxu0 0.0
        %1765 = vmatprep.subr.mxu0 0.0
        %1766 = vmatpush1.msra.mxu0 0.0
        %1767 = vmatprep.subr.mxu0 0.0
        %1768 = vmatpush1.msra.mxu0 0.0
        %1769 = vmatprep.mubr.f32.mxu0 0.0
        %1770 = vmatmul.mubr.f32.gmra.mrb[0].mxu0 %v1703
        %v1771 = vpop.f32.mrb[0].mxu0
        %v1772 = vadd.f32 0.0, %v1771
        %v1773 = vpop.f32.mrb[0].mxu0
        %1774 = vdwg.mxu0
        %v1775 = vadd.f32 %v1533, %v1772
        %1776 = vrot.lane.b32.xlu0 %v1049, 104
        %v1777 = vpop.permute.xlu0 %1776
        %1778 = vrot.lane.b32.xlu0 %v1046, 72
        %v1779 = vpop.permute.xlu0 %1778
        %v1780 = vsel %vm1057, %v1777, 0
        %v1782 = vsel %vm1057, %v1779, 0
        %1784 = vmatprep.subr.mxu0 0.0
        %1785 = vmatpush1.xpose.msra.mxu0 %v1782
        %1786 = vmatprep.subr.mxu0 0.0
        %1787 = vmatpush1.xpose.msra.mxu0 0.0
        %1788 = vmatprep.subr.mxu0 0.0
        %1789 = vmatpush1.xpose.msra.mxu0 0.0
        %1790 = vmatprep.subr.mxu0 0.0
        %1791 = vmatpush1.xpose.msra.mxu0 0.0
        %1792 = vmatprep.subr.mxu0 0.0
        %1793 = vmatpush1.xpose.msra.mxu0 0.0
        %1794 = vmatprep.subr.mxu0 0.0
        %1795 = vmatpush1.xpose.msra.mxu0 0.0
        %1796 = vmatprep.subr.mxu0 0.0
        %1797 = vmatpush1.xpose.msra.mxu0 0.0
        %1798 = vmatprep.subr.mxu0 0.0
        %1799 = vmatpush1.xpose.msra.mxu0 0.0
        %1800 = vmatprep.subr.mxu0 0.0
        %1801 = vmatpush1.xpose.msra.mxu0 0.0
        %1802 = vmatprep.subr.mxu0 0.0
        %1803 = vmatpush1.xpose.msra.mxu0 0.0
        %1804 = vmatprep.subr.mxu0 0.0
        %1805 = vmatpush1.xpose.msra.mxu0 0.0
        %1806 = vmatprep.subr.mxu0 0.0
        %1807 = vmatpush1.xpose.msra.mxu0 0.0
        %1808 = vmatprep.subr.mxu0 0.0
        %1809 = vmatpush1.xpose.msra.mxu0 0.0
        %1810 = vmatprep.subr.mxu0 0.0
        %1811 = vmatpush1.xpose.msra.mxu0 0.0
        %1812 = vmatprep.subr.mxu0 0.0
        %1813 = vmatpush1.xpose.msra.mxu0 0.0
        %1814 = vmatprep.subr.mxu0 0.0
        %1815 = vmatpush1.xpose.msra.mxu0 0.0
        %1816 = vmatprep.subr.mxu0 0.0
        %1817 = vmatpush1.xpose.msra.mxu0 0.0
        %1818 = vmatprep.subr.mxu0 0.0
        %1819 = vmatpush1.xpose.msra.mxu0 0.0
        %1820 = vmatprep.subr.mxu0 0.0
        %1821 = vmatpush1.xpose.msra.mxu0 0.0
        %1822 = vmatprep.subr.mxu0 0.0
        %1823 = vmatpush1.xpose.msra.mxu0 0.0
        %1824 = vmatprep.subr.mxu0 0.0
        %1825 = vmatpush1.xpose.msra.mxu0 0.0
        %1826 = vmatprep.subr.mxu0 0.0
        %1827 = vmatpush1.xpose.msra.mxu0 0.0
        %1828 = vmatprep.subr.mxu0 0.0
        %1829 = vmatpush1.xpose.msra.mxu0 0.0
        %1830 = vmatprep.subr.mxu0 0.0
        %1831 = vmatpush1.xpose.msra.mxu0 0.0
        %1832 = vmatprep.subr.mxu0 0.0
        %1833 = vmatpush1.xpose.msra.mxu0 0.0
        %1834 = vmatprep.subr.mxu0 0.0
        %1835 = vmatpush1.xpose.msra.mxu0 0.0
        %1836 = vmatprep.subr.mxu0 0.0
        %1837 = vmatpush1.xpose.msra.mxu0 0.0
        %1838 = vmatprep.subr.mxu0 0.0
        %1839 = vmatpush1.xpose.msra.mxu0 0.0
        %1840 = vmatprep.subr.mxu0 0.0
        %1841 = vmatpush1.xpose.msra.mxu0 0.0
        %1842 = vmatprep.subr.mxu0 0.0
        %1843 = vmatpush1.xpose.msra.mxu0 0.0
        %1844 = vmatprep.subr.mxu0 0.0
        %1845 = vmatpush1.xpose.msra.mxu0 0.0
        %1846 = vmatprep.subr.mxu0 0.0
        %1847 = vmatpush1.xpose.msra.mxu0 0.0
        %1848 = vmatprep.mubr.f32.mxu0 0.0
        %1849 = vmatmul.mubr.f32.gmra.mrb[0].mxu0 %v1780
        %v1850 = vpop.f32.mrb[0].mxu0
        %v1851 = vadd.f32 0.0, %v1850
        %v1852 = vpop.f32.mrb[0].mxu0
        %1853 = vdwg.mxu0
        %v1854 = vsel %vm1133, %v1851, -inf
        %1855 = vmax.xlane.f32.xlu0 %v1854
        %v1856 = vpop.xlane.xlu0 %1855
        %v1857 = vsub.f32 %v1851, %v1856
        %v1858 = vmul.f32 %v1857, 1.442695
        %v1859 = vpow.pop %v1858
        %v1860 = vsel %vm1133, %v1859, 0.0
        %1861 = vadd.xlane.f32.xlu0 %v1860
        %v1862 = vpop.xlane.xlu0 %1861
        %v1863 = vrcp.pop %v1862
        %v1864 = vmul.f32 %v1859, %v1863
        %1865 = vrot.lane.b32.xlu0 %v1046, 40
        %v1866 = vpop.permute.xlu0 %1865
        %v1868 = vsel %vm1147, %v1864, 0
        %v1870 = vsel %vm1151, %v1866, 0
        %1872 = vmatprep.subr.mxu0 0.0
        %1873 = vmatpush1.msra.mxu0 %v1870
        %1874 = vmatprep.subr.mxu0 0.0
        %1875 = vmatpush1.msra.mxu0 0.0
        %1876 = vmatprep.subr.mxu0 0.0
        %1877 = vmatpush1.msra.mxu0 0.0
        %1878 = vmatprep.subr.mxu0 0.0
        %1879 = vmatpush1.msra.mxu0 0.0
        %1880 = vmatprep.subr.mxu0 0.0
        %1881 = vmatpush1.msra.mxu0 0.0
        %1882 = vmatprep.subr.mxu0 0.0
        %1883 = vmatpush1.msra.mxu0 0.0
        %1884 = vmatprep.subr.mxu0 0.0
        %1885 = vmatpush1.msra.mxu0 0.0
        %1886 = vmatprep.subr.mxu0 0.0
        %1887 = vmatpush1.msra.mxu0 0.0
        %1888 = vmatprep.subr.mxu0 0.0
        %1889 = vmatpush1.msra.mxu0 0.0
        %1890 = vmatprep.subr.mxu0 0.0
        %1891 = vmatpush1.msra.mxu0 0.0
        %1892 = vmatprep.subr.mxu0 0.0
        %1893 = vmatpush1.msra.mxu0 0.0
        %1894 = vmatprep.subr.mxu0 0.0
        %1895 = vmatpush1.msra.mxu0 0.0
        %1896 = vmatprep.subr.mxu0 0.0
        %1897 = vmatpush1.msra.mxu0 0.0
        %1898 = vmatprep.subr.mxu0 0.0
        %1899 = vmatpush1.msra.mxu0 0.0
        %1900 = vmatprep.subr.mxu0 0.0
        %1901 = vmatpush1.msra.mxu0 0.0
        %1902 = vmatprep.subr.mxu0 0.0
        %1903 = vmatpush1.msra.mxu0 0.0
        %1904 = vmatprep.subr.mxu0 0.0
        %1905 = vmatpush1.msra.mxu0 0.0
        %1906 = vmatprep.subr.mxu0 0.0
        %1907 = vmatpush1.msra.mxu0 0.0
        %1908 = vmatprep.subr.mxu0 0.0
        %1909 = vmatpush1.msra.mxu0 0.0
        %1910 = vmatprep.subr.mxu0 0.0
        %1911 = vmatpush1.msra.mxu0 0.0
        %1912 = vmatprep.subr.mxu0 0.0
        %1913 = vmatpush1.msra.mxu0 0.0
        %1914 = vmatprep.subr.mxu0 0.0
        %1915 = vmatpush1.msra.mxu0 0.0
        %1916 = vmatprep.subr.mxu0 0.0
        %1917 = vmatpush1.msra.mxu0 0.0
        %1918 = vmatprep.subr.mxu0 0.0
        %1919 = vmatpush1.msra.mxu0 0.0
        %1920 = vmatprep.subr.mxu0 0.0
        %1921 = vmatpush1.msra.mxu0 0.0
        %1922 = vmatprep.subr.mxu0 0.0
        %1923 = vmatpush1.msra.mxu0 0.0
        %1924 = vmatprep.subr.mxu0 0.0
        %1925 = vmatpush1.msra.mxu0 0.0
        %1926 = vmatprep.subr.mxu0 0.0
        %1927 = vmatpush1.msra.mxu0 0.0
        %1928 = vmatprep.subr.mxu0 0.0
        %1929 = vmatpush1.msra.mxu0 0.0
        %1930 = vmatprep.subr.mxu0 0.0
        %1931 = vmatpush1.msra.mxu0 0.0
        %1932 = vmatprep.subr.mxu0 0.0
        %1933 = vmatpush1.msra.mxu0 0.0
        %1934 = vmatprep.subr.mxu0 0.0
        %1935 = vmatpush1.msra.mxu0 0.0
        %1936 = vmatprep.mubr.f32.mxu0 0.0
        %1937 = vmatmul.mubr.f32.gmra.mrb[0].mxu0 %v1868
        %v1938 = vpop.f32.mrb[0].mxu0
        %v1939 = vadd.f32 0.0, %v1938
        %v1940 = vpop.f32.mrb[0].mxu0
        %1941 = vdwg.mxu0
        %v1943 = vsel %vm1057, %v1939, 0
        %1945 = vmatprep.subr.mxu0 0.0
        %1946 = vmatpush1.msra.mxu0 %v1053
        %1947 = vmatprep.subr.mxu0 0.0
        %1948 = vmatpush1.msra.mxu0 0.0
        %1949 = vmatprep.subr.mxu0 0.0
        %1950 = vmatpush1.msra.mxu0 0.0
        %1951 = vmatprep.subr.mxu0 0.0
        %1952 = vmatpush1.msra.mxu0 0.0
        %1953 = vmatprep.subr.mxu0 0.0
        %1954 = vmatpush1.msra.mxu0 0.0
        %1955 = vmatprep.subr.mxu0 0.0
        %1956 = vmatpush1.msra.mxu0 0.0
        %1957 = vmatprep.subr.mxu0 0.0
        %1958 = vmatpush1.msra.mxu0 0.0
        %1959 = vmatprep.subr.mxu0 0.0
        %1960 = vmatpush1.msra.mxu0 0.0
        %1961 = vmatprep.subr.mxu0 0.0
        %1962 = vmatpush1.msra.mxu0 0.0
        %1963 = vmatprep.subr.mxu0 0.0
        %1964 = vmatpush1.msra.mxu0 0.0
        %1965 = vmatprep.subr.mxu0 0.0
        %1966 = vmatpush1.msra.mxu0 0.0
        %1967 = vmatprep.subr.mxu0 0.0
        %1968 = vmatpush1.msra.mxu0 0.0
        %1969 = vmatprep.subr.mxu0 0.0
        %1970 = vmatpush1.msra.mxu0 0.0
        %1971 = vmatprep.subr.mxu0 0.0
        %1972 = vmatpush1.msra.mxu0 0.0
        %1973 = vmatprep.subr.mxu0 0.0
        %1974 = vmatpush1.msra.mxu0 0.0
        %1975 = vmatprep.subr.mxu0 0.0
        %1976 = vmatpush1.msra.mxu0 0.0
        %1977 = vmatprep.subr.mxu0 0.0
        %1978 = vmatpush1.msra.mxu0 0.0
        %1979 = vmatprep.subr.mxu0 0.0
        %1980 = vmatpush1.msra.mxu0 0.0
        %1981 = vmatprep.subr.mxu0 0.0
        %1982 = vmatpush1.msra.mxu0 0.0
        %1983 = vmatprep.subr.mxu0 0.0
        %1984 = vmatpush1.msra.mxu0 0.0
        %1985 = vmatprep.subr.mxu0 0.0
        %1986 = vmatpush1.msra.mxu0 0.0
        %1987 = vmatprep.subr.mxu0 0.0
        %1988 = vmatpush1.msra.mxu0 0.0
        %1989 = vmatprep.subr.mxu0 0.0
        %1990 = vmatpush1.msra.mxu0 0.0
        %1991 = vmatprep.subr.mxu0 0.0
        %1992 = vmatpush1.msra.mxu0 0.0
        %1993 = vmatprep.subr.mxu0 0.0
        %1994 = vmatpush1.msra.mxu0 0.0
        %1995 = vmatprep.subr.mxu0 0.0
        %1996 = vmatpush1.msra.mxu0 0.0
        %1997 = vmatprep.subr.mxu0 0.0
        %1998 = vmatpush1.msra.mxu0 0.0
        %1999 = vmatprep.subr.mxu0 0.0
        %2000 = vmatpush1.msra.mxu0 0.0
        %2001 = vmatprep.subr.mxu0 0.0
        %2002 = vmatpush1.msra.mxu0 0.0
        %2003 = vmatprep.subr.mxu0 0.0
        %2004 = vmatpush1.msra.mxu0 0.0
        %2005 = vmatprep.subr.mxu0 0.0
        %2006 = vmatpush1.msra.mxu0 0.0
        %2007 = vmatprep.subr.mxu0 0.0
        %2008 = vmatpush1.msra.mxu0 0.0
        %2009 = vmatprep.mubr.f32.mxu0 0.0
        %2010 = vmatmul.mubr.f32.gmra.mrb[0].mxu0 %v1943
        %v2011 = vpop.f32.mrb[0].mxu0
        %v2012 = vadd.f32 0.0, %v2011
        %v2013 = vpop.f32.mrb[0].mxu0
        %2014 = vdwg.mxu0
        %v2015 = vadd.f32 %v1775, %v2012
        %v2016 = vadd.f32 %v932, %v2015
        %v2017 = vld [vmem:[%s10] sm:$0x1]
        %v2019 = vlaneseq
        %v2020 = vshrl.u32 %v2019, 7
        %v2021 = vsub.s32 0, %v2020
        %v2022 = vrot.slane %v2017, %v2021
        %v2024 = vadd.f32 %v2016, %v2022
        %v2025 = vld [vmem:[%s11] sm:$0x1]
        %v2026 = vld [vmem:[%s12] sm:$0x1]
        %v2027 = vsel %vm935, %v2024, 0.0
        %2028 = vadd.xlane.f32.xlu0 %v2027
        %v2029 = vpop.xlane.xlu0 %2028
        %v2030 = vmul.f32 %v2029, %v939
        %v2031 = vsub.f32 %v2024, %v2030
        %v2032 = vmul.f32 %v2031, %v2031
        %v2033 = vsel %vm935, %v2032, 0.0
        %2034 = vadd.xlane.f32.xlu0 %v2033
        %v2035 = vpop.xlane.xlu0 %2034
        %v2036 = vmul.f32 %v2035, %v939
        %v2037 = vadd.f32 %v2036, 1e-06
        %v2038 = vrsqrt.pop %v2037
        %v2039 = vmul.f32 %v2031, %v2038
        %v2041 = vlaneseq
        %v2042 = vshrl.u32 %v2041, 7
        %v2043 = vsub.s32 0, %v2042
        %v2044 = vrot.slane %v2025, %v2043
        %v2046 = vmul.f32 %v2039, %v2044
        %v2048 = vlaneseq
        %v2049 = vshrl.u32 %v2048, 7
        %v2050 = vsub.s32 0, %v2049
        %v2051 = vrot.slane %v2026, %v2050
        %v2053 = vadd.f32 %v2046, %v2051
        %v2054 = vld [vmem:[%s13] sm:$0xff]
        %v2055 = vld [vmem:[%s13 + $0x8] sm:$0xff]
        %v2056 = vld [vmem:[%s13 + $0x10] sm:$0xff]
        %v2057 = vld [vmem:[%s13 + $0x18] sm:$0xff]
        %v2058 = vld [vmem:[%s14] sm:$0x1]
        %v2060 = vlaneseq
        %v2061 = vshrl.u32 %v2060, 7
        %v2062 = vsub.s32 0, %v2061
        %v2063 = vrot.slane %v2058, %v2062
        %v2066 = vsel %vm975, %v2053, 0
        %2068 = vmatprep.subr.mxu0 0.0
        %2069 = vmatpush1.msra.mxu0 %v2054
        %2070 = vmatprep.subr.mxu0 0.0
        %2071 = vmatpush1.msra.mxu0 %v2055
        %2072 = vmatprep.subr.mxu0 0.0
        %2073 = vmatpush1.msra.mxu0 %v2056
        %2074 = vmatprep.subr.mxu0 0.0
        %2075 = vmatpush1.msra.mxu0 %v2057
        %2076 = vmatprep.subr.mxu0 0.0
        %2077 = vmatpush1.msra.mxu0 0.0
        %2078 = vmatprep.subr.mxu0 0.0
        %2079 = vmatpush1.msra.mxu0 0.0
        %2080 = vmatprep.subr.mxu0 0.0
        %2081 = vmatpush1.msra.mxu0 0.0
        %2082 = vmatprep.subr.mxu0 0.0
        %2083 = vmatpush1.msra.mxu0 0.0
        %2084 = vmatprep.subr.mxu0 0.0
        %2085 = vmatpush1.msra.mxu0 0.0
        %2086 = vmatprep.subr.mxu0 0.0
        %2087 = vmatpush1.msra.mxu0 0.0
        %2088 = vmatprep.subr.mxu0 0.0
        %2089 = vmatpush1.msra.mxu0 0.0
        %2090 = vmatprep.subr.mxu0 0.0
        %2091 = vmatpush1.msra.mxu0 0.0
        %2092 = vmatprep.subr.mxu0 0.0
        %2093 = vmatpush1.msra.mxu0 0.0
        %2094 = vmatprep.subr.mxu0 0.0
        %2095 = vmatpush1.msra.mxu0 0.0
        %2096 = vmatprep.subr.mxu0 0.0
        %2097 = vmatpush1.msra.mxu0 0.0
        %2098 = vmatprep.subr.mxu0 0.0
        %2099 = vmatpush1.msra.mxu0 0.0
        %2100 = vmatprep.subr.mxu0 0.0
        %2101 = vmatpush1.msra.mxu0 0.0
        %2102 = vmatprep.subr.mxu0 0.0
        %2103 = vmatpush1.msra.mxu0 0.0
        %2104 = vmatprep.subr.mxu0 0.0
        %2105 = vmatpush1.msra.mxu0 0.0
        %2106 = vmatprep.subr.mxu0 0.0
        %2107 = vmatpush1.msra.mxu0 0.0
        %2108 = vmatprep.subr.mxu0 0.0
        %2109 = vmatpush1.msra.mxu0 0.0
        %2110 = vmatprep.subr.mxu0 0.0
        %2111 = vmatpush1.msra.mxu0 0.0
        %2112 = vmatprep.subr.mxu0 0.0
        %2113 = vmatpush1.msra.mxu0 0.0
        %2114 = vmatprep.subr.mxu0 0.0
        %2115 = vmatpush1.msra.mxu0 0.0
        %2116 = vmatprep.subr.mxu0 0.0
        %2117 = vmatpush1.msra.mxu0 0.0
        %2118 = vmatprep.subr.mxu0 0.0
        %2119 = vmatpush1.msra.mxu0 0.0
        %2120 = vmatprep.subr.mxu0 0.0
        %2121 = vmatpush1.msra.mxu0 0.0
        %2122 = vmatprep.subr.mxu0 0.0
        %2123 = vmatpush1.msra.mxu0 0.0
        %2124 = vmatprep.subr.mxu0 0.0
        %2125 = vmatpush1.msra.mxu0 0.0
        %2126 = vmatprep.subr.mxu0 0.0
        %2127 = vmatpush1.msra.mxu0 0.0
        %2128 = vmatprep.subr.mxu0 0.0
        %2129 = vmatpush1.msra.mxu0 0.0
        %2130 = vmatprep.subr.mxu0 0.0
        %2131 = vmatpush1.msra.mxu0 0.0
        %2132 = vmatprep.mubr.f32.mxu0 0.0
        %2133 = vmatmul.mubr.f32.gmra.mrb[0].mxu0 %v2066
        %v2134 = vpop.f32.mrb[0].mxu0
        %v2135 = vadd.f32 %v2063, %v2134
        %v2136 = vpop.f32.mrb[0].mxu0
        %2137 = vdwg.mxu0
        %v2138 = vmul.f32 %v2135, 0.5
        %v2139 = vmul.f32 %v2135, 0.70710677
        %vm2140 = vcmp.lt.f32.partialorder %v2139, 0.0
        %v2141 = vsel %vm2140, -1.0, 1.0
        %v2142 = vand.u32 2147483647, %v2139
        %v2143 = vmul.f32 %v2142, 0.3275911
        %v2144 = vadd.f32 %v2143, 1.0
        %v2145 = vrcp.pop %v2144
        %v2146 = vmul.f32 1.0, %v2145
        %v2147 = vmul.f32 %v2146, 1.0614054
        %v2148 = vadd.f32 %v2147, -1.4531521
        %v2149 = vmul.f32 %v2148, %v2146
        %v2150 = vadd.f32 %v2149, 1.4214138
        %v2151 = vmul.f32 %v2150, %v2146
        %v2152 = vadd.f32 %v2151, -0.28449672
        %v2153 = vmul.f32 %v2152, %v2146
        %v2154 = vadd.f32 %v2153, 0.2548296
        %v2155 = vmul.f32 %v2154, %v2146
        %v2156 = vsub.f32 0.0, %v2142
        %v2157 = vmul.f32 %v2156, %v2142
        %v2158 = vmul.f32 %v2157, 1.442695
        %v2159 = vpow.pop %v2158
        %v2160 = vmul.f32 %v2155, %v2159
        %v2161 = vsub.f32 1.0, %v2160
        %v2162 = vmul.f32 %v2141, %v2161
        %v2163 = vadd.f32 %v2162, 1.0
        %v2164 = vmul.f32 %v2138, %v2163
        %v2165 = vld [vmem:[%s15] sm:$0xff]
        %v2166 = vld [vmem:[%s15 + $0x8] sm:$0xff]
        %v2167 = vld [vmem:[%s15 + $0x10] sm:$0xff]
        %v2168 = vld [vmem:[%s15 + $0x18] sm:$0xff]
        %v2169 = vld [vmem:[%s15 + $0x20] sm:$0xff]
        %v2170 = vld [vmem:[%s15 + $0x28] sm:$0xff]
        %v2171 = vld [vmem:[%s15 + $0x30] sm:$0xff]
        %v2172 = vld [vmem:[%s15 + $0x38] sm:$0xff]
        %vm2173 = vcmask 523264
        %v2175 = vsel %vm2173, %v2164, 0
        %2177 = vmatprep.subr.mxu0 0.0
        %2178 = vmatpush1.msra.mxu0 %v2165
        %2179 = vmatprep.subr.mxu0 0.0
        %2180 = vmatpush1.msra.mxu0 %v2166
        %2181 = vmatprep.subr.mxu0 0.0
        %2182 = vmatpush1.msra.mxu0 %v2167
        %2183 = vmatprep.subr.mxu0 0.0
        %2184 = vmatpush1.msra.mxu0 %v2168
        %2185 = vmatprep.subr.mxu0 0.0
        %2186 = vmatpush1.msra.mxu0 %v2169
        %2187 = vmatprep.subr.mxu0 0.0
        %2188 = vmatpush1.msra.mxu0 %v2170
        %2189 = vmatprep.subr.mxu0 0.0
        %2190 = vmatpush1.msra.mxu0 %v2171
        %2191 = vmatprep.subr.mxu0 0.0
        %2192 = vmatpush1.msra.mxu0 %v2172
        %2193 = vmatprep.subr.mxu0 0.0
        %2194 = vmatpush1.msra.mxu0 0.0
        %2195 = vmatprep.subr.mxu0 0.0
        %2196 = vmatpush1.msra.mxu0 0.0
        %2197 = vmatprep.subr.mxu0 0.0
        %2198 = vmatpush1.msra.mxu0 0.0
        %2199 = vmatprep.subr.mxu0 0.0
        %2200 = vmatpush1.msra.mxu0 0.0
        %2201 = vmatprep.subr.mxu0 0.0
        %2202 = vmatpush1.msra.mxu0 0.0
        %2203 = vmatprep.subr.mxu0 0.0
        %2204 = vmatpush1.msra.mxu0 0.0
        %2205 = vmatprep.subr.mxu0 0.0
        %2206 = vmatpush1.msra.mxu0 0.0
        %2207 = vmatprep.subr.mxu0 0.0
        %2208 = vmatpush1.msra.mxu0 0.0
        %2209 = vmatprep.subr.mxu0 0.0
        %2210 = vmatpush1.msra.mxu0 0.0
        %2211 = vmatprep.subr.mxu0 0.0
        %2212 = vmatpush1.msra.mxu0 0.0
        %2213 = vmatprep.subr.mxu0 0.0
        %2214 = vmatpush1.msra.mxu0 0.0
        %2215 = vmatprep.subr.mxu0 0.0
        %2216 = vmatpush1.msra.mxu0 0.0
        %2217 = vmatprep.subr.mxu0 0.0
        %2218 = vmatpush1.msra.mxu0 0.0
        %2219 = vmatprep.subr.mxu0 0.0
        %2220 = vmatpush1.msra.mxu0 0.0
        %2221 = vmatprep.subr.mxu0 0.0
        %2222 = vmatpush1.msra.mxu0 0.0
        %2223 = vmatprep.subr.mxu0 0.0
        %2224 = vmatpush1.msra.mxu0 0.0
        %2225 = vmatprep.subr.mxu0 0.0
        %2226 = vmatpush1.msra.mxu0 0.0
        %2227 = vmatprep.subr.mxu0 0.0
        %2228 = vmatpush1.msra.mxu0 0.0
        %2229 = vmatprep.subr.mxu0 0.0
        %2230 = vmatpush1.msra.mxu0 0.0
        %2231 = vmatprep.subr.mxu0 0.0
        %2232 = vmatpush1.msra.mxu0 0.0
        %2233 = vmatprep.subr.mxu0 0.0
        %2234 = vmatpush1.msra.mxu0 0.0
        %2235 = vmatprep.subr.mxu0 0.0
        %2236 = vmatpush1.msra.mxu0 0.0
        %2237 = vmatprep.subr.mxu0 0.0
        %2238 = vmatpush1.msra.mxu0 0.0
        %2239 = vmatprep.subr.mxu0 0.0
        %2240 = vmatpush1.msra.mxu0 0.0
        %2241 = vmatprep.mubr.f32.mxu0 0.0
        %2242 = vmatmul.mubr.f32.gmra.mrb[0].mxu0 %v2175
        %v2243 = vpop.f32.mrb[0].mxu0
        %v2244 = vadd.f32 0.0, %v2243
        %v2245 = vpop.f32.mrb[0].mxu0
        %2246 = vdwg.mxu0
        %v2247 = vadd.f32 %v2024, %v2244
        %v2248 = vld [vmem:[%s16] sm:$0x1]
        %v2250 = vlaneseq
        %v2251 = vshrl.u32 %v2250, 7
        %v2252 = vsub.s32 0, %v2251
        %v2253 = vrot.slane %v2248, %v2252
        %v2255 = vadd.f32 %v2247, %v2253
        %s2256 = scalar_lea.vmem %s5, 1
        %v2257 = vld [vmem:[%s2256] sm:$0x1]
        %s2258 = scalar_lea.vmem %s6, 1
        %v2259 = vld [vmem:[%s2258] sm:$0x1]
        %v2260 = vsel %vm935, %v2255, 0.0
        %2261 = vadd.xlane.f32.xlu0 %v2260
        %v2262 = vpop.xlane.xlu0 %2261
        %v2263 = vmul.f32 %v2262, %v939
        %v2264 = vsub.f32 %v2255, %v2263
        %v2265 = vmul.f32 %v2264, %v2264
        %v2266 = vsel %vm935, %v2265, 0.0
        %2267 = vadd.xlane.f32.xlu0 %v2266
        %v2268 = vpop.xlane.xlu0 %2267
        %v2269 = vmul.f32 %v2268, %v939
        %v2270 = vadd.f32 %v2269, 1e-06
        %v2271 = vrsqrt.pop %v2270
        %v2272 = vmul.f32 %v2264, %v2271
        %v2274 = vlaneseq
        %v2275 = vshrl.u32 %v2274, 7
        %v2276 = vsub.s32 0, %v2275
        %v2277 = vrot.slane %v2257, %v2276
        %v2279 = vmul.f32 %v2272, %v2277
        %v2281 = vlaneseq
        %v2282 = vshrl.u32 %v2281, 7
        %v2283 = vsub.s32 0, %v2282
        %v2284 = vrot.slane %v2259, %v2283
        %v2286 = vadd.f32 %v2279, %v2284
        %s2287 = scalar_lea.vmem %s7, 32
        %v2288 = vld [vmem:[%s2287] sm:$0xff]
        %v2289 = vld [vmem:[%s2287 + $0x8] sm:$0xff]
        %v2290 = vld [vmem:[%s2287 + $0x10] sm:$0xff]
        %v2291 = vld [vmem:[%s2287 + $0x18] sm:$0xff]
        %s2292 = scalar_lea.vmem %s8, 1
        %v2293 = vld [vmem:[%s2292] sm:$0x1]
        %v2295 = vlaneseq
        %v2296 = vshrl.u32 %v2295, 7
        %v2297 = vsub.s32 0, %v2296
        %v2298 = vrot.slane %v2293, %v2297
        %v2301 = vsel %vm975, %v2286, 0
        %2303 = vmatprep.subr.mxu0 0.0
        %2304 = vmatpush1.msra.mxu0 %v2288
        %2305 = vmatprep.subr.mxu0 0.0
        %2306 = vmatpush1.msra.mxu0 %v2289
        %2307 = vmatprep.subr.mxu0 0.0
        %2308 = vmatpush1.msra.mxu0 %v2290
        %2309 = vmatprep.subr.mxu0 0.0
        %2310 = vmatpush1.msra.mxu0 %v2291
        %2311 = vmatprep.subr.mxu0 0.0
        %2312 = vmatpush1.msra.mxu0 0.0
        %2313 = vmatprep.subr.mxu0 0.0
        %2314 = vmatpush1.msra.mxu0 0.0
        %2315 = vmatprep.subr.mxu0 0.0
        %2316 = vmatpush1.msra.mxu0 0.0
        %2317 = vmatprep.subr.mxu0 0.0
        %2318 = vmatpush1.msra.mxu0 0.0
        %2319 = vmatprep.subr.mxu0 0.0
        %2320 = vmatpush1.msra.mxu0 0.0
        %2321 = vmatprep.subr.mxu0 0.0
        %2322 = vmatpush1.msra.mxu0 0.0
        %2323 = vmatprep.subr.mxu0 0.0
        %2324 = vmatpush1.msra.mxu0 0.0
        %2325 = vmatprep.subr.mxu0 0.0
        %2326 = vmatpush1.msra.mxu0 0.0
        %2327 = vmatprep.subr.mxu0 0.0
        %2328 = vmatpush1.msra.mxu0 0.0
        %2329 = vmatprep.subr.mxu0 0.0
        %2330 = vmatpush1.msra.mxu0 0.0
        %2331 = vmatprep.subr.mxu0 0.0
        %2332 = vmatpush1.msra.mxu0 0.0
        %2333 = vmatprep.subr.mxu0 0.0
        %2334 = vmatpush1.msra.mxu0 0.0
        %2335 = vmatprep.subr.mxu0 0.0
        %2336 = vmatpush1.msra.mxu0 0.0
        %2337 = vmatprep.subr.mxu0 0.0
        %2338 = vmatpush1.msra.mxu0 0.0
        %2339 = vmatprep.subr.mxu0 0.0
        %2340 = vmatpush1.msra.mxu0 0.0
        %2341 = vmatprep.subr.mxu0 0.0
        %2342 = vmatpush1.msra.mxu0 0.0
        %2343 = vmatprep.subr.mxu0 0.0
        %2344 = vmatpush1.msra.mxu0 0.0
        %2345 = vmatprep.subr.mxu0 0.0
        %2346 = vmatpush1.msra.mxu0 0.0
        %2347 = vmatprep.subr.mxu0 0.0
        %2348 = vmatpush1.msra.mxu0 0.0
        %2349 = vmatprep.subr.mxu0 0.0
        %2350 = vmatpush1.msra.mxu0 0.0
        %2351 = vmatprep.subr.mxu0 0.0
        %2352 = vmatpush1.msra.mxu0 0.0
        %2353 = vmatprep.subr.mxu0 0.0
        %2354 = vmatpush1.msra.mxu0 0.0
        %2355 = vmatprep.subr.mxu0 0.0
        %2356 = vmatpush1.msra.mxu0 0.0
        %2357 = vmatprep.subr.mxu0 0.0
        %2358 = vmatpush1.msra.mxu0 0.0
        %2359 = vmatprep.subr.mxu0 0.0
        %2360 = vmatpush1.msra.mxu0 0.0
        %2361 = vmatprep.subr.mxu0 0.0
        %2362 = vmatpush1.msra.mxu0 0.0
        %2363 = vmatprep.subr.mxu0 0.0
        %2364 = vmatpush1.msra.mxu0 0.0
        %2365 = vmatprep.subr.mxu0 0.0
        %2366 = vmatpush1.msra.mxu0 0.0
        %2367 = vmatprep.mubr.f32.mxu0 0.0
        %2368 = vmatmul.mubr.f32.gmra.mrb[0].mxu0 %v2301
        %v2369 = vpop.f32.mrb[0].mxu0
        %v2370 = vadd.f32 %v2298, %v2369
        %v2371 = vpop.f32.mrb[0].mxu0
        %2372 = vdwg.mxu0
        %v2373 = vmul.f32 %v2370, 0.35355338
        %s2374 = scalar_lea.vmem %s9, 32
        %v2375 = vld [vmem:[%s2374] sm:$0xff]
        %v2376 = vld [vmem:[%s2374 + $0x8] sm:$0xff]
        %v2377 = vld [vmem:[%s2374 + $0x10] sm:$0xff]
        %v2378 = vld [vmem:[%s2374 + $0x18] sm:$0xff]
        %2380 = vrot.lane.b32.xlu0 %v2370, 96
        %v2381 = vpop.permute.xlu0 %2380
        %v2383 = vsel %vm1057, %v2373, 0
        %v2385 = vsel %vm1057, %v2381, 0
        %2387 = vmatprep.subr.mxu0 0.0
        %2388 = vmatpush1.xpose.msra.mxu0 %v2385
        %2389 = vmatprep.subr.mxu0 0.0
        %2390 = vmatpush1.xpose.msra.mxu0 0.0
        %2391 = vmatprep.subr.mxu0 0.0
        %2392 = vmatpush1.xpose.msra.mxu0 0.0
        %2393 = vmatprep.subr.mxu0 0.0
        %2394 = vmatpush1.xpose.msra.mxu0 0.0
        %2395 = vmatprep.subr.mxu0 0.0
        %2396 = vmatpush1.xpose.msra.mxu0 0.0
        %2397 = vmatprep.subr.mxu0 0.0
        %2398 = vmatpush1.xpose.msra.mxu0 0.0
        %2399 = vmatprep.subr.mxu0 0.0
        %2400 = vmatpush1.xpose.msra.mxu0 0.0
        %2401 = vmatprep.subr.mxu0 0.0
        %2402 = vmatpush1.xpose.msra.mxu0 0.0
        %2403 = vmatprep.subr.mxu0 0.0
        %2404 = vmatpush1.xpose.msra.mxu0 0.0
        %2405 = vmatprep.subr.mxu0 0.0
        %2406 = vmatpush1.xpose.msra.mxu0 0.0
        %2407 = vmatprep.subr.mxu0 0.0
        %2408 = vmatpush1.xpose.msra.mxu0 0.0
        %2409 = vmatprep.subr.mxu0 0.0
        %2410 = vmatpush1.xpose.msra.mxu0 0.0
        %2411 = vmatprep.subr.mxu0 0.0
        %2412 = vmatpush1.xpose.msra.mxu0 0.0
        %2413 = vmatprep.subr.mxu0 0.0
        %2414 = vmatpush1.xpose.msra.mxu0 0.0
        %2415 = vmatprep.subr.mxu0 0.0
        %2416 = vmatpush1.xpose.msra.mxu0 0.0
        %2417 = vmatprep.subr.mxu0 0.0
        %2418 = vmatpush1.xpose.msra.mxu0 0.0
        %2419 = vmatprep.subr.mxu0 0.0
        %2420 = vmatpush1.xpose.msra.mxu0 0.0
        %2421 = vmatprep.subr.mxu0 0.0
        %2422 = vmatpush1.xpose.msra.mxu0 0.0
        %2423 = vmatprep.subr.mxu0 0.0
        %2424 = vmatpush1.xpose.msra.mxu0 0.0
        %2425 = vmatprep.subr.mxu0 0.0
        %2426 = vmatpush1.xpose.msra.mxu0 0.0
        %2427 = vmatprep.subr.mxu0 0.0
        %2428 = vmatpush1.xpose.msra.mxu0 0.0
        %2429 = vmatprep.subr.mxu0 0.0
        %2430 = vmatpush1.xpose.msra.mxu0 0.0
        %2431 = vmatprep.subr.mxu0 0.0
        %2432 = vmatpush1.xpose.msra.mxu0 0.0
        %2433 = vmatprep.subr.mxu0 0.0
        %2434 = vmatpush1.xpose.msra.mxu0 0.0
        %2435 = vmatprep.subr.mxu0 0.0
        %2436 = vmatpush1.xpose.msra.mxu0 0.0
        %2437 = vmatprep.subr.mxu0 0.0
        %2438 = vmatpush1.xpose.msra.mxu0 0.0
        %2439 = vmatprep.subr.mxu0 0.0
        %2440 = vmatpush1.xpose.msra.mxu0 0.0
        %2441 = vmatprep.subr.mxu0 0.0
        %2442 = vmatpush1.xpose.msra.mxu0 0.0
        %2443 = vmatprep.subr.mxu0 0.0
        %2444 = vmatpush1.xpose.msra.mxu0 0.0
        %2445 = vmatprep.subr.mxu0 0.0
        %2446 = vmatpush1.xpose.msra.mxu0 0.0
        %2447 = vmatprep.subr.mxu0 0.0
        %2448 = vmatpush1.xpose.msra.mxu0 0.0
        %2449 = vmatprep.subr.mxu0 0.0
        %2450 = vmatpush1.xpose.msra.mxu0 0.0
        %2451 = vmatprep.mubr.f32.mxu0 0.0
        %2452 = vmatmul.mubr.f32.gmra.mrb[0].mxu0 %v2383
        %v2453 = vpop.f32.mrb[0].mxu0
        %v2454 = vadd.f32 0.0, %v2453
        %v2455 = vpop.f32.mrb[0].mxu0
        %2456 = vdwg.mxu0
        %v2457 = vsel %vm1133, %v2454, -inf
        %2458 = vmax.xlane.f32.xlu0 %v2457
        %v2459 = vpop.xlane.xlu0 %2458
        %v2460 = vsub.f32 %v2454, %v2459
        %v2461 = vmul.f32 %v2460, 1.442695
        %v2462 = vpow.pop %v2461
        %v2463 = vsel %vm1133, %v2462, 0.0
        %2464 = vadd.xlane.f32.xlu0 %v2463
        %v2465 = vpop.xlane.xlu0 %2464
        %v2466 = vrcp.pop %v2465
        %v2467 = vmul.f32 %v2462, %v2466
        %2468 = vrot.lane.b32.xlu0 %v2370, 64
        %v2469 = vpop.permute.xlu0 %2468
        %v2471 = vsel %vm1147, %v2467, 0
        %v2473 = vsel %vm1151, %v2469, 0
        %2475 = vmatprep.subr.mxu0 0.0
        %2476 = vmatpush1.msra.mxu0 %v2473
        %2477 = vmatprep.subr.mxu0 0.0
        %2478 = vmatpush1.msra.mxu0 0.0
        %2479 = vmatprep.subr.mxu0 0.0
        %2480 = vmatpush1.msra.mxu0 0.0
        %2481 = vmatprep.subr.mxu0 0.0
        %2482 = vmatpush1.msra.mxu0 0.0
        %2483 = vmatprep.subr.mxu0 0.0
        %2484 = vmatpush1.msra.mxu0 0.0
        %2485 = vmatprep.subr.mxu0 0.0
        %2486 = vmatpush1.msra.mxu0 0.0
        %2487 = vmatprep.subr.mxu0 0.0
        %2488 = vmatpush1.msra.mxu0 0.0
        %2489 = vmatprep.subr.mxu0 0.0
        %2490 = vmatpush1.msra.mxu0 0.0
        %2491 = vmatprep.subr.mxu0 0.0
        %2492 = vmatpush1.msra.mxu0 0.0
        %2493 = vmatprep.subr.mxu0 0.0
        %2494 = vmatpush1.msra.mxu0 0.0
        %2495 = vmatprep.subr.mxu0 0.0
        %2496 = vmatpush1.msra.mxu0 0.0
        %2497 = vmatprep.subr.mxu0 0.0
        %2498 = vmatpush1.msra.mxu0 0.0
        %2499 = vmatprep.subr.mxu0 0.0
        %2500 = vmatpush1.msra.mxu0 0.0
        %2501 = vmatprep.subr.mxu0 0.0
        %2502 = vmatpush1.msra.mxu0 0.0
        %2503 = vmatprep.subr.mxu0 0.0
        %2504 = vmatpush1.msra.mxu0 0.0
        %2505 = vmatprep.subr.mxu0 0.0
        %2506 = vmatpush1.msra.mxu0 0.0
        %2507 = vmatprep.subr.mxu0 0.0
        %2508 = vmatpush1.msra.mxu0 0.0
        %2509 = vmatprep.subr.mxu0 0.0
        %2510 = vmatpush1.msra.mxu0 0.0
        %2511 = vmatprep.subr.mxu0 0.0
        %2512 = vmatpush1.msra.mxu0 0.0
        %2513 = vmatprep.subr.mxu0 0.0
        %2514 = vmatpush1.msra.mxu0 0.0
        %2515 = vmatprep.subr.mxu0 0.0
        %2516 = vmatpush1.msra.mxu0 0.0
        %2517 = vmatprep.subr.mxu0 0.0
        %2518 = vmatpush1.msra.mxu0 0.0
        %2519 = vmatprep.subr.mxu0 0.0
        %2520 = vmatpush1.msra.mxu0 0.0
        %2521 = vmatprep.subr.mxu0 0.0
        %2522 = vmatpush1.msra.mxu0 0.0
        %2523 = vmatprep.subr.mxu0 0.0
        %2524 = vmatpush1.msra.mxu0 0.0
        %2525 = vmatprep.subr.mxu0 0.0
        %2526 = vmatpush1.msra.mxu0 0.0
        %2527 = vmatprep.subr.mxu0 0.0
        %2528 = vmatpush1.msra.mxu0 0.0
        %2529 = vmatprep.subr.mxu0 0.0
        %2530 = vmatpush1.msra.mxu0 0.0
        %2531 = vmatprep.subr.mxu0 0.0
        %2532 = vmatpush1.msra.mxu0 0.0
        %2533 = vmatprep.subr.mxu0 0.0
        %2534 = vmatpush1.msra.mxu0 0.0
        %2535 = vmatprep.subr.mxu0 0.0
        %2536 = vmatpush1.msra.mxu0 0.0
        %2537 = vmatprep.subr.mxu0 0.0
        %2538 = vmatpush1.msra.mxu0 0.0
        %2539 = vmatprep.mubr.f32.mxu0 0.0
        %2540 = vmatmul.mubr.f32.gmra.mrb[0].mxu0 %v2471
        %v2541 = vpop.f32.mrb[0].mxu0
        %v2542 = vadd.f32 0.0, %v2541
        %v2543 = vpop.f32.mrb[0].mxu0
        %2544 = vdwg.mxu0
        %2545 = vrot.lane.b32.xlu0 %v2373, 120
        %v2546 = vpop.permute.xlu0 %2545
        %2547 = vrot.lane.b32.xlu0 %v2370, 88
        %v2548 = vpop.permute.xlu0 %2547
        %v2549 = vsel %vm1057, %v2546, 0
        %v2551 = vsel %vm1057, %v2548, 0
        %2553 = vmatprep.subr.mxu0 0.0
        %2554 = vmatpush1.xpose.msra.mxu0 %v2551
        %2555 = vmatprep.subr.mxu0 0.0
        %2556 = vmatpush1.xpose.msra.mxu0 0.0
        %2557 = vmatprep.subr.mxu0 0.0
        %2558 = vmatpush1.xpose.msra.mxu0 0.0
        %2559 = vmatprep.subr.mxu0 0.0
        %2560 = vmatpush1.xpose.msra.mxu0 0.0
        %2561 = vmatprep.subr.mxu0 0.0
        %2562 = vmatpush1.xpose.msra.mxu0 0.0
        %2563 = vmatprep.subr.mxu0 0.0
        %2564 = vmatpush1.xpose.msra.mxu0 0.0
        %2565 = vmatprep.subr.mxu0 0.0
        %2566 = vmatpush1.xpose.msra.mxu0 0.0
        %2567 = vmatprep.subr.mxu0 0.0
        %2568 = vmatpush1.xpose.msra.mxu0 0.0
        %2569 = vmatprep.subr.mxu0 0.0
        %2570 = vmatpush1.xpose.msra.mxu0 0.0
        %2571 = vmatprep.subr.mxu0 0.0
        %2572 = vmatpush1.xpose.msra.mxu0 0.0
        %2573 = vmatprep.subr.mxu0 0.0
        %2574 = vmatpush1.xpose.msra.mxu0 0.0
        %2575 = vmatprep.subr.mxu0 0.0
        %2576 = vmatpush1.xpose.msra.mxu0 0.0
        %2577 = vmatprep.subr.mxu0 0.0
        %2578 = vmatpush1.xpose.msra.mxu0 0.0
        %2579 = vmatprep.subr.mxu0 0.0
        %2580 = vmatpush1.xpose.msra.mxu0 0.0
        %2581 = vmatprep.subr.mxu0 0.0
        %2582 = vmatpush1.xpose.msra.mxu0 0.0
        %2583 = vmatprep.subr.mxu0 0.0
        %2584 = vmatpush1.xpose.msra.mxu0 0.0
        %2585 = vmatprep.subr.mxu0 0.0
        %2586 = vmatpush1.xpose.msra.mxu0 0.0
        %2587 = vmatprep.subr.mxu0 0.0
        %2588 = vmatpush1.xpose.msra.mxu0 0.0
        %2589 = vmatprep.subr.mxu0 0.0
        %2590 = vmatpush1.xpose.msra.mxu0 0.0
        %2591 = vmatprep.subr.mxu0 0.0
        %2592 = vmatpush1.xpose.msra.mxu0 0.0
        %2593 = vmatprep.subr.mxu0 0.0
        %2594 = vmatpush1.xpose.msra.mxu0 0.0
        %2595 = vmatprep.subr.mxu0 0.0
        %2596 = vmatpush1.xpose.msra.mxu0 0.0
        %2597 = vmatprep.subr.mxu0 0.0
        %2598 = vmatpush1.xpose.msra.mxu0 0.0
        %2599 = vmatprep.subr.mxu0 0.0
        %2600 = vmatpush1.xpose.msra.mxu0 0.0
        %2601 = vmatprep.subr.mxu0 0.0
        %2602 = vmatpush1.xpose.msra.mxu0 0.0
        %2603 = vmatprep.subr.mxu0 0.0
        %2604 = vmatpush1.xpose.msra.mxu0 0.0
        %2605 = vmatprep.subr.mxu0 0.0
        %2606 = vmatpush1.xpose.msra.mxu0 0.0
        %2607 = vmatprep.subr.mxu0 0.0
        %2608 = vmatpush1.xpose.msra.mxu0 0.0
        %2609 = vmatprep.subr.mxu0 0.0
        %2610 = vmatpush1.xpose.msra.mxu0 0.0
        %2611 = vmatprep.subr.mxu0 0.0
        %2612 = vmatpush1.xpose.msra.mxu0 0.0
        %2613 = vmatprep.subr.mxu0 0.0
        %2614 = vmatpush1.xpose.msra.mxu0 0.0
        %2615 = vmatprep.subr.mxu0 0.0
        %2616 = vmatpush1.xpose.msra.mxu0 0.0
        %2617 = vmatprep.mubr.f32.mxu0 0.0
        %2618 = vmatmul.mubr.f32.gmra.mrb[0].mxu0 %v2549
        %v2619 = vpop.f32.mrb[0].mxu0
        %v2620 = vadd.f32 0.0, %v2619
        %v2621 = vpop.f32.mrb[0].mxu0
        %2622 = vdwg.mxu0
        %v2623 = vsel %vm1133, %v2620, -inf
        %2624 = vmax.xlane.f32.xlu0 %v2623
        %v2625 = vpop.xlane.xlu0 %2624
        %v2626 = vsub.f32 %v2620, %v2625
        %v2627 = vmul.f32 %v2626, 1.442695
        %v2628 = vpow.pop %v2627
        %v2629 = vsel %vm1133, %v2628, 0.0
        %2630 = vadd.xlane.f32.xlu0 %v2629
        %v2631 = vpop.xlane.xlu0 %2630
        %v2632 = vrcp.pop %v2631
        %v2633 = vmul.f32 %v2628, %v2632
        %2634 = vrot.lane.b32.xlu0 %v2370, 56
        %v2635 = vpop.permute.xlu0 %2634
        %v2637 = vsel %vm1147, %v2633, 0
        %v2639 = vsel %vm1151, %v2635, 0
        %2641 = vmatprep.subr.mxu0 0.0
        %2642 = vmatpush1.msra.mxu0 %v2639
        %2643 = vmatprep.subr.mxu0 0.0
        %2644 = vmatpush1.msra.mxu0 0.0
        %2645 = vmatprep.subr.mxu0 0.0
        %2646 = vmatpush1.msra.mxu0 0.0
        %2647 = vmatprep.subr.mxu0 0.0
        %2648 = vmatpush1.msra.mxu0 0.0
        %2649 = vmatprep.subr.mxu0 0.0
        %2650 = vmatpush1.msra.mxu0 0.0
        %2651 = vmatprep.subr.mxu0 0.0
        %2652 = vmatpush1.msra.mxu0 0.0
        %2653 = vmatprep.subr.mxu0 0.0
        %2654 = vmatpush1.msra.mxu0 0.0
        %2655 = vmatprep.subr.mxu0 0.0
        %2656 = vmatpush1.msra.mxu0 0.0
        %2657 = vmatprep.subr.mxu0 0.0
        %2658 = vmatpush1.msra.mxu0 0.0
        %2659 = vmatprep.subr.mxu0 0.0
        %2660 = vmatpush1.msra.mxu0 0.0
        %2661 = vmatprep.subr.mxu0 0.0
        %2662 = vmatpush1.msra.mxu0 0.0
        %2663 = vmatprep.subr.mxu0 0.0
        %2664 = vmatpush1.msra.mxu0 0.0
        %2665 = vmatprep.subr.mxu0 0.0
        %2666 = vmatpush1.msra.mxu0 0.0
        %2667 = vmatprep.subr.mxu0 0.0
        %2668 = vmatpush1.msra.mxu0 0.0
        %2669 = vmatprep.subr.mxu0 0.0
        %2670 = vmatpush1.msra.mxu0 0.0
        %2671 = vmatprep.subr.mxu0 0.0
        %2672 = vmatpush1.msra.mxu0 0.0
        %2673 = vmatprep.subr.mxu0 0.0
        %2674 = vmatpush1.msra.mxu0 0.0
        %2675 = vmatprep.subr.mxu0 0.0
        %2676 = vmatpush1.msra.mxu0 0.0
        %2677 = vmatprep.subr.mxu0 0.0
        %2678 = vmatpush1.msra.mxu0 0.0
        %2679 = vmatprep.subr.mxu0 0.0
        %2680 = vmatpush1.msra.mxu0 0.0
        %2681 = vmatprep.subr.mxu0 0.0
        %2682 = vmatpush1.msra.mxu0 0.0
        %2683 = vmatprep.subr.mxu0 0.0
        %2684 = vmatpush1.msra.mxu0 0.0
        %2685 = vmatprep.subr.mxu0 0.0
        %2686 = vmatpush1.msra.mxu0 0.0
        %2687 = vmatprep.subr.mxu0 0.0
        %2688 = vmatpush1.msra.mxu0 0.0
        %2689 = vmatprep.subr.mxu0 0.0
        %2690 = vmatpush1.msra.mxu0 0.0
        %2691 = vmatprep.subr.mxu0 0.0
        %2692 = vmatpush1.msra.mxu0 0.0
        %2693 = vmatprep.subr.mxu0 0.0
        %2694 = vmatpush1.msra.mxu0 0.0
        %2695 = vmatprep.subr.mxu0 0.0
        %2696 = vmatpush1.msra.mxu0 0.0
        %2697 = vmatprep.subr.mxu0 0.0
        %2698 = vmatpush1.msra.mxu0 0.0
        %2699 = vmatprep.subr.mxu0 0.0
        %2700 = vmatpush1.msra.mxu0 0.0
        %2701 = vmatprep.subr.mxu0 0.0
        %2702 = vmatpush1.msra.mxu0 0.0
        %2703 = vmatprep.subr.mxu0 0.0
        %2704 = vmatpush1.msra.mxu0 0.0
        %2705 = vmatprep.mubr.f32.mxu0 0.0
        %2706 = vmatmul.mubr.f32.gmra.mrb[0].mxu0 %v2637
        %v2707 = vpop.f32.mrb[0].mxu0
        %v2708 = vadd.f32 0.0, %v2707
        %v2709 = vpop.f32.mrb[0].mxu0
        %2710 = vdwg.mxu0
        %v2712 = vsel %vm1057, %v2708, 0
        %2714 = vmatprep.subr.mxu0 0.0
        %2715 = vmatpush1.msra.mxu0 %v2376
        %2716 = vmatprep.subr.mxu0 0.0
        %2717 = vmatpush1.msra.mxu0 0.0
        %2718 = vmatprep.subr.mxu0 0.0
        %2719 = vmatpush1.msra.mxu0 0.0
        %2720 = vmatprep.subr.mxu0 0.0
        %2721 = vmatpush1.msra.mxu0 0.0
        %2722 = vmatprep.subr.mxu0 0.0
        %2723 = vmatpush1.msra.mxu0 0.0
        %2724 = vmatprep.subr.mxu0 0.0
        %2725 = vmatpush1.msra.mxu0 0.0
        %2726 = vmatprep.subr.mxu0 0.0
        %2727 = vmatpush1.msra.mxu0 0.0
        %2728 = vmatprep.subr.mxu0 0.0
        %2729 = vmatpush1.msra.mxu0 0.0
        %2730 = vmatprep.subr.mxu0 0.0
        %2731 = vmatpush1.msra.mxu0 0.0
        %2732 = vmatprep.subr.mxu0 0.0
        %2733 = vmatpush1.msra.mxu0 0.0
        %2734 = vmatprep.subr.mxu0 0.0
        %2735 = vmatpush1.msra.mxu0 0.0
        %2736 = vmatprep.subr.mxu0 0.0
        %2737 = vmatpush1.msra.mxu0 0.0
        %2738 = vmatprep.subr.mxu0 0.0
        %2739 = vmatpush1.msra.mxu0 0.0
        %2740 = vmatprep.subr.mxu0 0.0
        %2741 = vmatpush1.msra.mxu0 0.0
        %2742 = vmatprep.subr.mxu0 0.0
        %2743 = vmatpush1.msra.mxu0 0.0
        %2744 = vmatprep.subr.mxu0 0.0
        %2745 = vmatpush1.msra.mxu0 0.0
        %2746 = vmatprep.subr.mxu0 0.0
        %2747 = vmatpush1.msra.mxu0 0.0
        %2748 = vmatprep.subr.mxu0 0.0
        %2749 = vmatpush1.msra.mxu0 0.0
        %2750 = vmatprep.subr.mxu0 0.0
        %2751 = vmatpush1.msra.mxu0 0.0
        %2752 = vmatprep.subr.mxu0 0.0
        %2753 = vmatpush1.msra.mxu0 0.0
        %2754 = vmatprep.subr.mxu0 0.0
        %2755 = vmatpush1.msra.mxu0 0.0
        %2756 = vmatprep.subr.mxu0 0.0
        %2757 = vmatpush1.msra.mxu0 0.0
        %2758 = vmatprep.subr.mxu0 0.0
        %2759 = vmatpush1.msra.mxu0 0.0
        %2760 = vmatprep.subr.mxu0 0.0
        %2761 = vmatpush1.msra.mxu0 0.0
        %2762 = vmatprep.subr.mxu0 0.0
        %2763 = vmatpush1.msra.mxu0 0.0
        %2764 = vmatprep.subr.mxu0 0.0
        %2765 = vmatpush1.msra.mxu0 0.0
        %2766 = vmatprep.subr.mxu0 0.0
        %2767 = vmatpush1.msra.mxu0 0.0
        %2768 = vmatprep.subr.mxu0 0.0
        %2769 = vmatpush1.msra.mxu0 0.0
        %2770 = vmatprep.subr.mxu0 0.0
        %2771 = vmatpush1.msra.mxu0 0.0
        %2772 = vmatprep.subr.mxu0 0.0
        %2773 = vmatpush1.msra.mxu0 0.0
        %2774 = vmatprep.subr.mxu0 0.0
        %2775 = vmatpush1.msra.mxu0 0.0
        %2776 = vmatprep.subr.mxu0 0.0
        %2777 = vmatpush1.msra.mxu0 0.0
        %2778 = vmatprep.mubr.f32.mxu0 0.0
        %2779 = vmatmul.mubr.f32.gmra.mrb[0].mxu0 %v2712
        %v2780 = vpop.f32.mrb[0].mxu0
        %v2781 = vadd.f32 0.0, %v2780
        %v2782 = vpop.f32.mrb[0].mxu0
        %2783 = vdwg.mxu0
        %v2785 = vsel %vm1057, %v2542, 0
        %2787 = vmatprep.subr.mxu0 0.0
        %2788 = vmatpush1.msra.mxu0 %v2375
        %2789 = vmatprep.subr.mxu0 0.0
        %2790 = vmatpush1.msra.mxu0 0.0
        %2791 = vmatprep.subr.mxu0 0.0
        %2792 = vmatpush1.msra.mxu0 0.0
        %2793 = vmatprep.subr.mxu0 0.0
        %2794 = vmatpush1.msra.mxu0 0.0
        %2795 = vmatprep.subr.mxu0 0.0
        %2796 = vmatpush1.msra.mxu0 0.0
        %2797 = vmatprep.subr.mxu0 0.0
        %2798 = vmatpush1.msra.mxu0 0.0
        %2799 = vmatprep.subr.mxu0 0.0
        %2800 = vmatpush1.msra.mxu0 0.0
        %2801 = vmatprep.subr.mxu0 0.0
        %2802 = vmatpush1.msra.mxu0 0.0
        %2803 = vmatprep.subr.mxu0 0.0
        %2804 = vmatpush1.msra.mxu0 0.0
        %2805 = vmatprep.subr.mxu0 0.0
        %2806 = vmatpush1.msra.mxu0 0.0
        %2807 = vmatprep.subr.mxu0 0.0
        %2808 = vmatpush1.msra.mxu0 0.0
        %2809 = vmatprep.subr.mxu0 0.0
        %2810 = vmatpush1.msra.mxu0 0.0
        %2811 = vmatprep.subr.mxu0 0.0
        %2812 = vmatpush1.msra.mxu0 0.0
        %2813 = vmatprep.subr.mxu0 0.0
        %2814 = vmatpush1.msra.mxu0 0.0
        %2815 = vmatprep.subr.mxu0 0.0
        %2816 = vmatpush1.msra.mxu0 0.0
        %2817 = vmatprep.subr.mxu0 0.0
        %2818 = vmatpush1.msra.mxu0 0.0
        %2819 = vmatprep.subr.mxu0 0.0
        %2820 = vmatpush1.msra.mxu0 0.0
        %2821 = vmatprep.subr.mxu0 0.0
        %2822 = vmatpush1.msra.mxu0 0.0
        %2823 = vmatprep.subr.mxu0 0.0
        %2824 = vmatpush1.msra.mxu0 0.0
        %2825 = vmatprep.subr.mxu0 0.0
        %2826 = vmatpush1.msra.mxu0 0.0
        %2827 = vmatprep.subr.mxu0 0.0
        %2828 = vmatpush1.msra.mxu0 0.0
        %2829 = vmatprep.subr.mxu0 0.0
        %2830 = vmatpush1.msra.mxu0 0.0
        %2831 = vmatprep.subr.mxu0 0.0
        %2832 = vmatpush1.msra.mxu0 0.0
        %2833 = vmatprep.subr.mxu0 0.0
        %2834 = vmatpush1.msra.mxu0 0.0
        %2835 = vmatprep.subr.mxu0 0.0
        %2836 = vmatpush1.msra.mxu0 0.0
        %2837 = vmatprep.subr.mxu0 0.0
        %2838 = vmatpush1.msra.mxu0 0.0
        %2839 = vmatprep.subr.mxu0 0.0
        %2840 = vmatpush1.msra.mxu0 0.0
        %2841 = vmatprep.subr.mxu0 0.0
        %2842 = vmatpush1.msra.mxu0 0.0
        %2843 = vmatprep.subr.mxu0 0.0
        %2844 = vmatpush1.msra.mxu0 0.0
        %2845 = vmatprep.subr.mxu0 0.0
        %2846 = vmatpush1.msra.mxu0 0.0
        %2847 = vmatprep.subr.mxu0 0.0
        %2848 = vmatpush1.msra.mxu0 0.0
        %2849 = vmatprep.subr.mxu0 0.0
        %2850 = vmatpush1.msra.mxu0 0.0
        %2851 = vmatprep.mubr.f32.mxu0 0.0
        %2852 = vmatmul.mubr.f32.gmra.mrb[0].mxu0 %v2785
        %v2853 = vpop.f32.mrb[0].mxu0
        %v2854 = vadd.f32 %v2781, %v2853
        %v2855 = vpop.f32.mrb[0].mxu0
        %2856 = vdwg.mxu0
        %2857 = vrot.lane.b32.xlu0 %v2373, 112
        %v2858 = vpop.permute.xlu0 %2857
        %2859 = vrot.lane.b32.xlu0 %v2370, 80
        %v2860 = vpop.permute.xlu0 %2859
        %v2861 = vsel %vm1057, %v2858, 0
        %v2863 = vsel %vm1057, %v2860, 0
        %2865 = vmatprep.subr.mxu0 0.0
        %2866 = vmatpush1.xpose.msra.mxu0 %v2863
        %2867 = vmatprep.subr.mxu0 0.0
        %2868 = vmatpush1.xpose.msra.mxu0 0.0
        %2869 = vmatprep.subr.mxu0 0.0
        %2870 = vmatpush1.xpose.msra.mxu0 0.0
        %2871 = vmatprep.subr.mxu0 0.0
        %2872 = vmatpush1.xpose.msra.mxu0 0.0
        %2873 = vmatprep.subr.mxu0 0.0
        %2874 = vmatpush1.xpose.msra.mxu0 0.0
        %2875 = vmatprep.subr.mxu0 0.0
        %2876 = vmatpush1.xpose.msra.mxu0 0.0
        %2877 = vmatprep.subr.mxu0 0.0
        %2878 = vmatpush1.xpose.msra.mxu0 0.0
        %2879 = vmatprep.subr.mxu0 0.0
        %2880 = vmatpush1.xpose.msra.mxu0 0.0
        %2881 = vmatprep.subr.mxu0 0.0
        %2882 = vmatpush1.xpose.msra.mxu0 0.0
        %2883 = vmatprep.subr.mxu0 0.0
        %2884 = vmatpush1.xpose.msra.mxu0 0.0
        %2885 = vmatprep.subr.mxu0 0.0
        %2886 = vmatpush1.xpose.msra.mxu0 0.0
        %2887 = vmatprep.subr.mxu0 0.0
        %2888 = vmatpush1.xpose.msra.mxu0 0.0
        %2889 = vmatprep.subr.mxu0 0.0
        %2890 = vmatpush1.xpose.msra.mxu0 0.0
        %2891 = vmatprep.subr.mxu0 0.0
        %2892 = vmatpush1.xpose.msra.mxu0 0.0
        %2893 = vmatprep.subr.mxu0 0.0
        %2894 = vmatpush1.xpose.msra.mxu0 0.0
        %2895 = vmatprep.subr.mxu0 0.0
        %2896 = vmatpush1.xpose.msra.mxu0 0.0
        %2897 = vmatprep.subr.mxu0 0.0
        %2898 = vmatpush1.xpose.msra.mxu0 0.0
        %2899 = vmatprep.subr.mxu0 0.0
        %2900 = vmatpush1.xpose.msra.mxu0 0.0
        %2901 = vmatprep.subr.mxu0 0.0
        %2902 = vmatpush1.xpose.msra.mxu0 0.0
        %2903 = vmatprep.subr.mxu0 0.0
        %2904 = vmatpush1.xpose.msra.mxu0 0.0
        %2905 = vmatprep.subr.mxu0 0.0
        %2906 = vmatpush1.xpose.msra.mxu0 0.0
        %2907 = vmatprep.subr.mxu0 0.0
        %2908 = vmatpush1.xpose.msra.mxu0 0.0
        %2909 = vmatprep.subr.mxu0 0.0
        %2910 = vmatpush1.xpose.msra.mxu0 0.0
        %2911 = vmatprep.subr.mxu0 0.0
        %2912 = vmatpush1.xpose.msra.mxu0 0.0
        %2913 = vmatprep.subr.mxu0 0.0
        %2914 = vmatpush1.xpose.msra.mxu0 0.0
        %2915 = vmatprep.subr.mxu0 0.0
        %2916 = vmatpush1.xpose.msra.mxu0 0.0
        %2917 = vmatprep.subr.mxu0 0.0
        %2918 = vmatpush1.xpose.msra.mxu0 0.0
        %2919 = vmatprep.subr.mxu0 0.0
        %2920 = vmatpush1.xpose.msra.mxu0 0.0
        %2921 = vmatprep.subr.mxu0 0.0
        %2922 = vmatpush1.xpose.msra.mxu0 0.0
        %2923 = vmatprep.subr.mxu0 0.0
        %2924 = vmatpush1.xpose.msra.mxu0 0.0
        %2925 = vmatprep.subr.mxu0 0.0
        %2926 = vmatpush1.xpose.msra.mxu0 0.0
        %2927 = vmatprep.subr.mxu0 0.0
        %2928 = vmatpush1.xpose.msra.mxu0 0.0
        %2929 = vmatprep.mubr.f32.mxu0 0.0
        %2930 = vmatmul.mubr.f32.gmra.mrb[0].mxu0 %v2861
        %v2931 = vpop.f32.mrb[0].mxu0
        %v2932 = vadd.f32 0.0, %v2931
        %v2933 = vpop.f32.mrb[0].mxu0
        %2934 = vdwg.mxu0
        %v2935 = vsel %vm1133, %v2932, -inf
        %2936 = vmax.xlane.f32.xlu0 %v2935
        %v2937 = vpop.xlane.xlu0 %2936
        %v2938 = vsub.f32 %v2932, %v2937
        %v2939 = vmul.f32 %v2938, 1.442695
        %v2940 = vpow.pop %v2939
        %v2941 = vsel %vm1133, %v2940, 0.0
        %2942 = vadd.xlane.f32.xlu0 %v2941
        %v2943 = vpop.xlane.xlu0 %2942
        %v2944 = vrcp.pop %v2943
        %v2945 = vmul.f32 %v2940, %v2944
        %2946 = vrot.lane.b32.xlu0 %v2370, 48
        %v2947 = vpop.permute.xlu0 %2946
        %v2949 = vsel %vm1147, %v2945, 0
        %v2951 = vsel %vm1151, %v2947, 0
        %2953 = vmatprep.subr.mxu0 0.0
        %2954 = vmatpush1.msra.mxu0 %v2951
        %2955 = vmatprep.subr.mxu0 0.0
        %2956 = vmatpush1.msra.mxu0 0.0
        %2957 = vmatprep.subr.mxu0 0.0
        %2958 = vmatpush1.msra.mxu0 0.0
        %2959 = vmatprep.subr.mxu0 0.0
        %2960 = vmatpush1.msra.mxu0 0.0
        %2961 = vmatprep.subr.mxu0 0.0
        %2962 = vmatpush1.msra.mxu0 0.0
        %2963 = vmatprep.subr.mxu0 0.0
        %2964 = vmatpush1.msra.mxu0 0.0
        %2965 = vmatprep.subr.mxu0 0.0
        %2966 = vmatpush1.msra.mxu0 0.0
        %2967 = vmatprep.subr.mxu0 0.0
        %2968 = vmatpush1.msra.mxu0 0.0
        %2969 = vmatprep.subr.mxu0 0.0
        %2970 = vmatpush1.msra.mxu0 0.0
        %2971 = vmatprep.subr.mxu0 0.0
        %2972 = vmatpush1.msra.mxu0 0.0
        %2973 = vmatprep.subr.mxu0 0.0
        %2974 = vmatpush1.msra.mxu0 0.0
        %2975 = vmatprep.subr.mxu0 0.0
        %2976 = vmatpush1.msra.mxu0 0.0
        %2977 = vmatprep.subr.mxu0 0.0
        %2978 = vmatpush1.msra.mxu0 0.0
        %2979 = vmatprep.subr.mxu0 0.0
        %2980 = vmatpush1.msra.mxu0 0.0
        %2981 = vmatprep.subr.mxu0 0.0
        %2982 = vmatpush1.msra.mxu0 0.0
        %2983 = vmatprep.subr.mxu0 0.0
        %2984 = vmatpush1.msra.mxu0 0.0
        %2985 = vmatprep.subr.mxu0 0.0
        %2986 = vmatpush1.msra.mxu0 0.0
        %2987 = vmatprep.subr.mxu0 0.0
        %2988 = vmatpush1.msra.mxu0 0.0
        %2989 = vmatprep.subr.mxu0 0.0
        %2990 = vmatpush1.msra.mxu0 0.0
        %2991 = vmatprep.subr.mxu0 0.0
        %2992 = vmatpush1.msra.mxu0 0.0
        %2993 = vmatprep.subr.mxu0 0.0
        %2994 = vmatpush1.msra.mxu0 0.0
        %2995 = vmatprep.subr.mxu0 0.0
        %2996 = vmatpush1.msra.mxu0 0.0
        %2997 = vmatprep.subr.mxu0 0.0
        %2998 = vmatpush1.msra.mxu0 0.0
        %2999 = vmatprep.subr.mxu0 0.0
        %3000 = vmatpush1.msra.mxu0 0.0
        %3001 = vmatprep.subr.mxu0 0.0
        %3002 = vmatpush1.msra.mxu0 0.0
        %3003 = vmatprep.subr.mxu0 0.0
        %3004 = vmatpush1.msra.mxu0 0.0
        %3005 = vmatprep.subr.mxu0 0.0
        %3006 = vmatpush1.msra.mxu0 0.0
        %3007 = vmatprep.subr.mxu0 0.0
        %3008 = vmatpush1.msra.mxu0 0.0
        %3009 = vmatprep.subr.mxu0 0.0
        %3010 = vmatpush1.msra.mxu0 0.0
        %3011 = vmatprep.subr.mxu0 0.0
        %3012 = vmatpush1.msra.mxu0 0.0
        %3013 = vmatprep.subr.mxu0 0.0
        %3014 = vmatpush1.msra.mxu0 0.0
        %3015 = vmatprep.subr.mxu0 0.0
        %3016 = vmatpush1.msra.mxu0 0.0
        %3017 = vmatprep.mubr.f32.mxu0 0.0
        %3018 = vmatmul.mubr.f32.gmra.mrb[0].mxu0 %v2949
        %v3019 = vpop.f32.mrb[0].mxu0
        %v3020 = vadd.f32 0.0, %v3019
        %v3021 = vpop.f32.mrb[0].mxu0
        %3022 = vdwg.mxu0
        %v3024 = vsel %vm1057, %v3020, 0
        %3026 = vmatprep.subr.mxu0 0.0
        %3027 = vmatpush1.msra.mxu0 %v2377
        %3028 = vmatprep.subr.mxu0 0.0
        %3029 = vmatpush1.msra.mxu0 0.0
        %3030 = vmatprep.subr.mxu0 0.0
        %3031 = vmatpush1.msra.mxu0 0.0
        %3032 = vmatprep.subr.mxu0 0.0
        %3033 = vmatpush1.msra.mxu0 0.0
        %3034 = vmatprep.subr.mxu0 0.0
        %3035 = vmatpush1.msra.mxu0 0.0
        %3036 = vmatprep.subr.mxu0 0.0
        %3037 = vmatpush1.msra.mxu0 0.0
        %3038 = vmatprep.subr.mxu0 0.0
        %3039 = vmatpush1.msra.mxu0 0.0
        %3040 = vmatprep.subr.mxu0 0.0
        %3041 = vmatpush1.msra.mxu0 0.0
        %3042 = vmatprep.subr.mxu0 0.0
        %3043 = vmatpush1.msra.mxu0 0.0
        %3044 = vmatprep.subr.mxu0 0.0
        %3045 = vmatpush1.msra.mxu0 0.0
        %3046 = vmatprep.subr.mxu0 0.0
        %3047 = vmatpush1.msra.mxu0 0.0
        %3048 = vmatprep.subr.mxu0 0.0
        %3049 = vmatpush1.msra.mxu0 0.0
        %3050 = vmatprep.subr.mxu0 0.0
        %3051 = vmatpush1.msra.mxu0 0.0
        %3052 = vmatprep.subr.mxu0 0.0
        %3053 = vmatpush1.msra.mxu0 0.0
        %3054 = vmatprep.subr.mxu0 0.0
        %3055 = vmatpush1.msra.mxu0 0.0
        %3056 = vmatprep.subr.mxu0 0.0
        %3057 = vmatpush1.msra.mxu0 0.0
        %3058 = vmatprep.subr.mxu0 0.0
        %3059 = vmatpush1.msra.mxu0 0.0
        %3060 = vmatprep.subr.mxu0 0.0
        %3061 = vmatpush1.msra.mxu0 0.0
        %3062 = vmatprep.subr.mxu0 0.0
        %3063 = vmatpush1.msra.mxu0 0.0
        %3064 = vmatprep.subr.mxu0 0.0
        %3065 = vmatpush1.msra.mxu0 0.0
        %3066 = vmatprep.subr.mxu0 0.0
        %3067 = vmatpush1.msra.mxu0 0.0
        %3068 = vmatprep.subr.mxu0 0.0
        %3069 = vmatpush1.msra.mxu0 0.0
        %3070 = vmatprep.subr.mxu0 0.0
        %3071 = vmatpush1.msra.mxu0 0.0
        %3072 = vmatprep.subr.mxu0 0.0
        %3073 = vmatpush1.msra.mxu0 0.0
        %3074 = vmatprep.subr.mxu0 0.0
        %3075 = vmatpush1.msra.mxu0 0.0
        %3076 = vmatprep.subr.mxu0 0.0
        %3077 = vmatpush1.msra.mxu0 0.0
        %3078 = vmatprep.subr.mxu0 0.0
        %3079 = vmatpush1.msra.mxu0 0.0
        %3080 = vmatprep.subr.mxu0 0.0
        %3081 = vmatpush1.msra.mxu0 0.0
        %3082 = vmatprep.subr.mxu0 0.0
        %3083 = vmatpush1.msra.mxu0 0.0
        %3084 = vmatprep.subr.mxu0 0.0
        %3085 = vmatpush1.msra.mxu0 0.0
        %3086 = vmatprep.subr.mxu0 0.0
        %3087 = vmatpush1.msra.mxu0 0.0
        %3088 = vmatprep.subr.mxu0 0.0
        %3089 = vmatpush1.msra.mxu0 0.0
        %3090 = vmatprep.mubr.f32.mxu0 0.0
        %3091 = vmatmul.mubr.f32.gmra.mrb[0].mxu0 %v3024
        %v3092 = vpop.f32.mrb[0].mxu0
        %v3093 = vadd.f32 0.0, %v3092
        %v3094 = vpop.f32.mrb[0].mxu0
        %3095 = vdwg.mxu0
        %v3096 = vadd.f32 %v2854, %v3093
        %3097 = vrot.lane.b32.xlu0 %v2373, 104
        %v3098 = vpop.permute.xlu0 %3097
        %3099 = vrot.lane.b32.xlu0 %v2370, 72
        %v3100 = vpop.permute.xlu0 %3099
        %v3101 = vsel %vm1057, %v3098, 0
        %v3103 = vsel %vm1057, %v3100, 0
        %3105 = vmatprep.subr.mxu0 0.0
        %3106 = vmatpush1.xpose.msra.mxu0 %v3103
        %3107 = vmatprep.subr.mxu0 0.0
        %3108 = vmatpush1.xpose.msra.mxu0 0.0
        %3109 = vmatprep.subr.mxu0 0.0
        %3110 = vmatpush1.xpose.msra.mxu0 0.0
        %3111 = vmatprep.subr.mxu0 0.0
        %3112 = vmatpush1.xpose.msra.mxu0 0.0
        %3113 = vmatprep.subr.mxu0 0.0
        %3114 = vmatpush1.xpose.msra.mxu0 0.0
        %3115 = vmatprep.subr.mxu0 0.0
        %3116 = vmatpush1.xpose.msra.mxu0 0.0
        %3117 = vmatprep.subr.mxu0 0.0
        %3118 = vmatpush1.xpose.msra.mxu0 0.0
        %3119 = vmatprep.subr.mxu0 0.0
        %3120 = vmatpush1.xpose.msra.mxu0 0.0
        %3121 = vmatprep.subr.mxu0 0.0
        %3122 = vmatpush1.xpose.msra.mxu0 0.0
        %3123 = vmatprep.subr.mxu0 0.0
        %3124 = vmatpush1.xpose.msra.mxu0 0.0
        %3125 = vmatprep.subr.mxu0 0.0
        %3126 = vmatpush1.xpose.msra.mxu0 0.0
        %3127 = vmatprep.subr.mxu0 0.0
        %3128 = vmatpush1.xpose.msra.mxu0 0.0
        %3129 = vmatprep.subr.mxu0 0.0
        %3130 = vmatpush1.xpose.msra.mxu0 0.0
        %3131 = vmatprep.subr.mxu0 0.0
        %3132 = vmatpush1.xpose.msra.mxu0 0.0
        %3133 = vmatprep.subr.mxu0 0.0
        %3134 = vmatpush1.xpose.msra.mxu0 0.0
        %3135 = vmatprep.subr.mxu0 0.0
        %3136 = vmatpush1.xpose.msra.mxu0 0.0
        %3137 = vmatprep.subr.mxu0 0.0
        %3138 = vmatpush1.xpose.msra.mxu0 0.0
        %3139 = vmatprep.subr.mxu0 0.0
        %3140 = vmatpush1.xpose.msra.mxu0 0.0
        %3141 = vmatprep.subr.mxu0 0.0
        %3142 = vmatpush1.xpose.msra.mxu0 0.0
        %3143 = vmatprep.subr.mxu0 0.0
        %3144 = vmatpush1.xpose.msra.mxu0 0.0
        %3145 = vmatprep.subr.mxu0 0.0
        %3146 = vmatpush1.xpose.msra.mxu0 0.0
        %3147 = vmatprep.subr.mxu0 0.0
        %3148 = vmatpush1.xpose.msra.mxu0 0.0
        %3149 = vmatprep.subr.mxu0 0.0
        %3150 = vmatpush1.xpose.msra.mxu0 0.0
        %3151 = vmatprep.subr.mxu0 0.0
        %3152 = vmatpush1.xpose.msra.mxu0 0.0
        %3153 = vmatprep.subr.mxu0 0.0
        %3154 = vmatpush1.xpose.msra.mxu0 0.0
        %3155 = vmatprep.subr.mxu0 0.0
        %3156 = vmatpush1.xpose.msra.mxu0 0.0
        %3157 = vmatprep.subr.mxu0 0.0
        %3158 = vmatpush1.xpose.msra.mxu0 0.0
        %3159 = vmatprep.subr.mxu0 0.0
        %3160 = vmatpush1.xpose.msra.mxu0 0.0
        %3161 = vmatprep.subr.mxu0 0.0
        %3162 = vmatpush1.xpose.msra.mxu0 0.0
        %3163 = vmatprep.subr.mxu0 0.0
        %3164 = vmatpush1.xpose.msra.mxu0 0.0
        %3165 = vmatprep.subr.mxu0 0.0
        %3166 = vmatpush1.xpose.msra.mxu0 0.0
        %3167 = vmatprep.subr.mxu0 0.0
        %3168 = vmatpush1.xpose.msra.mxu0 0.0
        %3169 = vmatprep.mubr.f32.mxu0 0.0
        %3170 = vmatmul.mubr.f32.gmra.mrb[0].mxu0 %v3101
        %v3171 = vpop.f32.mrb[0].mxu0
        %v3172 = vadd.f32 0.0, %v3171
        %v3173 = vpop.f32.mrb[0].mxu0
        %3174 = vdwg.mxu0
        %v3175 = vsel %vm1133, %v3172, -inf
        %3176 = vmax.xlane.f32.xlu0 %v3175
        %v3177 = vpop.xlane.xlu0 %3176
        %v3178 = vsub.f32 %v3172, %v3177
        %v3179 = vmul.f32 %v3178, 1.442695
        %v3180 = vpow.pop %v3179
        %v3181 = vsel %vm1133, %v3180, 0.0
        %3182 = vadd.xlane.f32.xlu0 %v3181
        %v3183 = vpop.xlane.xlu0 %3182
        %v3184 = vrcp.pop %v3183
        %v3185 = vmul.f32 %v3180, %v3184
        %3186 = vrot.lane.b32.xlu0 %v2370, 40
        %v3187 = vpop.permute.xlu0 %3186
        %v3189 = vsel %vm1147, %v3185, 0
        %v3191 = vsel %vm1151, %v3187, 0
        %3193 = vmatprep.subr.mxu0 0.0
        %3194 = vmatpush1.msra.mxu0 %v3191
        %3195 = vmatprep.subr.mxu0 0.0
        %3196 = vmatpush1.msra.mxu0 0.0
        %3197 = vmatprep.subr.mxu0 0.0
        %3198 = vmatpush1.msra.mxu0 0.0
        %3199 = vmatprep.subr.mxu0 0.0
        %3200 = vmatpush1.msra.mxu0 0.0
        %3201 = vmatprep.subr.mxu0 0.0
        %3202 = vmatpush1.msra.mxu0 0.0
        %3203 = vmatprep.subr.mxu0 0.0
        %3204 = vmatpush1.msra.mxu0 0.0
        %3205 = vmatprep.subr.mxu0 0.0
        %3206 = vmatpush1.msra.mxu0 0.0
        %3207 = vmatprep.subr.mxu0 0.0
        %3208 = vmatpush1.msra.mxu0 0.0
        %3209 = vmatprep.subr.mxu0 0.0
        %3210 = vmatpush1.msra.mxu0 0.0
        %3211 = vmatprep.subr.mxu0 0.0
        %3212 = vmatpush1.msra.mxu0 0.0
        %3213 = vmatprep.subr.mxu0 0.0
        %3214 = vmatpush1.msra.mxu0 0.0
        %3215 = vmatprep.subr.mxu0 0.0
        %3216 = vmatpush1.msra.mxu0 0.0
        %3217 = vmatprep.subr.mxu0 0.0
        %3218 = vmatpush1.msra.mxu0 0.0
        %3219 = vmatprep.subr.mxu0 0.0
        %3220 = vmatpush1.msra.mxu0 0.0
        %3221 = vmatprep.subr.mxu0 0.0
        %3222 = vmatpush1.msra.mxu0 0.0
        %3223 = vmatprep.subr.mxu0 0.0
        %3224 = vmatpush1.msra.mxu0 0.0
        %3225 = vmatprep.subr.mxu0 0.0
        %3226 = vmatpush1.msra.mxu0 0.0
        %3227 = vmatprep.subr.mxu0 0.0
        %3228 = vmatpush1.msra.mxu0 0.0
        %3229 = vmatprep.subr.mxu0 0.0
        %3230 = vmatpush1.msra.mxu0 0.0
        %3231 = vmatprep.subr.mxu0 0.0
        %3232 = vmatpush1.msra.mxu0 0.0
        %3233 = vmatprep.subr.mxu0 0.0
        %3234 = vmatpush1.msra.mxu0 0.0
        %3235 = vmatprep.subr.mxu0 0.0
        %3236 = vmatpush1.msra.mxu0 0.0
        %3237 = vmatprep.subr.mxu0 0.0
        %3238 = vmatpush1.msra.mxu0 0.0
        %3239 = vmatprep.subr.mxu0 0.0
        %3240 = vmatpush1.msra.mxu0 0.0
        %3241 = vmatprep.subr.mxu0 0.0
        %3242 = vmatpush1.msra.mxu0 0.0
        %3243 = vmatprep.subr.mxu0 0.0
        %3244 = vmatpush1.msra.mxu0 0.0
        %3245 = vmatprep.subr.mxu0 0.0
        %3246 = vmatpush1.msra.mxu0 0.0
        %3247 = vmatprep.subr.mxu0 0.0
        %3248 = vmatpush1.msra.mxu0 0.0
        %3249 = vmatprep.subr.mxu0 0.0
        %3250 = vmatpush1.msra.mxu0 0.0
        %3251 = vmatprep.subr.mxu0 0.0
        %3252 = vmatpush1.msra.mxu0 0.0
        %3253 = vmatprep.subr.mxu0 0.0
        %3254 = vmatpush1.msra.mxu0 0.0
        %3255 = vmatprep.subr.mxu0 0.0
        %3256 = vmatpush1.msra.mxu0 0.0
        %3257 = vmatprep.mubr.f32.mxu0 0.0
        %3258 = vmatmul.mubr.f32.gmra.mrb[0].mxu0 %v3189
        %v3259 = vpop.f32.mrb[0].mxu0
        %v3260 = vadd.f32 0.0, %v3259
        %v3261 = vpop.f32.mrb[0].mxu0
        %3262 = vdwg.mxu0
        %v3264 = vsel %vm1057, %v3260, 0
        %3266 = vmatprep.subr.mxu0 0.0
        %3267 = vmatpush1.msra.mxu0 %v2378
        %3268 = vmatprep.subr.mxu0 0.0
        %3269 = vmatpush1.msra.mxu0 0.0
        %3270 = vmatprep.subr.mxu0 0.0
        %3271 = vmatpush1.msra.mxu0 0.0
        %3272 = vmatprep.subr.mxu0 0.0
        %3273 = vmatpush1.msra.mxu0 0.0
        %3274 = vmatprep.subr.mxu0 0.0
        %3275 = vmatpush1.msra.mxu0 0.0
        %3276 = vmatprep.subr.mxu0 0.0
        %3277 = vmatpush1.msra.mxu0 0.0
        %3278 = vmatprep.subr.mxu0 0.0
        %3279 = vmatpush1.msra.mxu0 0.0
        %3280 = vmatprep.subr.mxu0 0.0
        %3281 = vmatpush1.msra.mxu0 0.0
        %3282 = vmatprep.subr.mxu0 0.0
        %3283 = vmatpush1.msra.mxu0 0.0
        %3284 = vmatprep.subr.mxu0 0.0
        %3285 = vmatpush1.msra.mxu0 0.0
        %3286 = vmatprep.subr.mxu0 0.0
        %3287 = vmatpush1.msra.mxu0 0.0
        %3288 = vmatprep.subr.mxu0 0.0
        %3289 = vmatpush1.msra.mxu0 0.0
        %3290 = vmatprep.subr.mxu0 0.0
        %3291 = vmatpush1.msra.mxu0 0.0
        %3292 = vmatprep.subr.mxu0 0.0
        %3293 = vmatpush1.msra.mxu0 0.0
        %3294 = vmatprep.subr.mxu0 0.0
        %3295 = vmatpush1.msra.mxu0 0.0
        %3296 = vmatprep.subr.mxu0 0.0
        %3297 = vmatpush1.msra.mxu0 0.0
        %3298 = vmatprep.subr.mxu0 0.0
        %3299 = vmatpush1.msra.mxu0 0.0
        %3300 = vmatprep.subr.mxu0 0.0
        %3301 = vmatpush1.msra.mxu0 0.0
        %3302 = vmatprep.subr.mxu0 0.0
        %3303 = vmatpush1.msra.mxu0 0.0
        %3304 = vmatprep.subr.mxu0 0.0
        %3305 = vmatpush1.msra.mxu0 0.0
        %3306 = vmatprep.subr.mxu0 0.0
        %3307 = vmatpush1.msra.mxu0 0.0
        %3308 = vmatprep.subr.mxu0 0.0
        %3309 = vmatpush1.msra.mxu0 0.0
        %3310 = vmatprep.subr.mxu0 0.0
        %3311 = vmatpush1.msra.mxu0 0.0
        %3312 = vmatprep.subr.mxu0 0.0
        %3313 = vmatpush1.msra.mxu0 0.0
        %3314 = vmatprep.subr.mxu0 0.0
        %3315 = vmatpush1.msra.mxu0 0.0
        %3316 = vmatprep.subr.mxu0 0.0
        %3317 = vmatpush1.msra.mxu0 0.0
        %3318 = vmatprep.subr.mxu0 0.0
        %3319 = vmatpush1.msra.mxu0 0.0
        %3320 = vmatprep.subr.mxu0 0.0
        %3321 = vmatpush1.msra.mxu0 0.0
        %3322 = vmatprep.subr.mxu0 0.0
        %3323 = vmatpush1.msra.mxu0 0.0
        %3324 = vmatprep.subr.mxu0 0.0
        %3325 = vmatpush1.msra.mxu0 0.0
        %3326 = vmatprep.subr.mxu0 0.0
        %3327 = vmatpush1.msra.mxu0 0.0
        %3328 = vmatprep.subr.mxu0 0.0
        %3329 = vmatpush1.msra.mxu0 0.0
        %3330 = vmatprep.mubr.f32.mxu0 0.0
        %3331 = vmatmul.mubr.f32.gmra.mrb[0].mxu0 %v3264
        %v3332 = vpop.f32.mrb[0].mxu0
        %v3333 = vadd.f32 0.0, %v3332
        %v3334 = vpop.f32.mrb[0].mxu0
        %3335 = vdwg.mxu0
        %v3336 = vadd.f32 %v3096, %v3333
        %v3337 = vadd.f32 %v2255, %v3336
        %s3338 = scalar_lea.vmem %s10, 1
        %v3339 = vld [vmem:[%s3338] sm:$0x1]
        %v3341 = vlaneseq
        %v3342 = vshrl.u32 %v3341, 7
        %v3343 = vsub.s32 0, %v3342
        %v3344 = vrot.slane %v3339, %v3343
        %v3346 = vadd.f32 %v3337, %v3344
        %s3347 = scalar_lea.vmem %s11, 1
        %v3348 = vld [vmem:[%s3347] sm:$0x1]
        %s3349 = scalar_lea.vmem %s12, 1
        %v3350 = vld [vmem:[%s3349] sm:$0x1]
        %v3351 = vsel %vm935, %v3346, 0.0
        %3352 = vadd.xlane.f32.xlu0 %v3351
        %v3353 = vpop.xlane.xlu0 %3352
        %v3354 = vmul.f32 %v3353, %v939
        %v3355 = vsub.f32 %v3346, %v3354
        %v3356 = vmul.f32 %v3355, %v3355
        %v3357 = vsel %vm935, %v3356, 0.0
        %3358 = vadd.xlane.f32.xlu0 %v3357
        %v3359 = vpop.xlane.xlu0 %3358
        %v3360 = vmul.f32 %v3359, %v939
        %v3361 = vadd.f32 %v3360, 1e-06
        %v3362 = vrsqrt.pop %v3361
        %v3363 = vmul.f32 %v3355, %v3362
        %v3365 = vlaneseq
        %v3366 = vshrl.u32 %v3365, 7
        %v3367 = vsub.s32 0, %v3366
        %v3368 = vrot.slane %v3348, %v3367
        %v3370 = vmul.f32 %v3363, %v3368
        %v3372 = vlaneseq
        %v3373 = vshrl.u32 %v3372, 7
        %v3374 = vsub.s32 0, %v3373
        %v3375 = vrot.slane %v3350, %v3374
        %v3377 = vadd.f32 %v3370, %v3375
        %s3378 = scalar_lea.vmem %s13, 32
        %v3379 = vld [vmem:[%s3378] sm:$0xff]
        %v3380 = vld [vmem:[%s3378 + $0x8] sm:$0xff]
        %v3381 = vld [vmem:[%s3378 + $0x10] sm:$0xff]
        %v3382 = vld [vmem:[%s3378 + $0x18] sm:$0xff]
        %s3383 = scalar_lea.vmem %s14, 1
        %v3384 = vld [vmem:[%s3383] sm:$0x1]
        %v3386 = vlaneseq
        %v3387 = vshrl.u32 %v3386, 7
        %v3388 = vsub.s32 0, %v3387
        %v3389 = vrot.slane %v3384, %v3388
        %v3392 = vsel %vm975, %v3377, 0
        %3394 = vmatprep.subr.mxu0 0.0
        %3395 = vmatpush1.msra.mxu0 %v3379
        %3396 = vmatprep.subr.mxu0 0.0
        %3397 = vmatpush1.msra.mxu0 %v3380
        %3398 = vmatprep.subr.mxu0 0.0
        %3399 = vmatpush1.msra.mxu0 %v3381
        %3400 = vmatprep.subr.mxu0 0.0
        %3401 = vmatpush1.msra.mxu0 %v3382
        %3402 = vmatprep.subr.mxu0 0.0
        %3403 = vmatpush1.msra.mxu0 0.0
        %3404 = vmatprep.subr.mxu0 0.0
        %3405 = vmatpush1.msra.mxu0 0.0
        %3406 = vmatprep.subr.mxu0 0.0
        %3407 = vmatpush1.msra.mxu0 0.0
        %3408 = vmatprep.subr.mxu0 0.0
        %3409 = vmatpush1.msra.mxu0 0.0
        %3410 = vmatprep.subr.mxu0 0.0
        %3411 = vmatpush1.msra.mxu0 0.0
        %3412 = vmatprep.subr.mxu0 0.0
        %3413 = vmatpush1.msra.mxu0 0.0
        %3414 = vmatprep.subr.mxu0 0.0
        %3415 = vmatpush1.msra.mxu0 0.0
        %3416 = vmatprep.subr.mxu0 0.0
        %3417 = vmatpush1.msra.mxu0 0.0
        %3418 = vmatprep.subr.mxu0 0.0
        %3419 = vmatpush1.msra.mxu0 0.0
        %3420 = vmatprep.subr.mxu0 0.0
        %3421 = vmatpush1.msra.mxu0 0.0
        %3422 = vmatprep.subr.mxu0 0.0
        %3423 = vmatpush1.msra.mxu0 0.0
        %3424 = vmatprep.subr.mxu0 0.0
        %3425 = vmatpush1.msra.mxu0 0.0
        %3426 = vmatprep.subr.mxu0 0.0
        %3427 = vmatpush1.msra.mxu0 0.0
        %3428 = vmatprep.subr.mxu0 0.0
        %3429 = vmatpush1.msra.mxu0 0.0
        %3430 = vmatprep.subr.mxu0 0.0
        %3431 = vmatpush1.msra.mxu0 0.0
        %3432 = vmatprep.subr.mxu0 0.0
        %3433 = vmatpush1.msra.mxu0 0.0
        %3434 = vmatprep.subr.mxu0 0.0
        %3435 = vmatpush1.msra.mxu0 0.0
        %3436 = vmatprep.subr.mxu0 0.0
        %3437 = vmatpush1.msra.mxu0 0.0
        %3438 = vmatprep.subr.mxu0 0.0
        %3439 = vmatpush1.msra.mxu0 0.0
        %3440 = vmatprep.subr.mxu0 0.0
        %3441 = vmatpush1.msra.mxu0 0.0
        %3442 = vmatprep.subr.mxu0 0.0
        %3443 = vmatpush1.msra.mxu0 0.0
        %3444 = vmatprep.subr.mxu0 0.0
        %3445 = vmatpush1.msra.mxu0 0.0
        %3446 = vmatprep.subr.mxu0 0.0
        %3447 = vmatpush1.msra.mxu0 0.0
        %3448 = vmatprep.subr.mxu0 0.0
        %3449 = vmatpush1.msra.mxu0 0.0
        %3450 = vmatprep.subr.mxu0 0.0
        %3451 = vmatpush1.msra.mxu0 0.0
        %3452 = vmatprep.subr.mxu0 0.0
        %3453 = vmatpush1.msra.mxu0 0.0
        %3454 = vmatprep.subr.mxu0 0.0
        %3455 = vmatpush1.msra.mxu0 0.0
        %3456 = vmatprep.subr.mxu0 0.0
        %3457 = vmatpush1.msra.mxu0 0.0
        %3458 = vmatprep.mubr.f32.mxu0 0.0
        %3459 = vmatmul.mubr.f32.gmra.mrb[0].mxu0 %v3392
        %v3460 = vpop.f32.mrb[0].mxu0
        %v3461 = vadd.f32 %v3389, %v3460
        %v3462 = vpop.f32.mrb[0].mxu0
        %3463 = vdwg.mxu0
        %v3464 = vmul.f32 %v3461, 0.5
        %v3465 = vmul.f32 %v3461, 0.70710677
        %vm3466 = vcmp.lt.f32.partialorder %v3465, 0.0
        %v3467 = vsel %vm3466, -1.0, 1.0
        %v3468 = vand.u32 2147483647, %v3465
        %v3469 = vmul.f32 %v3468, 0.3275911
        %v3470 = vadd.f32 %v3469, 1.0
        %v3471 = vrcp.pop %v3470
        %v3472 = vmul.f32 1.0, %v3471
        %v3473 = vmul.f32 %v3472, 1.0614054
        %v3474 = vadd.f32 %v3473, -1.4531521
        %v3475 = vmul.f32 %v3474, %v3472
        %v3476 = vadd.f32 %v3475, 1.4214138
        %v3477 = vmul.f32 %v3476, %v3472
        %v3478 = vadd.f32 %v3477, -0.28449672
        %v3479 = vmul.f32 %v3478, %v3472
        %v3480 = vadd.f32 %v3479, 0.2548296
        %v3481 = vmul.f32 %v3480, %v3472
        %v3482 = vsub.f32 0.0, %v3468
        %v3483 = vmul.f32 %v3482, %v3468
        %v3484 = vmul.f32 %v3483, 1.442695
        %v3485 = vpow.pop %v3484
        %v3486 = vmul.f32 %v3481, %v3485
        %v3487 = vsub.f32 1.0, %v3486
        %v3488 = vmul.f32 %v3467, %v3487
        %v3489 = vadd.f32 %v3488, 1.0
        %v3490 = vmul.f32 %v3464, %v3489
        %s3491 = scalar_lea.vmem %s15, 64
        %v3492 = vld [vmem:[%s3491] sm:$0xff]
        %v3493 = vld [vmem:[%s3491 + $0x8] sm:$0xff]
        %v3494 = vld [vmem:[%s3491 + $0x10] sm:$0xff]
        %v3495 = vld [vmem:[%s3491 + $0x18] sm:$0xff]
        %v3496 = vld [vmem:[%s3491 + $0x20] sm:$0xff]
        %v3497 = vld [vmem:[%s3491 + $0x28] sm:$0xff]
        %v3498 = vld [vmem:[%s3491 + $0x30] sm:$0xff]
        %v3499 = vld [vmem:[%s3491 + $0x38] sm:$0xff]
        %v3501 = vsel %vm2173, %v3490, 0
        %3503 = vmatprep.subr.mxu0 0.0
        %3504 = vmatpush1.msra.mxu0 %v3492
        %3505 = vmatprep.subr.mxu0 0.0
        %3506 = vmatpush1.msra.mxu0 %v3493
        %3507 = vmatprep.subr.mxu0 0.0
        %3508 = vmatpush1.msra.mxu0 %v3494
        %3509 = vmatprep.subr.mxu0 0.0
        %3510 = vmatpush1.msra.mxu0 %v3495
        %3511 = vmatprep.subr.mxu0 0.0
        %3512 = vmatpush1.msra.mxu0 %v3496
        %3513 = vmatprep.subr.mxu0 0.0
        %3514 = vmatpush1.msra.mxu0 %v3497
        %3515 = vmatprep.subr.mxu0 0.0
        %3516 = vmatpush1.msra.mxu0 %v3498
        %3517 = vmatprep.subr.mxu0 0.0
        %3518 = vmatpush1.msra.mxu0 %v3499
        %3519 = vmatprep.subr.mxu0 0.0
        %3520 = vmatpush1.msra.mxu0 0.0
        %3521 = vmatprep.subr.mxu0 0.0
        %3522 = vmatpush1.msra.mxu0 0.0
        %3523 = vmatprep.subr.mxu0 0.0
        %3524 = vmatpush1.msra.mxu0 0.0
        %3525 = vmatprep.subr.mxu0 0.0
        %3526 = vmatpush1.msra.mxu0 0.0
        %3527 = vmatprep.subr.mxu0 0.0
        %3528 = vmatpush1.msra.mxu0 0.0
        %3529 = vmatprep.subr.mxu0 0.0
        %3530 = vmatpush1.msra.mxu0 0.0
        %3531 = vmatprep.subr.mxu0 0.0
        %3532 = vmatpush1.msra.mxu0 0.0
        %3533 = vmatprep.subr.mxu0 0.0
        %3534 = vmatpush1.msra.mxu0 0.0
        %3535 = vmatprep.subr.mxu0 0.0
        %3536 = vmatpush1.msra.mxu0 0.0
        %3537 = vmatprep.subr.mxu0 0.0
        %3538 = vmatpush1.msra.mxu0 0.0
        %3539 = vmatprep.subr.mxu0 0.0
        %3540 = vmatpush1.msra.mxu0 0.0
        %3541 = vmatprep.subr.mxu0 0.0
        %3542 = vmatpush1.msra.mxu0 0.0
        %3543 = vmatprep.subr.mxu0 0.0
        %3544 = vmatpush1.msra.mxu0 0.0
        %3545 = vmatprep.subr.mxu0 0.0
        %3546 = vmatpush1.msra.mxu0 0.0
        %3547 = vmatprep.subr.mxu0 0.0
        %3548 = vmatpush1.msra.mxu0 0.0
        %3549 = vmatprep.subr.mxu0 0.0
        %3550 = vmatpush1.msra.mxu0 0.0
        %3551 = vmatprep.subr.mxu0 0.0
        %3552 = vmatpush1.msra.mxu0 0.0
        %3553 = vmatprep.subr.mxu0 0.0
        %3554 = vmatpush1.msra.mxu0 0.0
        %3555 = vmatprep.subr.mxu0 0.0
        %3556 = vmatpush1.msra.mxu0 0.0
        %3557 = vmatprep.subr.mxu0 0.0
        %3558 = vmatpush1.msra.mxu0 0.0
        %3559 = vmatprep.subr.mxu0 0.0
        %3560 = vmatpush1.msra.mxu0 0.0
        %3561 = vmatprep.subr.mxu0 0.0
        %3562 = vmatpush1.msra.mxu0 0.0
        %3563 = vmatprep.subr.mxu0 0.0
        %3564 = vmatpush1.msra.mxu0 0.0
        %3565 = vmatprep.subr.mxu0 0.0
        %3566 = vmatpush1.msra.mxu0 0.0
        %3567 = vmatprep.mubr.f32.mxu0 0.0
        %3568 = vmatmul.mubr.f32.gmra.mrb[0].mxu0 %v3501
        %v3569 = vpop.f32.mrb[0].mxu0
        %v3570 = vadd.f32 0.0, %v3569
        %v3571 = vpop.f32.mrb[0].mxu0
        %3572 = vdwg.mxu0
        %v3573 = vadd.f32 %v3346, %v3570
        %s3574 = scalar_lea.vmem %s16, 1
        %v3575 = vld [vmem:[%s3574] sm:$0x1]
        %v3577 = vlaneseq
        %v3578 = vshrl.u32 %v3577, 7
        %v3579 = vsub.s32 0, %v3578
        %v3580 = vrot.slane %v3575, %v3579
        %v3582 = vadd.f32 %v3573, %v3580
        %v3583 = vld [vmem:[%s17] sm:$0x1]
        %v3584 = vld [vmem:[%s18] sm:$0x1]
        %v3585 = vsel %vm926, %v3582, 0.0
        %3586 = vadd.xlane.f32.xlu0 %v3585
        %v3587 = vpop.xlane.xlu0 %3586
        %v3588 = vmul.f32 %v3587, %v939
        %v3589 = vsub.f32 %v3582, %v3588
        %v3590 = vmul.f32 %v3589, %v3589
        %v3591 = vsel %vm926, %v3590, 0.0
        %3592 = vadd.xlane.f32.xlu0 %v3591
        %v3593 = vpop.xlane.xlu0 %3592
        %v3594 = vmul.f32 %v3593, %v939
        %v3595 = vadd.f32 %v3594, 1e-06
        %v3596 = vrsqrt.pop %v3595
        %v3597 = vmul.f32 %v3589, %v3596
        %v3598 = vmul.f32 %v3597, %v3583
        %v3599 = vadd.f32 %v3598, %v3584
        %3600 = vst.msk [vmem:[%s594] sm:$0x1] %vm926, %v3599
        %s3601 = sand.u32 %s445, 1
        %s3602 = scalar_lea.sflag [#allocation4], %s3601
        %s3603 = sand.u32 %s445, 1
        %s3604 = scalar_lea.vmem [#allocation3], %s3603
        // Predicated region
        $region97: #{dino_forward.1} parent=95 // pred_check
          %p3605 = pneg %p455
        $region98: #{dino_forward.1} parent=95 // pred_check_branch
          %3607 = sbr.rel (%p3605) target = $region100
        $region99: #{dino_forward.1} parent=95 // pred_region
          %s3609 = ssub.s32 16, 16
          %3610 = vsyncadd %s3602, %s3609
          %s3611 = smul.addr %s33, 16
          %s3612 = scalar_lea.hbm %s19, %s3611
          %s3614 = sshll.u32 %s3604, 4
          %s3615 = int_to_ptr.vmem [resolvable:$true] %s3614
          %3617 = dma.vmem_to_hbm [thread:$0]  %s3615, 16, %s3612, %s3602
        $region100: #{dino_forward.1} parent=95 // pred_fallthru
          _
      $region96: #{dino_forward.1} parent=5 // pred_fallthru
        _
      %p3618 = scmp.le.s32.totalorder 2, %s28
      // Predicated region
      $region101: #{dino_forward.1} parent=5 // pred_check
        %p3619 = pneg %p3618
      $region102: #{dino_forward.1} parent=5 // pred_check_branch
        %3621 = sbr.rel (%p3619) target = $region104
      $region103: #{dino_forward.1} parent=5 // pred_region
        %s3622 = ssub.s32 %s28, 2
        // Predicated region
        $region105: #{dino_forward.1} parent=103 // pred_check
          %p3623 = pneg %p461
        $region106: #{dino_forward.1} parent=103 // pred_check_branch
          %3625 = sbr.rel (%p3623) target = $region108
        $region107: #{dino_forward.1} parent=103 // pred_region
          %s3626 = sand.u32 %s446, 1
          %s3627 = scalar_lea.sflag [#allocation4], %s3626
          %s3628 = sand.u32 %s446, 1
          %s3629 = scalar_lea.vmem [#allocation3], %s3628
          %3630 = dma.done %s3627, 16
        $region108: #{dino_forward.1} parent=103 // pred_fallthru
          _
      $region104: #{dino_forward.1} parent=5 // pred_fallthru
        _
    $region6: #{dino_forward.1} parent=1 // loop_footer
      %s32 = sadd.s32 1, %s28
    $region7: #{dino_forward.1} parent=1 // loop_footer_branch
      %27 = sbr.rel target = $region3
    $region8: #{dino_forward.1} parent=1 // loop_exit
      _
    %3631 = vsyncpa [#allocation4], 1
    %s3632 = scalar_lea.sflag [#allocation4], 1
    %3633 = vsyncpa %s3632, 1

</llo_original>
